<compile_context>
chip_gen: v7x
topology: tpu7x:2x2x1
jax: 0.10.0
libtpu: 0.0.40
codegen_flags: <defaults>
</compile_context>

<pallas_src>
import functools

import jax
import jax.numpy as jnp
import numpy as np
from jax.experimental import pallas as pl
from jax.experimental.pallas import tpu as pltpu


# ----------------------------------------------------------------------------
# Fused LeNet-5 kernel (one grid step == n_img images, stacked along rows)
# ----------------------------------------------------------------------------
def _lenet_kernel(x_ref, g1_ref, b1_ref, sl1_ref, sr1_ref,
                  g2_ref, b2_ref, sl2_ref, sr2_ref,
                  wf1_ref, bf1_ref, wf2_ref, bf2_ref, wf3_ref, bf3_ref,
                  out_ref, p1_scratch, *, n_img):
    f32 = jnp.float32
    m1 = n_img * 32 - 4          # rows of the stacked conv1 output slab
    m2 = n_img * 14 - 4          # rows of the stacked conv2 output slab

    # ---- conv1 + tanh : 5 banded dots on row-shifted views of the input ----
    # x_ref is (n_img*32, 32); slice i covers rows [i, i + m1).
    acc1 = jnp.dot(x_ref[0:m1, :], g1_ref[0], preferred_element_type=f32)
    for i in range(1, 5):
        acc1 = acc1 + jnp.dot(x_ref[i:i + m1, :], g1_ref[i],
                              preferred_element_type=f32)
    h1 = jnp.tanh(acc1 + b1_ref[...])                     # (m1, 6*28)

    # ---- pool1 (2x2 avg folded into 0.5-valued selection matmuls) ----------
    # Rows that mix adjacent images in h1 are never selected by sl1.
    p1_scratch[...] = jnp.dot(
        jnp.dot(sl1_ref[...], h1, preferred_element_type=f32),
        sr1_ref[...], preferred_element_type=f32)          # (n_img*14, 6*14)

    # ---- conv2 + tanh : 5 banded dots on row-shifted views of the scratch --
    acc2 = jnp.dot(p1_scratch[0:m2, :], g2_ref[0], preferred_element_type=f32)
    for i in range(1, 5):
        acc2 = acc2 + jnp.dot(p1_scratch[i:i + m2, :], g2_ref[i],
                              preferred_element_type=f32)
    h2 = jnp.tanh(acc2 + b2_ref[...])                      # (m2, 16*10)

    # ---- pool2: output rows ordered h-major -> (5*n_img, 80) ---------------
    p2 = jnp.dot(jnp.dot(sl2_ref[...], h2, preferred_element_type=f32),
                 sr2_ref[...], preferred_element_type=f32)

    # ---- fc1 (+tanh), batched over the n_img images ------------------------
    f1 = jnp.dot(p2[0:n_img, :], wf1_ref[0], preferred_element_type=f32)
    for h in range(1, 5):
        f1 = f1 + jnp.dot(p2[h * n_img:(h + 1) * n_img, :], wf1_ref[h],
                          preferred_element_type=f32)
    f1 = jnp.tanh(f1 + bf1_ref[...])                       # (n_img, 120)

    # ---- fc2 (+tanh), fc3 (padded to 128 lanes -> lane-dense store) --------
    f2 = jnp.tanh(jnp.dot(f1, wf2_ref[...], preferred_element_type=f32)
                  + bf2_ref[...])                          # (n_img, 84)
    f3 = jnp.dot(f2, wf3_ref[...], preferred_element_type=f32) + bf3_ref[...]
    out_ref[...] = f3.astype(out_ref.dtype)                # (n_img, 128)


# ----------------------------------------------------------------------------
# Host-side, one-time parameter preparation
# ----------------------------------------------------------------------------
def prepare_params(p, n_img):
    """Build banded conv weights, pooling-selection matrices and permuted FC
    weights for the fused kernel.  n_img = images per grid step (multiple of 8)."""
    w1 = np.asarray(p["w1"], np.float32)   # (6,1,5,5)
    b1 = np.asarray(p["b1"], np.float32)   # (6,)
    w2 = np.asarray(p["w2"], np.float32)   # (16,6,5,5)
    b2 = np.asarray(p["b2"], np.float32)   # (16,)
    wf1 = np.asarray(p["wf1"], np.float32)  # (120,400)
    bf1 = np.asarray(p["bf1"], np.float32)
    wf2 = np.asarray(p["wf2"], np.float32)  # (84,120)
    bf2 = np.asarray(p["bf2"], np.float32)
    wf3 = np.asarray(p["wf3"], np.float32)  # (10,84)
    bf3 = np.asarray(p["bf3"], np.float32)

    # conv1 banded RHS: g1[i, ow+j, co*28+ow] = w1[co,0,i,j]
    g1 = np.zeros((5, 32, 6 * 28), np.float32)
    for i in range(5):
        for co in range(6):
            for j in range(5):
                for ow in range(28):
                    g1[i, ow + j, co * 28 + ow] = w1[co, 0, i, j]
    b1r = np.repeat(b1, 28)[None, :]                       # (1, 168)

    # conv2 banded RHS (input-channel contraction folded in):
    # g2[i, ci*14+ow+j, co*10+ow] = w2[co,ci,i,j]
    g2 = np.zeros((5, 6 * 14, 16 * 10), np.float32)
    for i in range(5):
        for co in range(16):
            for ci in range(6):
                for j in range(5):
                    for ow in range(10):
                        g2[i, ci * 14 + ow + j, co * 10 + ow] = w2[co, ci, i, j]
    b2r = np.repeat(b2, 10)[None, :]                       # (1, 160)

    m1 = n_img * 32 - 4
    m2 = n_img * 14 - 4

    # pool1 row selection (0.5 folded): picks valid rows of each image's slab.
    sl1 = np.zeros((n_img * 14, m1), np.float32)
    for n in range(n_img):
        for ph in range(14):
            sl1[n * 14 + ph, n * 32 + 2 * ph] = 0.5
            sl1[n * 14 + ph, n * 32 + 2 * ph + 1] = 0.5
    # pool1 column pooling (per-channel block, 0.5 folded).
    sr1 = np.zeros((6 * 28, 6 * 14), np.float32)
    for c in range(6):
        for ow in range(28):
            sr1[c * 28 + ow, c * 14 + ow // 2] = 0.5

    # pool2 row selection, output ordered h-major: row h*n_img + n.
    sl2 = np.zeros((5 * n_img, m2), np.float32)
    for h in range(5):
        for n in range(n_img):
            sl2[h * n_img + n, n * 14 + 2 * h] = 0.5
            sl2[h * n_img + n, n * 14 + 2 * h + 1] = 0.5
    sr2 = np.zeros((16 * 10, 16 * 5), np.float32)
    for c in range(16):
        for ow in range(10):
            sr2[c * 10 + ow, c * 5 + ow // 2] = 0.5

    # fc1 weights re-indexed to the kernel's (h, co*5+pw) layout.
    wf1k = wf1.reshape(120, 16, 5, 5).transpose(2, 1, 3, 0).reshape(5, 80, 120)
    bf1r = bf1[None, :]                                    # (1, 120)
    wf2k = np.ascontiguousarray(wf2.T)                     # (120, 84)
    bf2r = bf2[None, :]                                    # (1, 84)
    # fc3 padded to 128 output lanes for a lane-dense HBM store.
    wf3k = np.zeros((84, 128), np.float32)
    wf3k[:, :10] = wf3.T
    bf3r = np.zeros((1, 128), np.float32)
    bf3r[0, :10] = bf3

    raw = dict(g1=g1, b1=b1r, sl1=sl1, sr1=sr1,
               g2=g2, b2=b2r, sl2=sl2, sr2=sr2,
               wf1=wf1k, bf1=bf1r, wf2=wf2k, bf2=bf2r,
               wf3=wf3k, bf3=bf3r)
    return {k: jnp.asarray(v) for k, v in raw.items()}


# ----------------------------------------------------------------------------
# Forward pass: single fused pallas_call
# ----------------------------------------------------------------------------
def mylenet_forward(x, kp, n_img=8):
    """x: (B, 1, 32, 32) f32; kp: output of prepare_params(params, n_img)."""
    assert n_img % 8 == 0, "n_img must be a multiple of 8 (output block rows)"
    B = x.shape[0]
    Bp = ((B + n_img - 1) // n_img) * n_img
    x3 = x.reshape(B, 32, 32).astype(jnp.float32)
    if Bp != B:                                            # pad batch with zeros
        x3 = jnp.concatenate(
            [x3, jnp.zeros((Bp - B, 32, 32), jnp.float32)], axis=0)
    x2 = x3.reshape(Bp * 32, 32)                           # row-stacked images

    operands = (x2, kp["g1"], kp["b1"], kp["sl1"], kp["sr1"],
                kp["g2"], kp["b2"], kp["sl2"], kp["sr2"],
                kp["wf1"], kp["bf1"], kp["wf2"], kp["bf2"],
                kp["wf3"], kp["bf3"])

    def _const_spec(a):
        nd = a.ndim
        return pl.BlockSpec(a.shape, lambda b, _nd=nd: (0,) * _nd)

    in_specs = [pl.BlockSpec((n_img * 32, 32), lambda b: (b, 0))]
    in_specs += [_const_spec(a) for a in operands[1:]]

    steps = Bp // n_img
    m1, m2 = n_img * 32 - 4, n_img * 14 - 4
    flops = 2 * steps * (
        5 * m1 * 32 * 168                                   # conv1
        + n_img * 14 * m1 * 168 + n_img * 14 * 168 * 84     # pool1
        + 5 * m2 * 84 * 160                                 # conv2
        + 5 * n_img * m2 * 160 + 5 * n_img * 160 * 80       # pool2
        + 5 * n_img * 80 * 120                              # fc1
        + n_img * 120 * 84 + n_img * 84 * 128)              # fc2, fc3
    transc = steps * (m1 * 168 + m2 * 160 + n_img * (120 + 84))
    bytes_acc = 4 * (int(x2.size)
                     + sum(int(a.size) for a in operands[1:]) + Bp * 128)

    kernel = functools.partial(_lenet_kernel, n_img=n_img)

    out_pad = pl.pallas_call(
        kernel,
        out_shape=jax.ShapeDtypeStruct((Bp, 128), jnp.float32),
        grid=(steps,),
        in_specs=in_specs,
        out_specs=pl.BlockSpec((n_img, 128), lambda b: (b, 0)),
        scratch_shapes=[pltpu.VMEM((n_img * 14, 6 * 14), jnp.float32)],
        compiler_params=pltpu.CompilerParams(
            dimension_semantics=("parallel",),
            vmem_limit_bytes=32 * 1024 * 1024,
        ),
        cost_estimate=pl.CostEstimate(flops=flops, transcendentals=transc,
                                      bytes_accessed=bytes_acc),
    )(*operands)
    return out_pad[:B, :10]


# ----------------------------------------------------------------------------
# Pure-JAX reference (sanity check of the Pallas path)
# ----------------------------------------------------------------------------
def reference_forward(x, p):
    dn = ("NCHW", "OIHW", "NCHW")

    def conv(x, w, b):
        y = jax.lax.conv_general_dilated(x, w, (1, 1), "VALID",
                                         dimension_numbers=dn)
        return y + b.reshape(1, -1, 1, 1)

    def pool(x):
        B, C, H, W = x.shape
        return x.reshape(B, C, H // 2, 2, W // 2, 2).mean(axis=(3, 5))

    x = pool(jnp.tanh(conv(x, p["w1"], p["b1"])))
    x = pool(jnp.tanh(conv(x, p["w2"], p["b2"])))
    x = x.reshape(x.shape[0], -1)
    x = jnp.tanh(x @ p["wf1"].T + p["bf1"])
    x = jnp.tanh(x @ p["wf2"].T + p["bf2"])
    return x @ p["wf3"].T + p["bf3"]


# ----------------------------------------------------------------------------
# Deterministic parameter init + driver
# ----------------------------------------------------------------------------
def init_params(key):
    ks = jax.random.split(key, 10)

    def w(k, shape, fan_in):
        return jax.random.normal(k, shape, jnp.float32) / np.sqrt(fan_in)

    return {
        "w1": w(ks[0], (6, 1, 5, 5), 25),      "b1": w(ks[1], (6,), 25),
        "w2": w(ks[2], (16, 6, 5, 5), 150),    "b2": w(ks[3], (16,), 150),
        "wf1": w(ks[4], (120, 400), 400),      "bf1": w(ks[5], (120,), 400),
        "wf2": w(ks[6], (84, 120), 120),       "bf2": w(ks[7], (84,), 120),
        "wf3": w(ks[8], (10, 84), 84),         "bf3": w(ks[9], (10,), 84),
    }


if __name__ == "__main__":
    key = jax.random.PRNGKey(0)
    k_x, k_p = jax.random.split(key)
    # 8 images per grid step; B=16 keeps the grid length >= 2 so both v7x
    # TensorCores get work via the "parallel" batch axis.
    B, N_PER_STEP = 16, 8
    x = jax.random.normal(k_x, (B, 1, 32, 32), jnp.float32)
    params = init_params(k_p)
    kparams = prepare_params(params, N_PER_STEP)   # one-time weight prep

    out = jax.block_until_ready(mylenet_forward(x, kparams, N_PER_STEP))
    ref = jax.block_until_ready(reference_forward(x, params))

    assert out.shape == (B, 10), out.shape
    np.testing.assert_allclose(np.asarray(out), np.asarray(ref),
                               rtol=5e-4, atol=5e-4)
    print("KERNEL_OK")
</pallas_src>

<mosaic_0001>
module attributes {stable_mosaic.version = 11 : i64} {
  func.func @_lenet_kernel(%arg0: i32, %arg1: memref<256x32xf32, #tpu.memory_space<vmem>>, %arg2: memref<5x32x168xf32, #tpu.memory_space<vmem>>, %arg3: memref<1x168xf32, #tpu.memory_space<vmem>>, %arg4: memref<112x252xf32, #tpu.memory_space<vmem>>, %arg5: memref<168x84xf32, #tpu.memory_space<vmem>>, %arg6: memref<5x84x160xf32, #tpu.memory_space<vmem>>, %arg7: memref<1x160xf32, #tpu.memory_space<vmem>>, %arg8: memref<40x108xf32, #tpu.memory_space<vmem>>, %arg9: memref<160x80xf32, #tpu.memory_space<vmem>>, %arg10: memref<5x80x120xf32, #tpu.memory_space<vmem>>, %arg11: memref<1x120xf32, #tpu.memory_space<vmem>>, %arg12: memref<120x84xf32, #tpu.memory_space<vmem>>, %arg13: memref<1x84xf32, #tpu.memory_space<vmem>>, %arg14: memref<84x128xf32, #tpu.memory_space<vmem>>, %arg15: memref<1x128xf32, #tpu.memory_space<vmem>>, %arg16: memref<8x128xf32, #tpu.memory_space<vmem>>, %arg17: memref<112x84xf32, #tpu.memory_space<vmem>>) attributes {dimension_semantics = [#tpu.dimension_semantics<parallel>], iteration_bounds = array<i64: 2>, scalar_prefetch = 0 : i64, scratch_operands = 1 : i64, tpu.core_type = #tpu.core_type<tc>, window_params = [{transform_indices = @transform_0, window_bounds = array<i64: 256, 32>}, {pipeline_mode = #tpu.pipeline_mode<synchronous>, transform_indices = @transform_1, window_bounds = array<i64: 5, 32, 168>}, {pipeline_mode = #tpu.pipeline_mode<synchronous>, transform_indices = @transform_2, window_bounds = array<i64: 1, 168>}, {pipeline_mode = #tpu.pipeline_mode<synchronous>, transform_indices = @transform_3, window_bounds = array<i64: 112, 252>}, {pipeline_mode = #tpu.pipeline_mode<synchronous>, transform_indices = @transform_4, window_bounds = array<i64: 168, 84>}, {pipeline_mode = #tpu.pipeline_mode<synchronous>, transform_indices = @transform_5, window_bounds = array<i64: 5, 84, 160>}, {pipeline_mode = #tpu.pipeline_mode<synchronous>, transform_indices = @transform_6, window_bounds = array<i64: 1, 160>}, {pipeline_mode = #tpu.pipeline_mode<synchronous>, transform_indices = @transform_7, window_bounds = array<i64: 40, 108>}, {pipeline_mode = #tpu.pipeline_mode<synchronous>, transform_indices = @transform_8, window_bounds = array<i64: 160, 80>}, {pipeline_mode = #tpu.pipeline_mode<synchronous>, transform_indices = @transform_9, window_bounds = array<i64: 5, 80, 120>}, {pipeline_mode = #tpu.pipeline_mode<synchronous>, transform_indices = @transform_10, window_bounds = array<i64: 1, 120>}, {pipeline_mode = #tpu.pipeline_mode<synchronous>, transform_indices = @transform_11, window_bounds = array<i64: 120, 84>}, {pipeline_mode = #tpu.pipeline_mode<synchronous>, transform_indices = @transform_12, window_bounds = array<i64: 1, 84>}, {pipeline_mode = #tpu.pipeline_mode<synchronous>, transform_indices = @transform_13, window_bounds = array<i64: 84, 128>}, {pipeline_mode = #tpu.pipeline_mode<synchronous>, transform_indices = @transform_14, window_bounds = array<i64: 1, 128>}, {transform_indices = @transform_15, window_bounds = array<i64: 8, 128>}]} {
    %c0 = arith.constant 0 : index
    %c0_0 = arith.constant 0 : index
    %0 = vector.load %arg1[%c0, %c0_0] : memref<256x32xf32, #tpu.memory_space<vmem>>, vector<252x32xf32>
    %c0_1 = arith.constant 0 : index
    %c0_2 = arith.constant 0 : index
    %c0_3 = arith.constant 0 : index
    %1 = vector.load %arg2[%c0_1, %c0_2, %c0_3] : memref<5x32x168xf32, #tpu.memory_space<vmem>>, vector<1x32x168xf32>
    %2 = vector.shape_cast %1 : vector<1x32x168xf32> to vector<32x168xf32>
    %cst = arith.constant dense<0.000000e+00> : vector<252x168xf32>
    %3 = tpu.matmul %0, %2, %cst {dimension_numbers = #tpu.dot_dimension_numbers<[1], [0], [0], [1], [0, 0, 1, 1], [], []>} : vector<252x32xf32>, vector<32x168xf32>, vector<252x168xf32> -> vector<252x168xf32>
    %c1 = arith.constant 1 : index
    %c0_4 = arith.constant 0 : index
    %4 = vector.load %arg1[%c1, %c0_4] : memref<256x32xf32, #tpu.memory_space<vmem>>, vector<252x32xf32>
    %c1_5 = arith.constant 1 : index
    %c0_6 = arith.constant 0 : index
    %c0_7 = arith.constant 0 : index
    %5 = vector.load %arg2[%c1_5, %c0_6, %c0_7] : memref<5x32x168xf32, #tpu.memory_space<vmem>>, vector<1x32x168xf32>
    %6 = vector.shape_cast %5 : vector<1x32x168xf32> to vector<32x168xf32>
    %cst_8 = arith.constant dense<0.000000e+00> : vector<252x168xf32>
    %7 = tpu.matmul %4, %6, %cst_8 {dimension_numbers = #tpu.dot_dimension_numbers<[1], [0], [0], [1], [0, 0, 1, 1], [], []>} : vector<252x32xf32>, vector<32x168xf32>, vector<252x168xf32> -> vector<252x168xf32>
    %8 = arith.addf %3, %7 : vector<252x168xf32>
    %c2 = arith.constant 2 : index
    %c0_9 = arith.constant 0 : index
    %9 = vector.load %arg1[%c2, %c0_9] : memref<256x32xf32, #tpu.memory_space<vmem>>, vector<252x32xf32>
    %c2_10 = arith.constant 2 : index
    %c0_11 = arith.constant 0 : index
    %c0_12 = arith.constant 0 : index
    %10 = vector.load %arg2[%c2_10, %c0_11, %c0_12] : memref<5x32x168xf32, #tpu.memory_space<vmem>>, vector<1x32x168xf32>
    %11 = vector.shape_cast %10 : vector<1x32x168xf32> to vector<32x168xf32>
    %cst_13 = arith.constant dense<0.000000e+00> : vector<252x168xf32>
    %12 = tpu.matmul %9, %11, %cst_13 {dimension_numbers = #tpu.dot_dimension_numbers<[1], [0], [0], [1], [0, 0, 1, 1], [], []>} : vector<252x32xf32>, vector<32x168xf32>, vector<252x168xf32> -> vector<252x168xf32>
    %13 = arith.addf %8, %12 : vector<252x168xf32>
    %c3 = arith.constant 3 : index
    %c0_14 = arith.constant 0 : index
    %14 = vector.load %arg1[%c3, %c0_14] : memref<256x32xf32, #tpu.memory_space<vmem>>, vector<252x32xf32>
    %c3_15 = arith.constant 3 : index
    %c0_16 = arith.constant 0 : index
    %c0_17 = arith.constant 0 : index
    %15 = vector.load %arg2[%c3_15, %c0_16, %c0_17] : memref<5x32x168xf32, #tpu.memory_space<vmem>>, vector<1x32x168xf32>
    %16 = vector.shape_cast %15 : vector<1x32x168xf32> to vector<32x168xf32>
    %cst_18 = arith.constant dense<0.000000e+00> : vector<252x168xf32>
    %17 = tpu.matmul %14, %16, %cst_18 {dimension_numbers = #tpu.dot_dimension_numbers<[1], [0], [0], [1], [0, 0, 1, 1], [], []>} : vector<252x32xf32>, vector<32x168xf32>, vector<252x168xf32> -> vector<252x168xf32>
    %18 = arith.addf %13, %17 : vector<252x168xf32>
    %c4 = arith.constant 4 : index
    %c0_19 = arith.constant 0 : index
    %19 = vector.load %arg1[%c4, %c0_19] : memref<256x32xf32, #tpu.memory_space<vmem>>, vector<252x32xf32>
    %c4_20 = arith.constant 4 : index
    %c0_21 = arith.constant 0 : index
    %c0_22 = arith.constant 0 : index
    %20 = vector.load %arg2[%c4_20, %c0_21, %c0_22] : memref<5x32x168xf32, #tpu.memory_space<vmem>>, vector<1x32x168xf32>
    %21 = vector.shape_cast %20 : vector<1x32x168xf32> to vector<32x168xf32>
    %cst_23 = arith.constant dense<0.000000e+00> : vector<252x168xf32>
    %22 = tpu.matmul %19, %21, %cst_23 {dimension_numbers = #tpu.dot_dimension_numbers<[1], [0], [0], [1], [0, 0, 1, 1], [], []>} : vector<252x32xf32>, vector<32x168xf32>, vector<252x168xf32> -> vector<252x168xf32>
    %23 = arith.addf %18, %22 : vector<252x168xf32>
    %c0_24 = arith.constant 0 : index
    %c0_25 = arith.constant 0 : index
    %24 = vector.load %arg3[%c0_24, %c0_25] : memref<1x168xf32, #tpu.memory_space<vmem>>, vector<1x168xf32>
    %25 = vector.broadcast %24 : vector<1x168xf32> to vector<252x168xf32>
    %26 = arith.addf %23, %25 : vector<252x168xf32>
    %27 = math.tanh %26 : vector<252x168xf32>
    %c0_26 = arith.constant 0 : index
    %c0_27 = arith.constant 0 : index
    %28 = vector.load %arg4[%c0_26, %c0_27] : memref<112x252xf32, #tpu.memory_space<vmem>>, vector<112x252xf32>
    %cst_28 = arith.constant dense<0.000000e+00> : vector<112x168xf32>
    %29 = tpu.matmul %28, %27, %cst_28 {dimension_numbers = #tpu.dot_dimension_numbers<[1], [0], [0], [1], [0, 0, 1, 1], [], []>} : vector<112x252xf32>, vector<252x168xf32>, vector<112x168xf32> -> vector<112x168xf32>
    %c0_29 = arith.constant 0 : index
    %c0_30 = arith.constant 0 : index
    %30 = vector.load %arg5[%c0_29, %c0_30] : memref<168x84xf32, #tpu.memory_space<vmem>>, vector<168x84xf32>
    %cst_31 = arith.constant dense<0.000000e+00> : vector<112x84xf32>
    %31 = tpu.matmul %29, %30, %cst_31 {dimension_numbers = #tpu.dot_dimension_numbers<[1], [0], [0], [1], [0, 0, 1, 1], [], []>} : vector<112x168xf32>, vector<168x84xf32>, vector<112x84xf32> -> vector<112x84xf32>
    %c0_32 = arith.constant 0 : index
    %c0_33 = arith.constant 0 : index
    %32 = vector.load %arg17[%c0_32, %c0_33] : memref<112x84xf32, #tpu.memory_space<vmem>>, vector<112x84xf32>
    tpu.vector_store %arg17[%c0_32, %c0_33], %31 {strides = array<i32>} : memref<112x84xf32, #tpu.memory_space<vmem>>, vector<112x84xf32>,
    %c0_34 = arith.constant 0 : index
    %c0_35 = arith.constant 0 : index
    %33 = vector.load %arg17[%c0_34, %c0_35] : memref<112x84xf32, #tpu.memory_space<vmem>>, vector<108x84xf32>
    %c0_36 = arith.constant 0 : index
    %c0_37 = arith.constant 0 : index
    %c0_38 = arith.constant 0 : index
    %34 = vector.load %arg6[%c0_36, %c0_37, %c0_38] : memref<5x84x160xf32, #tpu.memory_space<vmem>>, vector<1x84x160xf32>
    %35 = vector.shape_cast %34 : vector<1x84x160xf32> to vector<84x160xf32>
    %cst_39 = arith.constant dense<0.000000e+00> : vector<108x160xf32>
    %36 = tpu.matmul %33, %35, %cst_39 {dimension_numbers = #tpu.dot_dimension_numbers<[1], [0], [0], [1], [0, 0, 1, 1], [], []>} : vector<108x84xf32>, vector<84x160xf32>, vector<108x160xf32> -> vector<108x160xf32>
    %c1_40 = arith.constant 1 : index
    %c0_41 = arith.constant 0 : index
    %37 = vector.load %arg17[%c1_40, %c0_41] : memref<112x84xf32, #tpu.memory_space<vmem>>, vector<108x84xf32>
    %c1_42 = arith.constant 1 : index
    %c0_43 = arith.constant 0 : index
    %c0_44 = arith.constant 0 : index
    %38 = vector.load %arg6[%c1_42, %c0_43, %c0_44] : memref<5x84x160xf32, #tpu.memory_space<vmem>>, vector<1x84x160xf32>
    %39 = vector.shape_cast %38 : vector<1x84x160xf32> to vector<84x160xf32>
    %cst_45 = arith.constant dense<0.000000e+00> : vector<108x160xf32>
    %40 = tpu.matmul %37, %39, %cst_45 {dimension_numbers = #tpu.dot_dimension_numbers<[1], [0], [0], [1], [0, 0, 1, 1], [], []>} : vector<108x84xf32>, vector<84x160xf32>, vector<108x160xf32> -> vector<108x160xf32>
    %41 = arith.addf %36, %40 : vector<108x160xf32>
    %c2_46 = arith.constant 2 : index
    %c0_47 = arith.constant 0 : index
    %42 = vector.load %arg17[%c2_46, %c0_47] : memref<112x84xf32, #tpu.memory_space<vmem>>, vector<108x84xf32>
    %c2_48 = arith.constant 2 : index
    %c0_49 = arith.constant 0 : index
    %c0_50 = arith.constant 0 : index
    %43 = vector.load %arg6[%c2_48, %c0_49, %c0_50] : memref<5x84x160xf32, #tpu.memory_space<vmem>>, vector<1x84x160xf32>
    %44 = vector.shape_cast %43 : vector<1x84x160xf32> to vector<84x160xf32>
    %cst_51 = arith.constant dense<0.000000e+00> : vector<108x160xf32>
    %45 = tpu.matmul %42, %44, %cst_51 {dimension_numbers = #tpu.dot_dimension_numbers<[1], [0], [0], [1], [0, 0, 1, 1], [], []>} : vector<108x84xf32>, vector<84x160xf32>, vector<108x160xf32> -> vector<108x160xf32>
    %46 = arith.addf %41, %45 : vector<108x160xf32>
    %c3_52 = arith.constant 3 : index
    %c0_53 = arith.constant 0 : index
    %47 = vector.load %arg17[%c3_52, %c0_53] : memref<112x84xf32, #tpu.memory_space<vmem>>, vector<108x84xf32>
    %c3_54 = arith.constant 3 : index
    %c0_55 = arith.constant 0 : index
    %c0_56 = arith.constant 0 : index
    %48 = vector.load %arg6[%c3_54, %c0_55, %c0_56] : memref<5x84x160xf32, #tpu.memory_space<vmem>>, vector<1x84x160xf32>
    %49 = vector.shape_cast %48 : vector<1x84x160xf32> to vector<84x160xf32>
    %cst_57 = arith.constant dense<0.000000e+00> : vector<108x160xf32>
    %50 = tpu.matmul %47, %49, %cst_57 {dimension_numbers = #tpu.dot_dimension_numbers<[1], [0], [0], [1], [0, 0, 1, 1], [], []>} : vector<108x84xf32>, vector<84x160xf32>, vector<108x160xf32> -> vector<108x160xf32>
    %51 = arith.addf %46, %50 : vector<108x160xf32>
    %c4_58 = arith.constant 4 : index
    %c0_59 = arith.constant 0 : index
    %52 = vector.load %arg17[%c4_58, %c0_59] : memref<112x84xf32, #tpu.memory_space<vmem>>, vector<108x84xf32>
    %c4_60 = arith.constant 4 : index
    %c0_61 = arith.constant 0 : index
    %c0_62 = arith.constant 0 : index
    %53 = vector.load %arg6[%c4_60, %c0_61, %c0_62] : memref<5x84x160xf32, #tpu.memory_space<vmem>>, vector<1x84x160xf32>
    %54 = vector.shape_cast %53 : vector<1x84x160xf32> to vector<84x160xf32>
    %cst_63 = arith.constant dense<0.000000e+00> : vector<108x160xf32>
    %55 = tpu.matmul %52, %54, %cst_63 {dimension_numbers = #tpu.dot_dimension_numbers<[1], [0], [0], [1], [0, 0, 1, 1], [], []>} : vector<108x84xf32>, vector<84x160xf32>, vector<108x160xf32> -> vector<108x160xf32>
    %56 = arith.addf %51, %55 : vector<108x160xf32>
    %c0_64 = arith.constant 0 : index
    %c0_65 = arith.constant 0 : index
    %57 = vector.load %arg7[%c0_64, %c0_65] : memref<1x160xf32, #tpu.memory_space<vmem>>, vector<1x160xf32>
    %58 = vector.broadcast %57 : vector<1x160xf32> to vector<108x160xf32>
    %59 = arith.addf %56, %58 : vector<108x160xf32>
    %60 = math.tanh %59 : vector<108x160xf32>
    %c0_66 = arith.constant 0 : index
    %c0_67 = arith.constant 0 : index
    %61 = vector.load %arg8[%c0_66, %c0_67] : memref<40x108xf32, #tpu.memory_space<vmem>>, vector<40x108xf32>
    %cst_68 = arith.constant dense<0.000000e+00> : vector<40x160xf32>
    %62 = tpu.matmul %61, %60, %cst_68 {dimension_numbers = #tpu.dot_dimension_numbers<[1], [0], [0], [1], [0, 0, 1, 1], [], []>} : vector<40x108xf32>, vector<108x160xf32>, vector<40x160xf32> -> vector<40x160xf32>
    %c0_69 = arith.constant 0 : index
    %c0_70 = arith.constant 0 : index
    %63 = vector.load %arg9[%c0_69, %c0_70] : memref<160x80xf32, #tpu.memory_space<vmem>>, vector<160x80xf32>
    %cst_71 = arith.constant dense<0.000000e+00> : vector<40x80xf32>
    %64 = tpu.matmul %62, %63, %cst_71 {dimension_numbers = #tpu.dot_dimension_numbers<[1], [0], [0], [1], [0, 0, 1, 1], [], []>} : vector<40x160xf32>, vector<160x80xf32>, vector<40x80xf32> -> vector<40x80xf32>
    %65 = vector.extract_strided_slice %64 {offsets = [0, 0], sizes = [8, 80], strides = [1, 1]} : vector<40x80xf32> to vector<8x80xf32>
    %c0_72 = arith.constant 0 : index
    %c0_73 = arith.constant 0 : index
    %c0_74 = arith.constant 0 : index
    %66 = vector.load %arg10[%c0_72, %c0_73, %c0_74] : memref<5x80x120xf32, #tpu.memory_space<vmem>>, vector<1x80x120xf32>
    %67 = vector.shape_cast %66 : vector<1x80x120xf32> to vector<80x120xf32>
    %cst_75 = arith.constant dense<0.000000e+00> : vector<8x120xf32>
    %68 = tpu.matmul %65, %67, %cst_75 {dimension_numbers = #tpu.dot_dimension_numbers<[1], [0], [0], [1], [0, 0, 1, 1], [], []>} : vector<8x80xf32>, vector<80x120xf32>, vector<8x120xf32> -> vector<8x120xf32>
    %69 = vector.extract_strided_slice %64 {offsets = [8, 0], sizes = [8, 80], strides = [1, 1]} : vector<40x80xf32> to vector<8x80xf32>
    %c1_76 = arith.constant 1 : index
    %c0_77 = arith.constant 0 : index
    %c0_78 = arith.constant 0 : index
    %70 = vector.load %arg10[%c1_76, %c0_77, %c0_78] : memref<5x80x120xf32, #tpu.memory_space<vmem>>, vector<1x80x120xf32>
    %71 = vector.shape_cast %70 : vector<1x80x120xf32> to vector<80x120xf32>
    %cst_79 = arith.constant dense<0.000000e+00> : vector<8x120xf32>
    %72 = tpu.matmul %69, %71, %cst_79 {dimension_numbers = #tpu.dot_dimension_numbers<[1], [0], [0], [1], [0, 0, 1, 1], [], []>} : vector<8x80xf32>, vector<80x120xf32>, vector<8x120xf32> -> vector<8x120xf32>
    %73 = arith.addf %68, %72 : vector<8x120xf32>
    %74 = vector.extract_strided_slice %64 {offsets = [16, 0], sizes = [8, 80], strides = [1, 1]} : vector<40x80xf32> to vector<8x80xf32>
    %c2_80 = arith.constant 2 : index
    %c0_81 = arith.constant 0 : index
    %c0_82 = arith.constant 0 : index
    %75 = vector.load %arg10[%c2_80, %c0_81, %c0_82] : memref<5x80x120xf32, #tpu.memory_space<vmem>>, vector<1x80x120xf32>
    %76 = vector.shape_cast %75 : vector<1x80x120xf32> to vector<80x120xf32>
    %cst_83 = arith.constant dense<0.000000e+00> : vector<8x120xf32>
    %77 = tpu.matmul %74, %76, %cst_83 {dimension_numbers = #tpu.dot_dimension_numbers<[1], [0], [0], [1], [0, 0, 1, 1], [], []>} : vector<8x80xf32>, vector<80x120xf32>, vector<8x120xf32> -> vector<8x120xf32>
    %78 = arith.addf %73, %77 : vector<8x120xf32>
    %79 = vector.extract_strided_slice %64 {offsets = [24, 0], sizes = [8, 80], strides = [1, 1]} : vector<40x80xf32> to vector<8x80xf32>
    %c3_84 = arith.constant 3 : index
    %c0_85 = arith.constant 0 : index
    %c0_86 = arith.constant 0 : index
    %80 = vector.load %arg10[%c3_84, %c0_85, %c0_86] : memref<5x80x120xf32, #tpu.memory_space<vmem>>, vector<1x80x120xf32>
    %81 = vector.shape_cast %80 : vector<1x80x120xf32> to vector<80x120xf32>
    %cst_87 = arith.constant dense<0.000000e+00> : vector<8x120xf32>
    %82 = tpu.matmul %79, %81, %cst_87 {dimension_numbers = #tpu.dot_dimension_numbers<[1], [0], [0], [1], [0, 0, 1, 1], [], []>} : vector<8x80xf32>, vector<80x120xf32>, vector<8x120xf32> -> vector<8x120xf32>
    %83 = arith.addf %78, %82 : vector<8x120xf32>
    %84 = vector.extract_strided_slice %64 {offsets = [32, 0], sizes = [8, 80], strides = [1, 1]} : vector<40x80xf32> to vector<8x80xf32>
    %c4_88 = arith.constant 4 : index
    %c0_89 = arith.constant 0 : index
    %c0_90 = arith.constant 0 : index
    %85 = vector.load %arg10[%c4_88, %c0_89, %c0_90] : memref<5x80x120xf32, #tpu.memory_space<vmem>>, vector<1x80x120xf32>
    %86 = vector.shape_cast %85 : vector<1x80x120xf32> to vector<80x120xf32>
    %cst_91 = arith.constant dense<0.000000e+00> : vector<8x120xf32>
    %87 = tpu.matmul %84, %86, %cst_91 {dimension_numbers = #tpu.dot_dimension_numbers<[1], [0], [0], [1], [0, 0, 1, 1], [], []>} : vector<8x80xf32>, vector<80x120xf32>, vector<8x120xf32> -> vector<8x120xf32>
    %88 = arith.addf %83, %87 : vector<8x120xf32>
    %c0_92 = arith.constant 0 : index
    %c0_93 = arith.constant 0 : index
    %89 = vector.load %arg11[%c0_92, %c0_93] : memref<1x120xf32, #tpu.memory_space<vmem>>, vector<1x120xf32>
    %90 = vector.broadcast %89 : vector<1x120xf32> to vector<8x120xf32>
    %91 = arith.addf %88, %90 : vector<8x120xf32>
    %92 = math.tanh %91 : vector<8x120xf32>
    %c0_94 = arith.constant 0 : index
    %c0_95 = arith.constant 0 : index
    %93 = vector.load %arg12[%c0_94, %c0_95] : memref<120x84xf32, #tpu.memory_space<vmem>>, vector<120x84xf32>
    %cst_96 = arith.constant dense<0.000000e+00> : vector<8x84xf32>
    %94 = tpu.matmul %92, %93, %cst_96 {dimension_numbers = #tpu.dot_dimension_numbers<[1], [0], [0], [1], [0, 0, 1, 1], [], []>} : vector<8x120xf32>, vector<120x84xf32>, vector<8x84xf32> -> vector<8x84xf32>
    %c0_97 = arith.constant 0 : index
    %c0_98 = arith.constant 0 : index
    %95 = vector.load %arg13[%c0_97, %c0_98] : memref<1x84xf32, #tpu.memory_space<vmem>>, vector<1x84xf32>
    %96 = vector.broadcast %95 : vector<1x84xf32> to vector<8x84xf32>
    %97 = arith.addf %94, %96 : vector<8x84xf32>
    %98 = math.tanh %97 : vector<8x84xf32>
    %c0_99 = arith.constant 0 : index
    %c0_100 = arith.constant 0 : index
    %99 = vector.load %arg14[%c0_99, %c0_100] : memref<84x128xf32, #tpu.memory_space<vmem>>, vector<84x128xf32>
    %cst_101 = arith.constant dense<0.000000e+00> : vector<8x128xf32>
    %100 = tpu.matmul %98, %99, %cst_101 {dimension_numbers = #tpu.dot_dimension_numbers<[1], [0], [0], [1], [0, 0, 1, 1], [], []>} : vector<8x84xf32>, vector<84x128xf32>, vector<8x128xf32> -> vector<8x128xf32>
    %c0_102 = arith.constant 0 : index
    %c0_103 = arith.constant 0 : index
    %101 = vector.load %arg15[%c0_102, %c0_103] : memref<1x128xf32, #tpu.memory_space<vmem>>, vector<1x128xf32>
    %102 = vector.broadcast %101 : vector<1x128xf32> to vector<8x128xf32>
    %103 = arith.addf %100, %102 : vector<8x128xf32>
    %c0_104 = arith.constant 0 : index
    %c0_105 = arith.constant 0 : index
    %104 = vector.load %arg16[%c0_104, %c0_105] : memref<8x128xf32, #tpu.memory_space<vmem>>, vector<8x128xf32>
    tpu.vector_store %arg16[%c0_104, %c0_105], %103 {strides = array<i32>} : memref<8x128xf32, #tpu.memory_space<vmem>>, vector<8x128xf32>,
    return
  }
  func.func @transform_0(%arg0: i32) -> (i32, i32) {
    %c0_i32 = arith.constant 0 : i32
    %c0_i32_0 = arith.constant 0 : i32
    return %arg0, %c0_i32 : i32, i32
  }
  func.func @transform_1(%arg0: i32) -> (i32, i32, i32) {
    %c0_i32 = arith.constant 0 : i32
    %c0_i32_0 = arith.constant 0 : i32
    %c0_i32_1 = arith.constant 0 : i32
    %c0_i32_2 = arith.constant 0 : i32
    return %c0_i32, %c0_i32_0, %c0_i32_1 : i32, i32, i32
  }
  func.func @transform_2(%arg0: i32) -> (i32, i32) {
    %c0_i32 = arith.constant 0 : i32
    %c0_i32_0 = arith.constant 0 : i32
    %c0_i32_1 = arith.constant 0 : i32
    return %c0_i32, %c0_i32_0 : i32, i32
  }
  func.func @transform_3(%arg0: i32) -> (i32, i32) {
    %c0_i32 = arith.constant 0 : i32
    %c0_i32_0 = arith.constant 0 : i32
    %c0_i32_1 = arith.constant 0 : i32
    return %c0_i32, %c0_i32_0 : i32, i32
  }
  func.func @transform_4(%arg0: i32) -> (i32, i32) {
    %c0_i32 = arith.constant 0 : i32
    %c0_i32_0 = arith.constant 0 : i32
    %c0_i32_1 = arith.constant 0 : i32
    return %c0_i32, %c0_i32_0 : i32, i32
  }
  func.func @transform_5(%arg0: i32) -> (i32, i32, i32) {
    %c0_i32 = arith.constant 0 : i32
    %c0_i32_0 = arith.constant 0 : i32
    %c0_i32_1 = arith.constant 0 : i32
    %c0_i32_2 = arith.constant 0 : i32
    return %c0_i32, %c0_i32_0, %c0_i32_1 : i32, i32, i32
  }
  func.func @transform_6(%arg0: i32) -> (i32, i32) {
    %c0_i32 = arith.constant 0 : i32
    %c0_i32_0 = arith.constant 0 : i32
    %c0_i32_1 = arith.constant 0 : i32
    return %c0_i32, %c0_i32_0 : i32, i32
  }
  func.func @transform_7(%arg0: i32) -> (i32, i32) {
    %c0_i32 = arith.constant 0 : i32
    %c0_i32_0 = arith.constant 0 : i32
    %c0_i32_1 = arith.constant 0 : i32
    return %c0_i32, %c0_i32_0 : i32, i32
  }
  func.func @transform_8(%arg0: i32) -> (i32, i32) {
    %c0_i32 = arith.constant 0 : i32
    %c0_i32_0 = arith.constant 0 : i32
    %c0_i32_1 = arith.constant 0 : i32
    return %c0_i32, %c0_i32_0 : i32, i32
  }
  func.func @transform_9(%arg0: i32) -> (i32, i32, i32) {
    %c0_i32 = arith.constant 0 : i32
    %c0_i32_0 = arith.constant 0 : i32
    %c0_i32_1 = arith.constant 0 : i32
    %c0_i32_2 = arith.constant 0 : i32
    return %c0_i32, %c0_i32_0, %c0_i32_1 : i32, i32, i32
  }
  func.func @transform_10(%arg0: i32) -> (i32, i32) {
    %c0_i32 = arith.constant 0 : i32
    %c0_i32_0 = arith.constant 0 : i32
    %c0_i32_1 = arith.constant 0 : i32
    return %c0_i32, %c0_i32_0 : i32, i32
  }
  func.func @transform_11(%arg0: i32) -> (i32, i32) {
    %c0_i32 = arith.constant 0 : i32
    %c0_i32_0 = arith.constant 0 : i32
    %c0_i32_1 = arith.constant 0 : i32
    return %c0_i32, %c0_i32_0 : i32, i32
  }
  func.func @transform_12(%arg0: i32) -> (i32, i32) {
    %c0_i32 = arith.constant 0 : i32
    %c0_i32_0 = arith.constant 0 : i32
    %c0_i32_1 = arith.constant 0 : i32
    return %c0_i32, %c0_i32_0 : i32, i32
  }
  func.func @transform_13(%arg0: i32) -> (i32, i32) {
    %c0_i32 = arith.constant 0 : i32
    %c0_i32_0 = arith.constant 0 : i32
    %c0_i32_1 = arith.constant 0 : i32
    return %c0_i32, %c0_i32_0 : i32, i32
  }
  func.func @transform_14(%arg0: i32) -> (i32, i32) {
    %c0_i32 = arith.constant 0 : i32
    %c0_i32_0 = arith.constant 0 : i32
    %c0_i32_1 = arith.constant 0 : i32
    return %c0_i32, %c0_i32_0 : i32, i32
  }
  func.func @transform_15(%arg0: i32) -> (i32, i32) {
    %c0_i32 = arith.constant 0 : i32
    %c0_i32_0 = arith.constant 0 : i32
    return %arg0, %c0_i32 : i32, i32
  }
}

</mosaic_0001>

<llo_original>
// kernel: tpu_custom_call.1
$region0: #{tpu_custom_call.1}
  #allocation0 [shape = 'u32[]', space=smem, size = 0x4, offset = 0x4, fixed_abs, tag = 'smem constant byte address 0x4 - core index']
  #allocation1 [shape = 'u32[144,128]{1,0:T(1,128)}', space=vmem, size = 0x12000, scoped, tag = 'internal scratch']
  #allocation2 [shape = 'f32[112,84]{1,0:T(8,128)}', space=vmem, size = 0xe000, scoped, tag = 'scratch operand']
  %s0 = inlined_call_operand.vmem [shape: f32[512,32], index: 0, kind: input, shape index: {}]
  %s1 = inlined_call_operand.vmem [shape: f32[5,32,168], index: 1, kind: input, shape index: {}]
  %s2 = inlined_call_operand.vmem [shape: f32[1,168], index: 2, kind: input, shape index: {}]
  %s3 = inlined_call_operand.vmem [shape: f32[112,252], index: 3, kind: input, shape index: {}]
  %s4 = inlined_call_operand.vmem [shape: f32[168,84], index: 4, kind: input, shape index: {}]
  %s5 = inlined_call_operand.vmem [shape: f32[5,84,160], index: 5, kind: input, shape index: {}]
  %s6 = inlined_call_operand.vmem [shape: f32[1,160], index: 6, kind: input, shape index: {}]
  %s7 = inlined_call_operand.vmem [shape: f32[40,108], index: 7, kind: input, shape index: {}]
  %s8 = inlined_call_operand.vmem [shape: f32[160,80], index: 8, kind: input, shape index: {}]
  %s9 = inlined_call_operand.vmem [shape: f32[5,80,120], index: 9, kind: input, shape index: {}]
  %s10 = inlined_call_operand.vmem [shape: f32[1,120], index: 10, kind: input, shape index: {}]
  %s11 = inlined_call_operand.vmem [shape: f32[120,84], index: 11, kind: input, shape index: {}]
  %s12 = inlined_call_operand.vmem [shape: f32[1,84], index: 12, kind: input, shape index: {}]
  %s13 = inlined_call_operand.vmem [shape: f32[84,128], index: 13, kind: input, shape index: {}]
  %s14 = inlined_call_operand.vmem [shape: f32[1,128], index: 14, kind: input, shape index: {}]
  %s15 = inlined_call_operand.hbm [shape: f32[16,128], index: 15, kind: output, shape index: {}]
  %s16 = sld [smem:[#allocation0]]
  $region93: #{tpu_custom_call.1} parent=0
    _
  %s18 = ssub.s32 1, %s16
  %s19 = scalar_select 0, %s18, %s16
  $region1: #{tpu_custom_call.1} parent=0
    #allocation3 [shape = 'u8[8192]{0}', space=vmem, size = 0x2000, scoped, tag = 'output window, operand 0']
    #allocation4 [shape = 's32[2]{0}', space=sflag, size = 0x8, scoped, tag = 'scoped memory for tpu_custom_call.1']
    %20 = vsyncpa [#allocation4], 0
    %s21 = scalar_lea.sflag [#allocation4], 1
    %22 = vsyncpa %s21, 0
    loop: start=0, step=1, limit=4
    $region2: #{tpu_custom_call.1} parent=1 // loop_pre_header
      _
    $region3: #{tpu_custom_call.1} parent=1 // loop_header
      %s24 = sphi 0, %s28
      %p25 = scmp.ge.s32.totalorder %s24, 4
      %s34 = sphi 0, %s36
      %s37 = sphi 0, %s34
      %s38 = sphi 0, %s37
      %s54 = sphi 0, %s38
      %s58 = sphi 0, %s58
      %s60 = sphi 0, %s58
      %s61 = sphi 0, %s60
      %s75 = sphi 0, %s61
      %s79 = sphi 0, %s79
      %s81 = sphi 0, %s79
      %s82 = sphi 0, %s81
      %s96 = sphi 0, %s82
      %s100 = sphi 0, %s100
      %s102 = sphi 0, %s100
      %s103 = sphi 0, %s102
      %s117 = sphi 0, %s103
      %s121 = sphi 0, %s121
      %s123 = sphi 0, %s121
      %s124 = sphi 0, %s123
      %s138 = sphi 0, %s124
      %s142 = sphi 0, %s142
      %s144 = sphi 0, %s142
      %s145 = sphi 0, %s144
      %s159 = sphi 0, %s145
      %s163 = sphi 0, %s163
      %s165 = sphi 0, %s163
      %s166 = sphi 0, %s165
      %s180 = sphi 0, %s166
      %s184 = sphi 0, %s184
      %s186 = sphi 0, %s184
      %s187 = sphi 0, %s186
      %s201 = sphi 0, %s187
      %s205 = sphi 0, %s205
      %s207 = sphi 0, %s205
      %s208 = sphi 0, %s207
      %s222 = sphi 0, %s208
      %s226 = sphi 0, %s226
      %s228 = sphi 0, %s226
      %s229 = sphi 0, %s228
      %s243 = sphi 0, %s229
      %s247 = sphi 0, %s247
      %s249 = sphi 0, %s247
      %s250 = sphi 0, %s249
      %s264 = sphi 0, %s250
      %s268 = sphi 0, %s268
      %s270 = sphi 0, %s268
      %s271 = sphi 0, %s270
      %s285 = sphi 0, %s271
      %s289 = sphi 0, %s289
      %s291 = sphi 0, %s289
      %s292 = sphi 0, %s291
      %s306 = sphi 0, %s292
      %s310 = sphi 0, %s310
      %s312 = sphi 0, %s310
      %s313 = sphi 0, %s312
      %s327 = sphi 0, %s313
      %s331 = sphi 0, %s331
      %s333 = sphi 0, %s331
      %s334 = sphi 0, %s333
      %s348 = sphi 0, %s334
      %s354 = sphi 0, %s356
      %s357 = sphi 0, %s354
      %s358 = sphi 0, %s357
      %s374 = sphi 0, %s358
    $region4: #{tpu_custom_call.1} parent=1 // loop_header_branch
      %27 = sbr.rel (%p25) target = $region8
    $region5: #{tpu_custom_call.1} parent=1 // loop_body
      %s29 = ssub.s32 %s24, 1
      %s30 = ssub.s32 %s24, 2
      %s31 = sadd.s32 %s24, 1
      %s32 = ssub.s32 %s24, %s31
      %p33 = scmp.eq.s32.totalorder %s32, 0
      %s35 = sadd.s32 %s34, 1
      %s36 = scalar_select %p33, %s34, %s35
      %p39 = pneg %p33
      %p40 = scmp.eq.s32.totalorder %s24, 1
      %p41 = por %p39, %p40
      %p42 = scmp.ne.s32.totalorder %s34, %s37
      %p43 = scmp.eq.s32.totalorder %s24, 0
      %p44 = por %p42, %p43
      %p45 = scmp.ne.s32.totalorder %s34, %s37
      %p46 = scmp.eq.s32.totalorder %s29, 1
      %p47 = por %p45, %p46
      %p48 = scmp.ne.s32.totalorder %s37, %s38
      %p49 = scmp.eq.s32.totalorder %s29, 0
      %p50 = por %p48, %p49
      %p51 = scmp.ne.s32.totalorder %s37, %s38
      %p52 = scmp.eq.s32.totalorder %s30, 1
      %p53 = por %p51, %p52
      %p55 = scmp.ne.s32.totalorder %s38, %s54
      %p56 = scmp.eq.s32.totalorder %s30, 0
      %p57 = por %p55, %p56
      %s59 = sadd.s32 %s58, 1
      %p62 = scmp.eq.s32.totalorder %s24, 1
      %p63 = scmp.ne.s32.totalorder %s58, %s60
      %p64 = scmp.eq.s32.totalorder %s24, 0
      %p65 = por %p63, %p64
      %p66 = scmp.ne.s32.totalorder %s58, %s60
      %p67 = scmp.eq.s32.totalorder %s29, 1
      %p68 = por %p66, %p67
      %p69 = scmp.ne.s32.totalorder %s60, %s61
      %p70 = scmp.eq.s32.totalorder %s29, 0
      %p71 = por %p69, %p70
      %p72 = scmp.ne.s32.totalorder %s60, %s61
      %p73 = scmp.eq.s32.totalorder %s30, 1
      %p74 = por %p72, %p73
      %p76 = scmp.ne.s32.totalorder %s61, %s75
      %p77 = scmp.eq.s32.totalorder %s30, 0
      %p78 = por %p76, %p77
      %s80 = sadd.s32 %s79, 1
      %p83 = scmp.eq.s32.totalorder %s24, 1
      %p84 = scmp.ne.s32.totalorder %s79, %s81
      %p85 = scmp.eq.s32.totalorder %s24, 0
      %p86 = por %p84, %p85
      %p87 = scmp.ne.s32.totalorder %s79, %s81
      %p88 = scmp.eq.s32.totalorder %s29, 1
      %p89 = por %p87, %p88
      %p90 = scmp.ne.s32.totalorder %s81, %s82
      %p91 = scmp.eq.s32.totalorder %s29, 0
      %p92 = por %p90, %p91
      %p93 = scmp.ne.s32.totalorder %s81, %s82
      %p94 = scmp.eq.s32.totalorder %s30, 1
      %p95 = por %p93, %p94
      %p97 = scmp.ne.s32.totalorder %s82, %s96
      %p98 = scmp.eq.s32.totalorder %s30, 0
      %p99 = por %p97, %p98
      %s101 = sadd.s32 %s100, 1
      %p104 = scmp.eq.s32.totalorder %s24, 1
      %p105 = scmp.ne.s32.totalorder %s100, %s102
      %p106 = scmp.eq.s32.totalorder %s24, 0
      %p107 = por %p105, %p106
      %p108 = scmp.ne.s32.totalorder %s100, %s102
      %p109 = scmp.eq.s32.totalorder %s29, 1
      %p110 = por %p108, %p109
      %p111 = scmp.ne.s32.totalorder %s102, %s103
      %p112 = scmp.eq.s32.totalorder %s29, 0
      %p113 = por %p111, %p112
      %p114 = scmp.ne.s32.totalorder %s102, %s103
      %p115 = scmp.eq.s32.totalorder %s30, 1
      %p116 = por %p114, %p115
      %p118 = scmp.ne.s32.totalorder %s103, %s117
      %p119 = scmp.eq.s32.totalorder %s30, 0
      %p120 = por %p118, %p119
      %s122 = sadd.s32 %s121, 1
      %p125 = scmp.eq.s32.totalorder %s24, 1
      %p126 = scmp.ne.s32.totalorder %s121, %s123
      %p127 = scmp.eq.s32.totalorder %s24, 0
      %p128 = por %p126, %p127
      %p129 = scmp.ne.s32.totalorder %s121, %s123
      %p130 = scmp.eq.s32.totalorder %s29, 1
      %p131 = por %p129, %p130
      %p132 = scmp.ne.s32.totalorder %s123, %s124
      %p133 = scmp.eq.s32.totalorder %s29, 0
      %p134 = por %p132, %p133
      %p135 = scmp.ne.s32.totalorder %s123, %s124
      %p136 = scmp.eq.s32.totalorder %s30, 1
      %p137 = por %p135, %p136
      %p139 = scmp.ne.s32.totalorder %s124, %s138
      %p140 = scmp.eq.s32.totalorder %s30, 0
      %p141 = por %p139, %p140
      %s143 = sadd.s32 %s142, 1
      %p146 = scmp.eq.s32.totalorder %s24, 1
      %p147 = scmp.ne.s32.totalorder %s142, %s144
      %p148 = scmp.eq.s32.totalorder %s24, 0
      %p149 = por %p147, %p148
      %p150 = scmp.ne.s32.totalorder %s142, %s144
      %p151 = scmp.eq.s32.totalorder %s29, 1
      %p152 = por %p150, %p151
      %p153 = scmp.ne.s32.totalorder %s144, %s145
      %p154 = scmp.eq.s32.totalorder %s29, 0
      %p155 = por %p153, %p154
      %p156 = scmp.ne.s32.totalorder %s144, %s145
      %p157 = scmp.eq.s32.totalorder %s30, 1
      %p158 = por %p156, %p157
      %p160 = scmp.ne.s32.totalorder %s145, %s159
      %p161 = scmp.eq.s32.totalorder %s30, 0
      %p162 = por %p160, %p161
      %s164 = sadd.s32 %s163, 1
      %p167 = scmp.eq.s32.totalorder %s24, 1
      %p168 = scmp.ne.s32.totalorder %s163, %s165
      %p169 = scmp.eq.s32.totalorder %s24, 0
      %p170 = por %p168, %p169
      %p171 = scmp.ne.s32.totalorder %s163, %s165
      %p172 = scmp.eq.s32.totalorder %s29, 1
      %p173 = por %p171, %p172
      %p174 = scmp.ne.s32.totalorder %s165, %s166
      %p175 = scmp.eq.s32.totalorder %s29, 0
      %p176 = por %p174, %p175
      %p177 = scmp.ne.s32.totalorder %s165, %s166
      %p178 = scmp.eq.s32.totalorder %s30, 1
      %p179 = por %p177, %p178
      %p181 = scmp.ne.s32.totalorder %s166, %s180
      %p182 = scmp.eq.s32.totalorder %s30, 0
      %p183 = por %p181, %p182
      %s185 = sadd.s32 %s184, 1
      %p188 = scmp.eq.s32.totalorder %s24, 1
      %p189 = scmp.ne.s32.totalorder %s184, %s186
      %p190 = scmp.eq.s32.totalorder %s24, 0
      %p191 = por %p189, %p190
      %p192 = scmp.ne.s32.totalorder %s184, %s186
      %p193 = scmp.eq.s32.totalorder %s29, 1
      %p194 = por %p192, %p193
      %p195 = scmp.ne.s32.totalorder %s186, %s187
      %p196 = scmp.eq.s32.totalorder %s29, 0
      %p197 = por %p195, %p196
      %p198 = scmp.ne.s32.totalorder %s186, %s187
      %p199 = scmp.eq.s32.totalorder %s30, 1
      %p200 = por %p198, %p199
      %p202 = scmp.ne.s32.totalorder %s187, %s201
      %p203 = scmp.eq.s32.totalorder %s30, 0
      %p204 = por %p202, %p203
      %s206 = sadd.s32 %s205, 1
      %p209 = scmp.eq.s32.totalorder %s24, 1
      %p210 = scmp.ne.s32.totalorder %s205, %s207
      %p211 = scmp.eq.s32.totalorder %s24, 0
      %p212 = por %p210, %p211
      %p213 = scmp.ne.s32.totalorder %s205, %s207
      %p214 = scmp.eq.s32.totalorder %s29, 1
      %p215 = por %p213, %p214
      %p216 = scmp.ne.s32.totalorder %s207, %s208
      %p217 = scmp.eq.s32.totalorder %s29, 0
      %p218 = por %p216, %p217
      %p219 = scmp.ne.s32.totalorder %s207, %s208
      %p220 = scmp.eq.s32.totalorder %s30, 1
      %p221 = por %p219, %p220
      %p223 = scmp.ne.s32.totalorder %s208, %s222
      %p224 = scmp.eq.s32.totalorder %s30, 0
      %p225 = por %p223, %p224
      %s227 = sadd.s32 %s226, 1
      %p230 = scmp.eq.s32.totalorder %s24, 1
      %p231 = scmp.ne.s32.totalorder %s226, %s228
      %p232 = scmp.eq.s32.totalorder %s24, 0
      %p233 = por %p231, %p232
      %p234 = scmp.ne.s32.totalorder %s226, %s228
      %p235 = scmp.eq.s32.totalorder %s29, 1
      %p236 = por %p234, %p235
      %p237 = scmp.ne.s32.totalorder %s228, %s229
      %p238 = scmp.eq.s32.totalorder %s29, 0
      %p239 = por %p237, %p238
      %p240 = scmp.ne.s32.totalorder %s228, %s229
      %p241 = scmp.eq.s32.totalorder %s30, 1
      %p242 = por %p240, %p241
      %p244 = scmp.ne.s32.totalorder %s229, %s243
      %p245 = scmp.eq.s32.totalorder %s30, 0
      %p246 = por %p244, %p245
      %s248 = sadd.s32 %s247, 1
      %p251 = scmp.eq.s32.totalorder %s24, 1
      %p252 = scmp.ne.s32.totalorder %s247, %s249
      %p253 = scmp.eq.s32.totalorder %s24, 0
      %p254 = por %p252, %p253
      %p255 = scmp.ne.s32.totalorder %s247, %s249
      %p256 = scmp.eq.s32.totalorder %s29, 1
      %p257 = por %p255, %p256
      %p258 = scmp.ne.s32.totalorder %s249, %s250
      %p259 = scmp.eq.s32.totalorder %s29, 0
      %p260 = por %p258, %p259
      %p261 = scmp.ne.s32.totalorder %s249, %s250
      %p262 = scmp.eq.s32.totalorder %s30, 1
      %p263 = por %p261, %p262
      %p265 = scmp.ne.s32.totalorder %s250, %s264
      %p266 = scmp.eq.s32.totalorder %s30, 0
      %p267 = por %p265, %p266
      %s269 = sadd.s32 %s268, 1
      %p272 = scmp.eq.s32.totalorder %s24, 1
      %p273 = scmp.ne.s32.totalorder %s268, %s270
      %p274 = scmp.eq.s32.totalorder %s24, 0
      %p275 = por %p273, %p274
      %p276 = scmp.ne.s32.totalorder %s268, %s270
      %p277 = scmp.eq.s32.totalorder %s29, 1
      %p278 = por %p276, %p277
      %p279 = scmp.ne.s32.totalorder %s270, %s271
      %p280 = scmp.eq.s32.totalorder %s29, 0
      %p281 = por %p279, %p280
      %p282 = scmp.ne.s32.totalorder %s270, %s271
      %p283 = scmp.eq.s32.totalorder %s30, 1
      %p284 = por %p282, %p283
      %p286 = scmp.ne.s32.totalorder %s271, %s285
      %p287 = scmp.eq.s32.totalorder %s30, 0
      %p288 = por %p286, %p287
      %s290 = sadd.s32 %s289, 1
      %p293 = scmp.eq.s32.totalorder %s24, 1
      %p294 = scmp.ne.s32.totalorder %s289, %s291
      %p295 = scmp.eq.s32.totalorder %s24, 0
      %p296 = por %p294, %p295
      %p297 = scmp.ne.s32.totalorder %s289, %s291
      %p298 = scmp.eq.s32.totalorder %s29, 1
      %p299 = por %p297, %p298
      %p300 = scmp.ne.s32.totalorder %s291, %s292
      %p301 = scmp.eq.s32.totalorder %s29, 0
      %p302 = por %p300, %p301
      %p303 = scmp.ne.s32.totalorder %s291, %s292
      %p304 = scmp.eq.s32.totalorder %s30, 1
      %p305 = por %p303, %p304
      %p307 = scmp.ne.s32.totalorder %s292, %s306
      %p308 = scmp.eq.s32.totalorder %s30, 0
      %p309 = por %p307, %p308
      %s311 = sadd.s32 %s310, 1
      %p314 = scmp.eq.s32.totalorder %s24, 1
      %p315 = scmp.ne.s32.totalorder %s310, %s312
      %p316 = scmp.eq.s32.totalorder %s24, 0
      %p317 = por %p315, %p316
      %p318 = scmp.ne.s32.totalorder %s310, %s312
      %p319 = scmp.eq.s32.totalorder %s29, 1
      %p320 = por %p318, %p319
      %p321 = scmp.ne.s32.totalorder %s312, %s313
      %p322 = scmp.eq.s32.totalorder %s29, 0
      %p323 = por %p321, %p322
      %p324 = scmp.ne.s32.totalorder %s312, %s313
      %p325 = scmp.eq.s32.totalorder %s30, 1
      %p326 = por %p324, %p325
      %p328 = scmp.ne.s32.totalorder %s313, %s327
      %p329 = scmp.eq.s32.totalorder %s30, 0
      %p330 = por %p328, %p329
      %s332 = sadd.s32 %s331, 1
      %p335 = scmp.eq.s32.totalorder %s24, 1
      %p336 = scmp.ne.s32.totalorder %s331, %s333
      %p337 = scmp.eq.s32.totalorder %s24, 0
      %p338 = por %p336, %p337
      %p339 = scmp.ne.s32.totalorder %s331, %s333
      %p340 = scmp.eq.s32.totalorder %s29, 1
      %p341 = por %p339, %p340
      %p342 = scmp.ne.s32.totalorder %s333, %s334
      %p343 = scmp.eq.s32.totalorder %s29, 0
      %p344 = por %p342, %p343
      %p345 = scmp.ne.s32.totalorder %s333, %s334
      %p346 = scmp.eq.s32.totalorder %s30, 1
      %p347 = por %p345, %p346
      %p349 = scmp.ne.s32.totalorder %s334, %s348
      %p350 = scmp.eq.s32.totalorder %s30, 0
      %p351 = por %p349, %p350
      %s352 = ssub.s32 %s24, %s31
      %p353 = scmp.eq.s32.totalorder %s352, 0
      %s355 = sadd.s32 %s354, 1
      %s356 = scalar_select %p353, %s354, %s355
      %p359 = pneg %p353
      %p360 = scmp.eq.s32.totalorder %s24, 1
      %p361 = por %p359, %p360
      %p362 = scmp.ne.s32.totalorder %s354, %s357
      %p363 = scmp.eq.s32.totalorder %s24, 0
      %p364 = por %p362, %p363
      %p365 = scmp.ne.s32.totalorder %s354, %s357
      %p366 = scmp.eq.s32.totalorder %s29, 1
      %p367 = por %p365, %p366
      %p368 = scmp.ne.s32.totalorder %s357, %s358
      %p369 = scmp.eq.s32.totalorder %s29, 0
      %p370 = por %p368, %p369
      %p371 = scmp.ne.s32.totalorder %s357, %s358
      %p372 = scmp.eq.s32.totalorder %s30, 1
      %p373 = por %p371, %p372
      %p375 = scmp.ne.s32.totalorder %s358, %s374
      %p376 = scmp.eq.s32.totalorder %s30, 0
      %p377 = por %p375, %p376
      %p378 = scmp.le.s32.totalorder 1, %s24
      %p379 = scmp.lt.s32.totalorder %s24, 3
      %p380 = pnand %p378, %p379
      %p381 = pneg %p380
      // Predicated region
      $region9: #{tpu_custom_call.1} parent=5 // pred_check
        _
      $region10: #{tpu_custom_call.1} parent=5 // pred_check_branch
        %383 = sbr.rel (%p380) target = $region12
      $region11: #{tpu_custom_call.1} parent=5 // pred_region
        %s384 = ssub.s32 %s24, 1
        // Predicated region
        $region13: #{tpu_custom_call.1} parent=11 // pred_check
          %p385 = pneg %p71
        $region14: #{tpu_custom_call.1} parent=11 // pred_check_branch
          %387 = sbr.rel (%p385) target = $region16
        $region15: #{tpu_custom_call.1} parent=11 // pred_region
          _
        $region16: #{tpu_custom_call.1} parent=11 // pred_fallthru
          _
        // Predicated region
        $region17: #{tpu_custom_call.1} parent=11 // pred_check
          %p388 = pneg %p92
        $region18: #{tpu_custom_call.1} parent=11 // pred_check_branch
          %390 = sbr.rel (%p388) target = $region20
        $region19: #{tpu_custom_call.1} parent=11 // pred_region
          _
        $region20: #{tpu_custom_call.1} parent=11 // pred_fallthru
          _
        // Predicated region
        $region21: #{tpu_custom_call.1} parent=11 // pred_check
          %p391 = pneg %p113
        $region22: #{tpu_custom_call.1} parent=11 // pred_check_branch
          %393 = sbr.rel (%p391) target = $region24
        $region23: #{tpu_custom_call.1} parent=11 // pred_region
          _
        $region24: #{tpu_custom_call.1} parent=11 // pred_fallthru
          _
        // Predicated region
        $region25: #{tpu_custom_call.1} parent=11 // pred_check
          %p394 = pneg %p134
        $region26: #{tpu_custom_call.1} parent=11 // pred_check_branch
          %396 = sbr.rel (%p394) target = $region28
        $region27: #{tpu_custom_call.1} parent=11 // pred_region
          _
        $region28: #{tpu_custom_call.1} parent=11 // pred_fallthru
          _
        // Predicated region
        $region29: #{tpu_custom_call.1} parent=11 // pred_check
          %p397 = pneg %p155
        $region30: #{tpu_custom_call.1} parent=11 // pred_check_branch
          %399 = sbr.rel (%p397) target = $region32
        $region31: #{tpu_custom_call.1} parent=11 // pred_region
          _
        $region32: #{tpu_custom_call.1} parent=11 // pred_fallthru
          _
        // Predicated region
        $region33: #{tpu_custom_call.1} parent=11 // pred_check
          %p400 = pneg %p176
        $region34: #{tpu_custom_call.1} parent=11 // pred_check_branch
          %402 = sbr.rel (%p400) target = $region36
        $region35: #{tpu_custom_call.1} parent=11 // pred_region
          _
        $region36: #{tpu_custom_call.1} parent=11 // pred_fallthru
          _
        // Predicated region
        $region37: #{tpu_custom_call.1} parent=11 // pred_check
          %p403 = pneg %p197
        $region38: #{tpu_custom_call.1} parent=11 // pred_check_branch
          %405 = sbr.rel (%p403) target = $region40
        $region39: #{tpu_custom_call.1} parent=11 // pred_region
          _
        $region40: #{tpu_custom_call.1} parent=11 // pred_fallthru
          _
        // Predicated region
        $region41: #{tpu_custom_call.1} parent=11 // pred_check
          %p406 = pneg %p218
        $region42: #{tpu_custom_call.1} parent=11 // pred_check_branch
          %408 = sbr.rel (%p406) target = $region44
        $region43: #{tpu_custom_call.1} parent=11 // pred_region
          _
        $region44: #{tpu_custom_call.1} parent=11 // pred_fallthru
          _
        // Predicated region
        $region45: #{tpu_custom_call.1} parent=11 // pred_check
          %p409 = pneg %p239
        $region46: #{tpu_custom_call.1} parent=11 // pred_check_branch
          %411 = sbr.rel (%p409) target = $region48
        $region47: #{tpu_custom_call.1} parent=11 // pred_region
          _
        $region48: #{tpu_custom_call.1} parent=11 // pred_fallthru
          _
        // Predicated region
        $region49: #{tpu_custom_call.1} parent=11 // pred_check
          %p412 = pneg %p260
        $region50: #{tpu_custom_call.1} parent=11 // pred_check_branch
          %414 = sbr.rel (%p412) target = $region52
        $region51: #{tpu_custom_call.1} parent=11 // pred_region
          _
        $region52: #{tpu_custom_call.1} parent=11 // pred_fallthru
          _
        // Predicated region
        $region53: #{tpu_custom_call.1} parent=11 // pred_check
          %p415 = pneg %p281
        $region54: #{tpu_custom_call.1} parent=11 // pred_check_branch
          %417 = sbr.rel (%p415) target = $region56
        $region55: #{tpu_custom_call.1} parent=11 // pred_region
          _
        $region56: #{tpu_custom_call.1} parent=11 // pred_fallthru
          _
        // Predicated region
        $region57: #{tpu_custom_call.1} parent=11 // pred_check
          %p418 = pneg %p302
        $region58: #{tpu_custom_call.1} parent=11 // pred_check_branch
          %420 = sbr.rel (%p418) target = $region60
        $region59: #{tpu_custom_call.1} parent=11 // pred_region
          _
        $region60: #{tpu_custom_call.1} parent=11 // pred_fallthru
          _
        // Predicated region
        $region61: #{tpu_custom_call.1} parent=11 // pred_check
          %p421 = pneg %p323
        $region62: #{tpu_custom_call.1} parent=11 // pred_check_branch
          %423 = sbr.rel (%p421) target = $region64
        $region63: #{tpu_custom_call.1} parent=11 // pred_region
          _
        $region64: #{tpu_custom_call.1} parent=11 // pred_fallthru
          _
        // Predicated region
        $region65: #{tpu_custom_call.1} parent=11 // pred_check
          %p424 = pneg %p344
        $region66: #{tpu_custom_call.1} parent=11 // pred_check_branch
          %426 = sbr.rel (%p424) target = $region68
        $region67: #{tpu_custom_call.1} parent=11 // pred_region
          _
        $region68: #{tpu_custom_call.1} parent=11 // pred_fallthru
          _
      $region12: #{tpu_custom_call.1} parent=5 // pred_fallthru
        _
      %p427 = scmp.lt.s32.totalorder %s24, 2
      // Predicated region
      $region69: #{tpu_custom_call.1} parent=5 // pred_check
        %p428 = pneg %p427
      $region70: #{tpu_custom_call.1} parent=5 // pred_check_branch
        %430 = sbr.rel (%p428) target = $region72
      $region71: #{tpu_custom_call.1} parent=5 // pred_region
        // Predicated region
        $region73: #{tpu_custom_call.1} parent=71 // pred_check
          %p431 = pneg %p44
        $region74: #{tpu_custom_call.1} parent=71 // pred_check_branch
          %433 = sbr.rel (%p431) target = $region76
        $region75: #{tpu_custom_call.1} parent=71 // pred_region
          %s434 = smul.u32 32, %s24
          %p435 = scmp.lt.s32.totalorder %s434, 63
          %s436 = scalar_select %p435, %s434, 63
          %s437 = smul.addr %s436, 8
          %s438 = scalar_lea.vmem %s0, %s437
          %s439 = smul.u32 32, %s24
        $region76: #{tpu_custom_call.1} parent=71 // pred_fallthru
          _
      $region72: #{tpu_custom_call.1} parent=5 // pred_fallthru
        _
      %p440 = scmp.le.s32.totalorder 1, %s24
      %p441 = scmp.lt.s32.totalorder %s24, 3
      %p442 = pnand %p440, %p441
      %p443 = pneg %p442
      // Predicated region
      $region77: #{tpu_custom_call.1} parent=5 // pred_check
        _
      $region78: #{tpu_custom_call.1} parent=5 // pred_check_branch
        %445 = sbr.rel (%p442) target = $region80
      $region79: #{tpu_custom_call.1} parent=5 // pred_region
        %s446 = ssub.s32 %s24, 1
        %s447 = smul.u32 32, %s29
        %p448 = scmp.lt.s32.totalorder %s447, 63
        %s449 = scalar_select %p448, %s447, 63
        %s450 = smul.addr %s449, 8
        %s451 = scalar_lea.vmem %s0, %s450
        %p452 = pneg %p50
        %p453 = pneg %p47
        %p454 = pneg %p71
        %p455 = pneg %p68
        %p456 = pneg %p92
        %p457 = pneg %p89
        %p458 = pneg %p113
        %p459 = pneg %p110
        %p460 = pneg %p134
        %p461 = pneg %p131
        %p462 = pneg %p155
        %p463 = pneg %p152
        %p464 = pneg %p176
        %p465 = pneg %p173
        %p466 = pneg %p197
        %p467 = pneg %p194
        %p468 = pneg %p218
        %p469 = pneg %p215
        %p470 = pneg %p239
        %p471 = pneg %p236
        %p472 = pneg %p260
        %p473 = pneg %p257
        %p474 = pneg %p281
        %p475 = pneg %p278
        %p476 = pneg %p302
        %p477 = pneg %p299
        %p478 = pneg %p323
        %p479 = pneg %p320
        %p480 = pneg %p344
        %p481 = pneg %p341
        %p482 = pneg %p370
        %p483 = pneg %p367
        %s484 = sand.u32 %s357, 1
        %s485 = scalar_lea.sflag [#allocation4], %s484
        %s486 = sand.u32 %s357, 1
        %s487 = smul.addr %s486, 8
        %s488 = scalar_lea.vmem [#allocation3], %s487
        %s489 = smul.u32 32, %s29
        %p490 = scmp.lt.s32.totalorder %s489, 63
        %s491 = scalar_select %p490, %s489, 63
        %s492 = smul.addr %s491, 8
        %s493 = scalar_lea.vmem %s0, %s492
        %s494 = smul.u32 32, %s29
        %v495 = vld [vmem:[%s493] sm:$0xff]
        %v496 = vld [vmem:[%s493 + $0x8] sm:$0xff]
        %v497 = vld [vmem:[%s493 + $0x10] sm:$0xff]
        %v498 = vld [vmem:[%s493 + $0x18] sm:$0xff]
        %v499 = vld [vmem:[%s493 + $0x20] sm:$0xff]
        %v500 = vld [vmem:[%s493 + $0x28] sm:$0xff]
        %v501 = vld [vmem:[%s493 + $0x30] sm:$0xff]
        %v502 = vld [vmem:[%s493 + $0x38] sm:$0xff]
        %v503 = vld [vmem:[%s493 + $0x40] sm:$0xff]
        %v504 = vld [vmem:[%s493 + $0x48] sm:$0xff]
        %v505 = vld [vmem:[%s493 + $0x50] sm:$0xff]
        %v506 = vld [vmem:[%s493 + $0x58] sm:$0xff]
        %v507 = vld [vmem:[%s493 + $0x60] sm:$0xff]
        %v508 = vld [vmem:[%s493 + $0x68] sm:$0xff]
        %v509 = vld [vmem:[%s493 + $0x70] sm:$0xff]
        %v510 = vld [vmem:[%s493 + $0x78] sm:$0xff]
        %v511 = vld [vmem:[%s493 + $0x80] sm:$0xff]
        %v512 = vld [vmem:[%s493 + $0x88] sm:$0xff]
        %v513 = vld [vmem:[%s493 + $0x90] sm:$0xff]
        %v514 = vld [vmem:[%s493 + $0x98] sm:$0xff]
        %v515 = vld [vmem:[%s493 + $0xa0] sm:$0xff]
        %v516 = vld [vmem:[%s493 + $0xa8] sm:$0xff]
        %v517 = vld [vmem:[%s493 + $0xb0] sm:$0xff]
        %v518 = vld [vmem:[%s493 + $0xb8] sm:$0xff]
        %v519 = vld [vmem:[%s493 + $0xc0] sm:$0xff]
        %v520 = vld [vmem:[%s493 + $0xc8] sm:$0xff]
        %v521 = vld [vmem:[%s493 + $0xd0] sm:$0xff]
        %v522 = vld [vmem:[%s493 + $0xd8] sm:$0xff]
        %v523 = vld [vmem:[%s493 + $0xe0] sm:$0xff]
        %v524 = vld [vmem:[%s493 + $0xe8] sm:$0xff]
        %v525 = vld [vmem:[%s493 + $0xf0] sm:$0xff]
        %v526 = vld [vmem:[%s493 + $0xf8] sm:$0xf]
        %v527 = vld [vmem:[%s1] sm:$0xff]
        %v528 = vld [vmem:[%s1 + $0x8] sm:$0xff]
        %v529 = vld [vmem:[%s1 + $0x10] sm:$0xff]
        %v530 = vld [vmem:[%s1 + $0x18] sm:$0xff]
        %v531 = vld [vmem:[%s1 + $0x20] sm:$0xff]
        %v532 = vld [vmem:[%s1 + $0x28] sm:$0xff]
        %v533 = vld [vmem:[%s1 + $0x30] sm:$0xff]
        %v534 = vld [vmem:[%s1 + $0x38] sm:$0xff]
        %v535 = vld [vmem:[%s493 + $0x1] sm:$0xff]
        %v536 = vld [vmem:[%s493 + $0x9] sm:$0xff]
        %v537 = vld [vmem:[%s493 + $0x11] sm:$0xff]
        %v538 = vld [vmem:[%s493 + $0x19] sm:$0xff]
        %v539 = vld [vmem:[%s493 + $0x21] sm:$0xff]
        %v540 = vld [vmem:[%s493 + $0x29] sm:$0xff]
        %v541 = vld [vmem:[%s493 + $0x31] sm:$0xff]
        %v542 = vld [vmem:[%s493 + $0x39] sm:$0xff]
        %v543 = vld [vmem:[%s493 + $0x41] sm:$0xff]
        %v544 = vld [vmem:[%s493 + $0x49] sm:$0xff]
        %v545 = vld [vmem:[%s493 + $0x51] sm:$0xff]
        %v546 = vld [vmem:[%s493 + $0x59] sm:$0xff]
        %v547 = vld [vmem:[%s493 + $0x61] sm:$0xff]
        %v548 = vld [vmem:[%s493 + $0x69] sm:$0xff]
        %v549 = vld [vmem:[%s493 + $0x71] sm:$0xff]
        %v550 = vld [vmem:[%s493 + $0x79] sm:$0xff]
        %v551 = vld [vmem:[%s493 + $0x81] sm:$0xff]
        %v552 = vld [vmem:[%s493 + $0x89] sm:$0xff]
        %v553 = vld [vmem:[%s493 + $0x91] sm:$0xff]
        %v554 = vld [vmem:[%s493 + $0x99] sm:$0xff]
        %v555 = vld [vmem:[%s493 + $0xa1] sm:$0xff]
        %v556 = vld [vmem:[%s493 + $0xa9] sm:$0xff]
        %v557 = vld [vmem:[%s493 + $0xb1] sm:$0xff]
        %v558 = vld [vmem:[%s493 + $0xb9] sm:$0xff]
        %v559 = vld [vmem:[%s493 + $0xc1] sm:$0xff]
        %v560 = vld [vmem:[%s493 + $0xc9] sm:$0xff]
        %v561 = vld [vmem:[%s493 + $0xd1] sm:$0xff]
        %v562 = vld [vmem:[%s493 + $0xd9] sm:$0xff]
        %v563 = vld [vmem:[%s493 + $0xe1] sm:$0xff]
        %v564 = vld [vmem:[%s493 + $0xe9] sm:$0xff]
        %v565 = vld [vmem:[%s493 + $0xf1] sm:$0xff]
        %v566 = vld [vmem:[%s493 + $0xf9] sm:$0xf]
        %s567 = scalar_lea.vmem %s1, 64
        %v568 = vld [vmem:[%s567] sm:$0xff]
        %v569 = vld [vmem:[%s567 + $0x8] sm:$0xff]
        %v570 = vld [vmem:[%s567 + $0x10] sm:$0xff]
        %v571 = vld [vmem:[%s567 + $0x18] sm:$0xff]
        %v572 = vld [vmem:[%s567 + $0x20] sm:$0xff]
        %v573 = vld [vmem:[%s567 + $0x28] sm:$0xff]
        %v574 = vld [vmem:[%s567 + $0x30] sm:$0xff]
        %v575 = vld [vmem:[%s567 + $0x38] sm:$0xff]
        %vm576 = vcmask 261120
        %v578 = vsel %vm576, %v535, 0
        %v581 = vsel %vm576, %v536, 0
        %v584 = vsel %vm576, %v537, 0
        %v587 = vsel %vm576, %v538, 0
        %v590 = vsel %vm576, %v539, 0
        %v593 = vsel %vm576, %v540, 0
        %v596 = vsel %vm576, %v541, 0
        %v599 = vsel %vm576, %v542, 0
        %v602 = vsel %vm576, %v543, 0
        %v605 = vsel %vm576, %v544, 0
        %v608 = vsel %vm576, %v545, 0
        %v611 = vsel %vm576, %v546, 0
        %v614 = vsel %vm576, %v547, 0
        %v617 = vsel %vm576, %v548, 0
        %v620 = vsel %vm576, %v549, 0
        %v623 = vsel %vm576, %v550, 0
        %v626 = vsel %vm576, %v551, 0
        %v629 = vsel %vm576, %v552, 0
        %v632 = vsel %vm576, %v553, 0
        %v635 = vsel %vm576, %v554, 0
        %v638 = vsel %vm576, %v555, 0
        %v641 = vsel %vm576, %v556, 0
        %v644 = vsel %vm576, %v557, 0
        %v647 = vsel %vm576, %v558, 0
        %v650 = vsel %vm576, %v559, 0
        %v653 = vsel %vm576, %v560, 0
        %v656 = vsel %vm576, %v561, 0
        %v659 = vsel %vm576, %v562, 0
        %v662 = vsel %vm576, %v563, 0
        %v665 = vsel %vm576, %v564, 0
        %v668 = vsel %vm576, %v565, 0
        %v671 = vsel %vm576, %v566, 0
        %673 = vmatprep.subr.mxu0 %v569
        %674 = vmatpush1.msra.mxu0 %v568
        %675 = vmatprep.subr.mxu0 %v571
        %676 = vmatpush1.msra.mxu0 %v570
        %677 = vmatprep.subr.mxu0 %v573
        %678 = vmatpush1.msra.mxu0 %v572
        %679 = vmatprep.subr.mxu0 %v575
        %680 = vmatpush1.msra.mxu0 %v574
        %681 = vmatprep.subr.mxu0 0.0
        %682 = vmatpush1.msra.mxu0 0.0
        %683 = vmatprep.subr.mxu0 0.0
        %684 = vmatpush1.msra.mxu0 0.0
        %685 = vmatprep.subr.mxu0 0.0
        %686 = vmatpush1.msra.mxu0 0.0
        %687 = vmatprep.subr.mxu0 0.0
        %688 = vmatpush1.msra.mxu0 0.0
        %689 = vmatprep.subr.mxu0 0.0
        %690 = vmatpush1.msra.mxu0 0.0
        %691 = vmatprep.subr.mxu0 0.0
        %692 = vmatpush1.msra.mxu0 0.0
        %693 = vmatprep.subr.mxu0 0.0
        %694 = vmatpush1.msra.mxu0 0.0
        %695 = vmatprep.subr.mxu0 0.0
        %696 = vmatpush1.msra.mxu0 0.0
        %697 = vmatprep.subr.mxu0 0.0
        %698 = vmatpush1.msra.mxu0 0.0
        %699 = vmatprep.subr.mxu0 0.0
        %700 = vmatpush1.msra.mxu0 0.0
        %701 = vmatprep.subr.mxu0 0.0
        %702 = vmatpush1.msra.mxu0 0.0
        %703 = vmatprep.subr.mxu0 0.0
        %704 = vmatpush1.msra.mxu0 0.0
        %705 = vmatprep.subr.mxu0 0.0
        %706 = vmatpush1.msra.mxu0 0.0
        %707 = vmatprep.subr.mxu0 0.0
        %708 = vmatpush1.msra.mxu0 0.0
        %709 = vmatprep.subr.mxu0 0.0
        %710 = vmatpush1.msra.mxu0 0.0
        %711 = vmatprep.subr.mxu0 0.0
        %712 = vmatpush1.msra.mxu0 0.0
        %713 = vmatprep.subr.mxu0 0.0
        %714 = vmatpush1.msra.mxu0 0.0
        %715 = vmatprep.subr.mxu0 0.0
        %716 = vmatpush1.msra.mxu0 0.0
        %717 = vmatprep.subr.mxu0 0.0
        %718 = vmatpush1.msra.mxu0 0.0
        %719 = vmatprep.subr.mxu0 0.0
        %720 = vmatpush1.msra.mxu0 0.0
        %721 = vmatprep.subr.mxu0 0.0
        %722 = vmatpush1.msra.mxu0 0.0
        %723 = vmatprep.subr.mxu0 0.0
        %724 = vmatpush1.msra.mxu0 0.0
        %725 = vmatprep.subr.mxu0 0.0
        %726 = vmatpush1.msra.mxu0 0.0
        %727 = vmatprep.subr.mxu0 0.0
        %728 = vmatpush1.msra.mxu0 0.0
        %729 = vmatprep.subr.mxu0 0.0
        %730 = vmatpush1.msra.mxu0 0.0
        %731 = vmatprep.subr.mxu0 0.0
        %732 = vmatpush1.msra.mxu0 0.0
        %733 = vmatprep.subr.mxu0 0.0
        %734 = vmatpush1.msra.mxu0 0.0
        %735 = vmatprep.subr.mxu0 0.0
        %736 = vmatpush1.msra.mxu0 0.0
        %737 = vmatprep.mubr.f32.mxu0 0.0
        %738 = vmatmul.mubr.f32.gmra.mrb[0].mxu0 %v578
        %v739 = vpop.f32.mrb[0].mxu0
        %v740 = vadd.f32 0.0, %v739
        %v741 = vpop.f32.mrb[0].mxu0
        %v742 = vadd.f32 0.0, %v741
        %743 = vmatprep.mubr.f32.mxu0 0.0
        %744 = vmatmul.mubr.f32.gmra.mrb[0].mxu0 %v581
        %v745 = vpop.f32.mrb[0].mxu0
        %v746 = vadd.f32 0.0, %v745
        %v747 = vpop.f32.mrb[0].mxu0
        %v748 = vadd.f32 0.0, %v747
        %749 = vmatprep.mubr.f32.mxu0 0.0
        %750 = vmatmul.mubr.f32.gmra.mrb[0].mxu0 %v584
        %v751 = vpop.f32.mrb[0].mxu0
        %v752 = vadd.f32 0.0, %v751
        %v753 = vpop.f32.mrb[0].mxu0
        %v754 = vadd.f32 0.0, %v753
        %755 = vmatprep.mubr.f32.mxu0 0.0
        %756 = vmatmul.mubr.f32.gmra.mrb[0].mxu0 %v587
        %v757 = vpop.f32.mrb[0].mxu0
        %v758 = vadd.f32 0.0, %v757
        %v759 = vpop.f32.mrb[0].mxu0
        %v760 = vadd.f32 0.0, %v759
        %761 = vmatprep.mubr.f32.mxu0 0.0
        %762 = vmatmul.mubr.f32.gmra.mrb[0].mxu0 %v590
        %v763 = vpop.f32.mrb[0].mxu0
        %v764 = vadd.f32 0.0, %v763
        %v765 = vpop.f32.mrb[0].mxu0
        %v766 = vadd.f32 0.0, %v765
        %767 = vmatprep.mubr.f32.mxu0 0.0
        %768 = vmatmul.mubr.f32.gmra.mrb[0].mxu0 %v593
        %v769 = vpop.f32.mrb[0].mxu0
        %v770 = vadd.f32 0.0, %v769
        %v771 = vpop.f32.mrb[0].mxu0
        %v772 = vadd.f32 0.0, %v771
        %773 = vmatprep.mubr.f32.mxu0 0.0
        %774 = vmatmul.mubr.f32.gmra.mrb[0].mxu0 %v596
        %v775 = vpop.f32.mrb[0].mxu0
        %v776 = vadd.f32 0.0, %v775
        %v777 = vpop.f32.mrb[0].mxu0
        %v778 = vadd.f32 0.0, %v777
        %779 = vmatprep.mubr.f32.mxu0 0.0
        %780 = vmatmul.mubr.f32.gmra.mrb[0].mxu0 %v599
        %v781 = vpop.f32.mrb[0].mxu0
        %v782 = vadd.f32 0.0, %v781
        %v783 = vpop.f32.mrb[0].mxu0
        %v784 = vadd.f32 0.0, %v783
        %785 = vmatprep.mubr.f32.mxu0 0.0
        %786 = vmatmul.mubr.f32.gmra.mrb[0].mxu0 %v602
        %v787 = vpop.f32.mrb[0].mxu0
        %v788 = vadd.f32 0.0, %v787
        %v789 = vpop.f32.mrb[0].mxu0
        %v790 = vadd.f32 0.0, %v789
        %791 = vmatprep.mubr.f32.mxu0 0.0
        %792 = vmatmul.mubr.f32.gmra.mrb[0].mxu0 %v605
        %v793 = vpop.f32.mrb[0].mxu0
        %v794 = vadd.f32 0.0, %v793
        %v795 = vpop.f32.mrb[0].mxu0
        %v796 = vadd.f32 0.0, %v795
        %797 = vmatprep.mubr.f32.mxu0 0.0
        %798 = vmatmul.mubr.f32.gmra.mrb[0].mxu0 %v608
        %v799 = vpop.f32.mrb[0].mxu0
        %v800 = vadd.f32 0.0, %v799
        %v801 = vpop.f32.mrb[0].mxu0
        %v802 = vadd.f32 0.0, %v801
        %803 = vmatprep.mubr.f32.mxu0 0.0
        %804 = vmatmul.mubr.f32.gmra.mrb[0].mxu0 %v611
        %v805 = vpop.f32.mrb[0].mxu0
        %v806 = vadd.f32 0.0, %v805
        %v807 = vpop.f32.mrb[0].mxu0
        %v808 = vadd.f32 0.0, %v807
        %809 = vmatprep.mubr.f32.mxu0 0.0
        %810 = vmatmul.mubr.f32.gmra.mrb[0].mxu0 %v614
        %v811 = vpop.f32.mrb[0].mxu0
        %v812 = vadd.f32 0.0, %v811
        %v813 = vpop.f32.mrb[0].mxu0
        %v814 = vadd.f32 0.0, %v813
        %815 = vmatprep.mubr.f32.mxu0 0.0
        %816 = vmatmul.mubr.f32.gmra.mrb[0].mxu0 %v617
        %v817 = vpop.f32.mrb[0].mxu0
        %v818 = vadd.f32 0.0, %v817
        %v819 = vpop.f32.mrb[0].mxu0
        %v820 = vadd.f32 0.0, %v819
        %821 = vmatprep.mubr.f32.mxu0 0.0
        %822 = vmatmul.mubr.f32.gmra.mrb[0].mxu0 %v620
        %v823 = vpop.f32.mrb[0].mxu0
        %v824 = vadd.f32 0.0, %v823
        %v825 = vpop.f32.mrb[0].mxu0
        %v826 = vadd.f32 0.0, %v825
        %827 = vmatprep.mubr.f32.mxu0 0.0
        %828 = vmatmul.mubr.f32.gmra.mrb[0].mxu0 %v623
        %v829 = vpop.f32.mrb[0].mxu0
        %v830 = vadd.f32 0.0, %v829
        %v831 = vpop.f32.mrb[0].mxu0
        %v832 = vadd.f32 0.0, %v831
        %833 = vmatprep.mubr.f32.mxu0 0.0
        %834 = vmatmul.mubr.f32.gmra.mrb[0].mxu0 %v626
        %v835 = vpop.f32.mrb[0].mxu0
        %v836 = vadd.f32 0.0, %v835
        %v837 = vpop.f32.mrb[0].mxu0
        %v838 = vadd.f32 0.0, %v837
        %839 = vmatprep.mubr.f32.mxu0 0.0
        %840 = vmatmul.mubr.f32.gmra.mrb[0].mxu0 %v629
        %v841 = vpop.f32.mrb[0].mxu0
        %v842 = vadd.f32 0.0, %v841
        %v843 = vpop.f32.mrb[0].mxu0
        %v844 = vadd.f32 0.0, %v843
        %845 = vmatprep.mubr.f32.mxu0 0.0
        %846 = vmatmul.mubr.f32.gmra.mrb[0].mxu0 %v632
        %v847 = vpop.f32.mrb[0].mxu0
        %v848 = vadd.f32 0.0, %v847
        %v849 = vpop.f32.mrb[0].mxu0
        %v850 = vadd.f32 0.0, %v849
        %851 = vmatprep.mubr.f32.mxu0 0.0
        %852 = vmatmul.mubr.f32.gmra.mrb[0].mxu0 %v635
        %v853 = vpop.f32.mrb[0].mxu0
        %v854 = vadd.f32 0.0, %v853
        %v855 = vpop.f32.mrb[0].mxu0
        %v856 = vadd.f32 0.0, %v855
        %857 = vmatprep.mubr.f32.mxu0 0.0
        %858 = vmatmul.mubr.f32.gmra.mrb[0].mxu0 %v638
        %v859 = vpop.f32.mrb[0].mxu0
        %v860 = vadd.f32 0.0, %v859
        %v861 = vpop.f32.mrb[0].mxu0
        %v862 = vadd.f32 0.0, %v861
        %863 = vmatprep.mubr.f32.mxu0 0.0
        %864 = vmatmul.mubr.f32.gmra.mrb[0].mxu0 %v641
        %v865 = vpop.f32.mrb[0].mxu0
        %v866 = vadd.f32 0.0, %v865
        %v867 = vpop.f32.mrb[0].mxu0
        %v868 = vadd.f32 0.0, %v867
        %869 = vmatprep.mubr.f32.mxu0 0.0
        %870 = vmatmul.mubr.f32.gmra.mrb[0].mxu0 %v644
        %v871 = vpop.f32.mrb[0].mxu0
        %v872 = vadd.f32 0.0, %v871
        %v873 = vpop.f32.mrb[0].mxu0
        %v874 = vadd.f32 0.0, %v873
        %875 = vmatprep.mubr.f32.mxu0 0.0
        %876 = vmatmul.mubr.f32.gmra.mrb[0].mxu0 %v647
        %v877 = vpop.f32.mrb[0].mxu0
        %v878 = vadd.f32 0.0, %v877
        %v879 = vpop.f32.mrb[0].mxu0
        %v880 = vadd.f32 0.0, %v879
        %881 = vmatprep.mubr.f32.mxu0 0.0
        %882 = vmatmul.mubr.f32.gmra.mrb[0].mxu0 %v650
        %v883 = vpop.f32.mrb[0].mxu0
        %v884 = vadd.f32 0.0, %v883
        %v885 = vpop.f32.mrb[0].mxu0
        %v886 = vadd.f32 0.0, %v885
        %887 = vmatprep.mubr.f32.mxu0 0.0
        %888 = vmatmul.mubr.f32.gmra.mrb[0].mxu0 %v653
        %v889 = vpop.f32.mrb[0].mxu0
        %v890 = vadd.f32 0.0, %v889
        %v891 = vpop.f32.mrb[0].mxu0
        %v892 = vadd.f32 0.0, %v891
        %893 = vmatprep.mubr.f32.mxu0 0.0
        %894 = vmatmul.mubr.f32.gmra.mrb[0].mxu0 %v656
        %v895 = vpop.f32.mrb[0].mxu0
        %v896 = vadd.f32 0.0, %v895
        %v897 = vpop.f32.mrb[0].mxu0
        %v898 = vadd.f32 0.0, %v897
        %899 = vmatprep.mubr.f32.mxu0 0.0
        %900 = vmatmul.mubr.f32.gmra.mrb[0].mxu0 %v659
        %v901 = vpop.f32.mrb[0].mxu0
        %v902 = vadd.f32 0.0, %v901
        %v903 = vpop.f32.mrb[0].mxu0
        %v904 = vadd.f32 0.0, %v903
        %905 = vmatprep.mubr.f32.mxu0 0.0
        %906 = vmatmul.mubr.f32.gmra.mrb[0].mxu0 %v662
        %v907 = vpop.f32.mrb[0].mxu0
        %v908 = vadd.f32 0.0, %v907
        %v909 = vpop.f32.mrb[0].mxu0
        %v910 = vadd.f32 0.0, %v909
        %911 = vmatprep.mubr.f32.mxu0 0.0
        %912 = vmatmul.mubr.f32.gmra.mrb[0].mxu0 %v665
        %v913 = vpop.f32.mrb[0].mxu0
        %v914 = vadd.f32 0.0, %v913
        %v915 = vpop.f32.mrb[0].mxu0
        %v916 = vadd.f32 0.0, %v915
        %917 = vmatprep.mubr.f32.mxu0 0.0
        %918 = vmatmul.mubr.f32.gmra.mrb[0].mxu0 %v668
        %v919 = vpop.f32.mrb[0].mxu0
        %v920 = vadd.f32 0.0, %v919
        %v921 = vpop.f32.mrb[0].mxu0
        %v922 = vadd.f32 0.0, %v921
        %923 = vmatprep.mubr.f32.mxu0 0.0
        %924 = vmatmul.mubr.f32.gmra.mrb[0].mxu0 %v671
        %v925 = vpop.f32.mrb[0].mxu0
        %v926 = vadd.f32 0.0, %v925
        %v927 = vpop.f32.mrb[0].mxu0
        %v928 = vadd.f32 0.0, %v927
        %929 = vdwg.mxu0
        %v931 = vsel %vm576, %v495, 0
        %v934 = vsel %vm576, %v496, 0
        %v937 = vsel %vm576, %v497, 0
        %v940 = vsel %vm576, %v498, 0
        %v943 = vsel %vm576, %v499, 0
        %v946 = vsel %vm576, %v500, 0
        %v949 = vsel %vm576, %v501, 0
        %v952 = vsel %vm576, %v502, 0
        %v955 = vsel %vm576, %v503, 0
        %v958 = vsel %vm576, %v504, 0
        %v961 = vsel %vm576, %v505, 0
        %v964 = vsel %vm576, %v506, 0
        %v967 = vsel %vm576, %v507, 0
        %v970 = vsel %vm576, %v508, 0
        %v973 = vsel %vm576, %v509, 0
        %v976 = vsel %vm576, %v510, 0
        %v979 = vsel %vm576, %v511, 0
        %v982 = vsel %vm576, %v512, 0
        %v985 = vsel %vm576, %v513, 0
        %v988 = vsel %vm576, %v514, 0
        %v991 = vsel %vm576, %v515, 0
        %v994 = vsel %vm576, %v516, 0
        %v997 = vsel %vm576, %v517, 0
        %v1000 = vsel %vm576, %v518, 0
        %v1003 = vsel %vm576, %v519, 0
        %v1006 = vsel %vm576, %v520, 0
        %v1009 = vsel %vm576, %v521, 0
        %v1012 = vsel %vm576, %v522, 0
        %v1015 = vsel %vm576, %v523, 0
        %v1018 = vsel %vm576, %v524, 0
        %v1021 = vsel %vm576, %v525, 0
        %v1024 = vsel %vm576, %v526, 0
        %1026 = vmatprep.subr.mxu0 %v528
        %1027 = vmatpush1.msra.mxu0 %v527
        %1028 = vmatprep.subr.mxu0 %v530
        %1029 = vmatpush1.msra.mxu0 %v529
        %1030 = vmatprep.subr.mxu0 %v532
        %1031 = vmatpush1.msra.mxu0 %v531
        %1032 = vmatprep.subr.mxu0 %v534
        %1033 = vmatpush1.msra.mxu0 %v533
        %1034 = vmatprep.subr.mxu0 0.0
        %1035 = vmatpush1.msra.mxu0 0.0
        %1036 = vmatprep.subr.mxu0 0.0
        %1037 = vmatpush1.msra.mxu0 0.0
        %1038 = vmatprep.subr.mxu0 0.0
        %1039 = vmatpush1.msra.mxu0 0.0
        %1040 = vmatprep.subr.mxu0 0.0
        %1041 = vmatpush1.msra.mxu0 0.0
        %1042 = vmatprep.subr.mxu0 0.0
        %1043 = vmatpush1.msra.mxu0 0.0
        %1044 = vmatprep.subr.mxu0 0.0
        %1045 = vmatpush1.msra.mxu0 0.0
        %1046 = vmatprep.subr.mxu0 0.0
        %1047 = vmatpush1.msra.mxu0 0.0
        %1048 = vmatprep.subr.mxu0 0.0
        %1049 = vmatpush1.msra.mxu0 0.0
        %1050 = vmatprep.subr.mxu0 0.0
        %1051 = vmatpush1.msra.mxu0 0.0
        %1052 = vmatprep.subr.mxu0 0.0
        %1053 = vmatpush1.msra.mxu0 0.0
        %1054 = vmatprep.subr.mxu0 0.0
        %1055 = vmatpush1.msra.mxu0 0.0
        %1056 = vmatprep.subr.mxu0 0.0
        %1057 = vmatpush1.msra.mxu0 0.0
        %1058 = vmatprep.subr.mxu0 0.0
        %1059 = vmatpush1.msra.mxu0 0.0
        %1060 = vmatprep.subr.mxu0 0.0
        %1061 = vmatpush1.msra.mxu0 0.0
        %1062 = vmatprep.subr.mxu0 0.0
        %1063 = vmatpush1.msra.mxu0 0.0
        %1064 = vmatprep.subr.mxu0 0.0
        %1065 = vmatpush1.msra.mxu0 0.0
        %1066 = vmatprep.subr.mxu0 0.0
        %1067 = vmatpush1.msra.mxu0 0.0
        %1068 = vmatprep.subr.mxu0 0.0
        %1069 = vmatpush1.msra.mxu0 0.0
        %1070 = vmatprep.subr.mxu0 0.0
        %1071 = vmatpush1.msra.mxu0 0.0
        %1072 = vmatprep.subr.mxu0 0.0
        %1073 = vmatpush1.msra.mxu0 0.0
        %1074 = vmatprep.subr.mxu0 0.0
        %1075 = vmatpush1.msra.mxu0 0.0
        %1076 = vmatprep.subr.mxu0 0.0
        %1077 = vmatpush1.msra.mxu0 0.0
        %1078 = vmatprep.subr.mxu0 0.0
        %1079 = vmatpush1.msra.mxu0 0.0
        %1080 = vmatprep.subr.mxu0 0.0
        %1081 = vmatpush1.msra.mxu0 0.0
        %1082 = vmatprep.subr.mxu0 0.0
        %1083 = vmatpush1.msra.mxu0 0.0
        %1084 = vmatprep.subr.mxu0 0.0
        %1085 = vmatpush1.msra.mxu0 0.0
        %1086 = vmatprep.subr.mxu0 0.0
        %1087 = vmatpush1.msra.mxu0 0.0
        %1088 = vmatprep.subr.mxu0 0.0
        %1089 = vmatpush1.msra.mxu0 0.0
        %1090 = vmatprep.mubr.f32.mxu0 0.0
        %1091 = vmatmul.mubr.f32.gmra.mrb[0].mxu0 %v931
        %v1092 = vpop.f32.mrb[0].mxu0
        %v1093 = vadd.f32 %v740, %v1092
        %v1094 = vpop.f32.mrb[0].mxu0
        %v1095 = vadd.f32 %v742, %v1094
        %1096 = vmatprep.mubr.f32.mxu0 0.0
        %1097 = vmatmul.mubr.f32.gmra.mrb[0].mxu0 %v934
        %v1098 = vpop.f32.mrb[0].mxu0
        %v1099 = vadd.f32 %v746, %v1098
        %v1100 = vpop.f32.mrb[0].mxu0
        %v1101 = vadd.f32 %v748, %v1100
        %1102 = vmatprep.mubr.f32.mxu0 0.0
        %1103 = vmatmul.mubr.f32.gmra.mrb[0].mxu0 %v937
        %v1104 = vpop.f32.mrb[0].mxu0
        %v1105 = vadd.f32 %v752, %v1104
        %v1106 = vpop.f32.mrb[0].mxu0
        %v1107 = vadd.f32 %v754, %v1106
        %1108 = vmatprep.mubr.f32.mxu0 0.0
        %1109 = vmatmul.mubr.f32.gmra.mrb[0].mxu0 %v940
        %v1110 = vpop.f32.mrb[0].mxu0
        %v1111 = vadd.f32 %v758, %v1110
        %v1112 = vpop.f32.mrb[0].mxu0
        %v1113 = vadd.f32 %v760, %v1112
        %1114 = vmatprep.mubr.f32.mxu0 0.0
        %1115 = vmatmul.mubr.f32.gmra.mrb[0].mxu0 %v943
        %v1116 = vpop.f32.mrb[0].mxu0
        %v1117 = vadd.f32 %v764, %v1116
        %v1118 = vpop.f32.mrb[0].mxu0
        %v1119 = vadd.f32 %v766, %v1118
        %1120 = vmatprep.mubr.f32.mxu0 0.0
        %1121 = vmatmul.mubr.f32.gmra.mrb[0].mxu0 %v946
        %v1122 = vpop.f32.mrb[0].mxu0
        %v1123 = vadd.f32 %v770, %v1122
        %v1124 = vpop.f32.mrb[0].mxu0
        %v1125 = vadd.f32 %v772, %v1124
        %1126 = vmatprep.mubr.f32.mxu0 0.0
        %1127 = vmatmul.mubr.f32.gmra.mrb[0].mxu0 %v949
        %v1128 = vpop.f32.mrb[0].mxu0
        %v1129 = vadd.f32 %v776, %v1128
        %v1130 = vpop.f32.mrb[0].mxu0
        %v1131 = vadd.f32 %v778, %v1130
        %1132 = vmatprep.mubr.f32.mxu0 0.0
        %1133 = vmatmul.mubr.f32.gmra.mrb[0].mxu0 %v952
        %v1134 = vpop.f32.mrb[0].mxu0
        %v1135 = vadd.f32 %v782, %v1134
        %v1136 = vpop.f32.mrb[0].mxu0
        %v1137 = vadd.f32 %v784, %v1136
        %1138 = vmatprep.mubr.f32.mxu0 0.0
        %1139 = vmatmul.mubr.f32.gmra.mrb[0].mxu0 %v955
        %v1140 = vpop.f32.mrb[0].mxu0
        %v1141 = vadd.f32 %v788, %v1140
        %v1142 = vpop.f32.mrb[0].mxu0
        %v1143 = vadd.f32 %v790, %v1142
        %1144 = vmatprep.mubr.f32.mxu0 0.0
        %1145 = vmatmul.mubr.f32.gmra.mrb[0].mxu0 %v958
        %v1146 = vpop.f32.mrb[0].mxu0
        %v1147 = vadd.f32 %v794, %v1146
        %v1148 = vpop.f32.mrb[0].mxu0
        %v1149 = vadd.f32 %v796, %v1148
        %1150 = vmatprep.mubr.f32.mxu0 0.0
        %1151 = vmatmul.mubr.f32.gmra.mrb[0].mxu0 %v961
        %v1152 = vpop.f32.mrb[0].mxu0
        %v1153 = vadd.f32 %v800, %v1152
        %v1154 = vpop.f32.mrb[0].mxu0
        %v1155 = vadd.f32 %v802, %v1154
        %1156 = vmatprep.mubr.f32.mxu0 0.0
        %1157 = vmatmul.mubr.f32.gmra.mrb[0].mxu0 %v964
        %v1158 = vpop.f32.mrb[0].mxu0
        %v1159 = vadd.f32 %v806, %v1158
        %v1160 = vpop.f32.mrb[0].mxu0
        %v1161 = vadd.f32 %v808, %v1160
        %1162 = vmatprep.mubr.f32.mxu0 0.0
        %1163 = vmatmul.mubr.f32.gmra.mrb[0].mxu0 %v967
        %v1164 = vpop.f32.mrb[0].mxu0
        %v1165 = vadd.f32 %v812, %v1164
        %v1166 = vpop.f32.mrb[0].mxu0
        %v1167 = vadd.f32 %v814, %v1166
        %1168 = vmatprep.mubr.f32.mxu0 0.0
        %1169 = vmatmul.mubr.f32.gmra.mrb[0].mxu0 %v970
        %v1170 = vpop.f32.mrb[0].mxu0
        %v1171 = vadd.f32 %v818, %v1170
        %v1172 = vpop.f32.mrb[0].mxu0
        %v1173 = vadd.f32 %v820, %v1172
        %1174 = vmatprep.mubr.f32.mxu0 0.0
        %1175 = vmatmul.mubr.f32.gmra.mrb[0].mxu0 %v973
        %v1176 = vpop.f32.mrb[0].mxu0
        %v1177 = vadd.f32 %v824, %v1176
        %v1178 = vpop.f32.mrb[0].mxu0
        %v1179 = vadd.f32 %v826, %v1178
        %1180 = vmatprep.mubr.f32.mxu0 0.0
        %1181 = vmatmul.mubr.f32.gmra.mrb[0].mxu0 %v976
        %v1182 = vpop.f32.mrb[0].mxu0
        %v1183 = vadd.f32 %v830, %v1182
        %v1184 = vpop.f32.mrb[0].mxu0
        %v1185 = vadd.f32 %v832, %v1184
        %1186 = vmatprep.mubr.f32.mxu0 0.0
        %1187 = vmatmul.mubr.f32.gmra.mrb[0].mxu0 %v979
        %v1188 = vpop.f32.mrb[0].mxu0
        %v1189 = vadd.f32 %v836, %v1188
        %v1190 = vpop.f32.mrb[0].mxu0
        %v1191 = vadd.f32 %v838, %v1190
        %1192 = vmatprep.mubr.f32.mxu0 0.0
        %1193 = vmatmul.mubr.f32.gmra.mrb[0].mxu0 %v982
        %v1194 = vpop.f32.mrb[0].mxu0
        %v1195 = vadd.f32 %v842, %v1194
        %v1196 = vpop.f32.mrb[0].mxu0
        %v1197 = vadd.f32 %v844, %v1196
        %1198 = vmatprep.mubr.f32.mxu0 0.0
        %1199 = vmatmul.mubr.f32.gmra.mrb[0].mxu0 %v985
        %v1200 = vpop.f32.mrb[0].mxu0
        %v1201 = vadd.f32 %v848, %v1200
        %v1202 = vpop.f32.mrb[0].mxu0
        %v1203 = vadd.f32 %v850, %v1202
        %1204 = vmatprep.mubr.f32.mxu0 0.0
        %1205 = vmatmul.mubr.f32.gmra.mrb[0].mxu0 %v988
        %v1206 = vpop.f32.mrb[0].mxu0
        %v1207 = vadd.f32 %v854, %v1206
        %v1208 = vpop.f32.mrb[0].mxu0
        %v1209 = vadd.f32 %v856, %v1208
        %1210 = vmatprep.mubr.f32.mxu0 0.0
        %1211 = vmatmul.mubr.f32.gmra.mrb[0].mxu0 %v991
        %v1212 = vpop.f32.mrb[0].mxu0
        %v1213 = vadd.f32 %v860, %v1212
        %v1214 = vpop.f32.mrb[0].mxu0
        %v1215 = vadd.f32 %v862, %v1214
        %1216 = vmatprep.mubr.f32.mxu0 0.0
        %1217 = vmatmul.mubr.f32.gmra.mrb[0].mxu0 %v994
        %v1218 = vpop.f32.mrb[0].mxu0
        %v1219 = vadd.f32 %v866, %v1218
        %v1220 = vpop.f32.mrb[0].mxu0
        %v1221 = vadd.f32 %v868, %v1220
        %1222 = vmatprep.mubr.f32.mxu0 0.0
        %1223 = vmatmul.mubr.f32.gmra.mrb[0].mxu0 %v997
        %v1224 = vpop.f32.mrb[0].mxu0
        %v1225 = vadd.f32 %v872, %v1224
        %v1226 = vpop.f32.mrb[0].mxu0
        %v1227 = vadd.f32 %v874, %v1226
        %1228 = vmatprep.mubr.f32.mxu0 0.0
        %1229 = vmatmul.mubr.f32.gmra.mrb[0].mxu0 %v1000
        %v1230 = vpop.f32.mrb[0].mxu0
        %v1231 = vadd.f32 %v878, %v1230
        %v1232 = vpop.f32.mrb[0].mxu0
        %v1233 = vadd.f32 %v880, %v1232
        %1234 = vmatprep.mubr.f32.mxu0 0.0
        %1235 = vmatmul.mubr.f32.gmra.mrb[0].mxu0 %v1003
        %v1236 = vpop.f32.mrb[0].mxu0
        %v1237 = vadd.f32 %v884, %v1236
        %v1238 = vpop.f32.mrb[0].mxu0
        %v1239 = vadd.f32 %v886, %v1238
        %1240 = vmatprep.mubr.f32.mxu0 0.0
        %1241 = vmatmul.mubr.f32.gmra.mrb[0].mxu0 %v1006
        %v1242 = vpop.f32.mrb[0].mxu0
        %v1243 = vadd.f32 %v890, %v1242
        %v1244 = vpop.f32.mrb[0].mxu0
        %v1245 = vadd.f32 %v892, %v1244
        %1246 = vmatprep.mubr.f32.mxu0 0.0
        %1247 = vmatmul.mubr.f32.gmra.mrb[0].mxu0 %v1009
        %v1248 = vpop.f32.mrb[0].mxu0
        %v1249 = vadd.f32 %v896, %v1248
        %v1250 = vpop.f32.mrb[0].mxu0
        %v1251 = vadd.f32 %v898, %v1250
        %1252 = vmatprep.mubr.f32.mxu0 0.0
        %1253 = vmatmul.mubr.f32.gmra.mrb[0].mxu0 %v1012
        %v1254 = vpop.f32.mrb[0].mxu0
        %v1255 = vadd.f32 %v902, %v1254
        %v1256 = vpop.f32.mrb[0].mxu0
        %v1257 = vadd.f32 %v904, %v1256
        %1258 = vmatprep.mubr.f32.mxu0 0.0
        %1259 = vmatmul.mubr.f32.gmra.mrb[0].mxu0 %v1015
        %v1260 = vpop.f32.mrb[0].mxu0
        %v1261 = vadd.f32 %v908, %v1260
        %v1262 = vpop.f32.mrb[0].mxu0
        %v1263 = vadd.f32 %v910, %v1262
        %1264 = vmatprep.mubr.f32.mxu0 0.0
        %1265 = vmatmul.mubr.f32.gmra.mrb[0].mxu0 %v1018
        %v1266 = vpop.f32.mrb[0].mxu0
        %v1267 = vadd.f32 %v914, %v1266
        %v1268 = vpop.f32.mrb[0].mxu0
        %v1269 = vadd.f32 %v916, %v1268
        %1270 = vmatprep.mubr.f32.mxu0 0.0
        %1271 = vmatmul.mubr.f32.gmra.mrb[0].mxu0 %v1021
        %v1272 = vpop.f32.mrb[0].mxu0
        %v1273 = vadd.f32 %v920, %v1272
        %v1274 = vpop.f32.mrb[0].mxu0
        %v1275 = vadd.f32 %v922, %v1274
        %1276 = vmatprep.mubr.f32.mxu0 0.0
        %1277 = vmatmul.mubr.f32.gmra.mrb[0].mxu0 %v1024
        %v1278 = vpop.f32.mrb[0].mxu0
        %v1279 = vadd.f32 %v926, %v1278
        %v1280 = vpop.f32.mrb[0].mxu0
        %v1281 = vadd.f32 %v928, %v1280
        %1282 = vdwg.mxu0
        %v1283 = vld [vmem:[%s493 + $0x2] sm:$0xff]
        %v1284 = vld [vmem:[%s493 + $0xa] sm:$0xff]
        %v1285 = vld [vmem:[%s493 + $0x12] sm:$0xff]
        %v1286 = vld [vmem:[%s493 + $0x1a] sm:$0xff]
        %v1287 = vld [vmem:[%s493 + $0x22] sm:$0xff]
        %v1288 = vld [vmem:[%s493 + $0x2a] sm:$0xff]
        %v1289 = vld [vmem:[%s493 + $0x32] sm:$0xff]
        %v1290 = vld [vmem:[%s493 + $0x3a] sm:$0xff]
        %v1291 = vld [vmem:[%s493 + $0x42] sm:$0xff]
        %v1292 = vld [vmem:[%s493 + $0x4a] sm:$0xff]
        %v1293 = vld [vmem:[%s493 + $0x52] sm:$0xff]
        %v1294 = vld [vmem:[%s493 + $0x5a] sm:$0xff]
        %v1295 = vld [vmem:[%s493 + $0x62] sm:$0xff]
        %v1296 = vld [vmem:[%s493 + $0x6a] sm:$0xff]
        %v1297 = vld [vmem:[%s493 + $0x72] sm:$0xff]
        %v1298 = vld [vmem:[%s493 + $0x7a] sm:$0xff]
        %v1299 = vld [vmem:[%s493 + $0x82] sm:$0xff]
        %v1300 = vld [vmem:[%s493 + $0x8a] sm:$0xff]
        %v1301 = vld [vmem:[%s493 + $0x92] sm:$0xff]
        %v1302 = vld [vmem:[%s493 + $0x9a] sm:$0xff]
        %v1303 = vld [vmem:[%s493 + $0xa2] sm:$0xff]
        %v1304 = vld [vmem:[%s493 + $0xaa] sm:$0xff]
        %v1305 = vld [vmem:[%s493 + $0xb2] sm:$0xff]
        %v1306 = vld [vmem:[%s493 + $0xba] sm:$0xff]
        %v1307 = vld [vmem:[%s493 + $0xc2] sm:$0xff]
        %v1308 = vld [vmem:[%s493 + $0xca] sm:$0xff]
        %v1309 = vld [vmem:[%s493 + $0xd2] sm:$0xff]
        %v1310 = vld [vmem:[%s493 + $0xda] sm:$0xff]
        %v1311 = vld [vmem:[%s493 + $0xe2] sm:$0xff]
        %v1312 = vld [vmem:[%s493 + $0xea] sm:$0xff]
        %v1313 = vld [vmem:[%s493 + $0xf2] sm:$0xff]
        %v1314 = vld [vmem:[%s493 + $0xfa] sm:$0xf]
        %s1315 = scalar_lea.vmem %s1, 128
        %v1316 = vld [vmem:[%s1315] sm:$0xff]
        %v1317 = vld [vmem:[%s1315 + $0x8] sm:$0xff]
        %v1318 = vld [vmem:[%s1315 + $0x10] sm:$0xff]
        %v1319 = vld [vmem:[%s1315 + $0x18] sm:$0xff]
        %v1320 = vld [vmem:[%s1315 + $0x20] sm:$0xff]
        %v1321 = vld [vmem:[%s1315 + $0x28] sm:$0xff]
        %v1322 = vld [vmem:[%s1315 + $0x30] sm:$0xff]
        %v1323 = vld [vmem:[%s1315 + $0x38] sm:$0xff]
        %v1325 = vsel %vm576, %v1283, 0
        %v1328 = vsel %vm576, %v1284, 0
        %v1331 = vsel %vm576, %v1285, 0
        %v1334 = vsel %vm576, %v1286, 0
        %v1337 = vsel %vm576, %v1287, 0
        %v1340 = vsel %vm576, %v1288, 0
        %v1343 = vsel %vm576, %v1289, 0
        %v1346 = vsel %vm576, %v1290, 0
        %v1349 = vsel %vm576, %v1291, 0
        %v1352 = vsel %vm576, %v1292, 0
        %v1355 = vsel %vm576, %v1293, 0
        %v1358 = vsel %vm576, %v1294, 0
        %v1361 = vsel %vm576, %v1295, 0
        %v1364 = vsel %vm576, %v1296, 0
        %v1367 = vsel %vm576, %v1297, 0
        %v1370 = vsel %vm576, %v1298, 0
        %v1373 = vsel %vm576, %v1299, 0
        %v1376 = vsel %vm576, %v1300, 0
        %v1379 = vsel %vm576, %v1301, 0
        %v1382 = vsel %vm576, %v1302, 0
        %v1385 = vsel %vm576, %v1303, 0
        %v1388 = vsel %vm576, %v1304, 0
        %v1391 = vsel %vm576, %v1305, 0
        %v1394 = vsel %vm576, %v1306, 0
        %v1397 = vsel %vm576, %v1307, 0
        %v1400 = vsel %vm576, %v1308, 0
        %v1403 = vsel %vm576, %v1309, 0
        %v1406 = vsel %vm576, %v1310, 0
        %v1409 = vsel %vm576, %v1311, 0
        %v1412 = vsel %vm576, %v1312, 0
        %v1415 = vsel %vm576, %v1313, 0
        %v1418 = vsel %vm576, %v1314, 0
        %1420 = vmatprep.subr.mxu0 %v1317
        %1421 = vmatpush1.msra.mxu0 %v1316
        %1422 = vmatprep.subr.mxu0 %v1319
        %1423 = vmatpush1.msra.mxu0 %v1318
        %1424 = vmatprep.subr.mxu0 %v1321
        %1425 = vmatpush1.msra.mxu0 %v1320
        %1426 = vmatprep.subr.mxu0 %v1323
        %1427 = vmatpush1.msra.mxu0 %v1322
        %1428 = vmatprep.subr.mxu0 0.0
        %1429 = vmatpush1.msra.mxu0 0.0
        %1430 = vmatprep.subr.mxu0 0.0
        %1431 = vmatpush1.msra.mxu0 0.0
        %1432 = vmatprep.subr.mxu0 0.0
        %1433 = vmatpush1.msra.mxu0 0.0
        %1434 = vmatprep.subr.mxu0 0.0
        %1435 = vmatpush1.msra.mxu0 0.0
        %1436 = vmatprep.subr.mxu0 0.0
        %1437 = vmatpush1.msra.mxu0 0.0
        %1438 = vmatprep.subr.mxu0 0.0
        %1439 = vmatpush1.msra.mxu0 0.0
        %1440 = vmatprep.subr.mxu0 0.0
        %1441 = vmatpush1.msra.mxu0 0.0
        %1442 = vmatprep.subr.mxu0 0.0
        %1443 = vmatpush1.msra.mxu0 0.0
        %1444 = vmatprep.subr.mxu0 0.0
        %1445 = vmatpush1.msra.mxu0 0.0
        %1446 = vmatprep.subr.mxu0 0.0
        %1447 = vmatpush1.msra.mxu0 0.0
        %1448 = vmatprep.subr.mxu0 0.0
        %1449 = vmatpush1.msra.mxu0 0.0
        %1450 = vmatprep.subr.mxu0 0.0
        %1451 = vmatpush1.msra.mxu0 0.0
        %1452 = vmatprep.subr.mxu0 0.0
        %1453 = vmatpush1.msra.mxu0 0.0
        %1454 = vmatprep.subr.mxu0 0.0
        %1455 = vmatpush1.msra.mxu0 0.0
        %1456 = vmatprep.subr.mxu0 0.0
        %1457 = vmatpush1.msra.mxu0 0.0
        %1458 = vmatprep.subr.mxu0 0.0
        %1459 = vmatpush1.msra.mxu0 0.0
        %1460 = vmatprep.subr.mxu0 0.0
        %1461 = vmatpush1.msra.mxu0 0.0
        %1462 = vmatprep.subr.mxu0 0.0
        %1463 = vmatpush1.msra.mxu0 0.0
        %1464 = vmatprep.subr.mxu0 0.0
        %1465 = vmatpush1.msra.mxu0 0.0
        %1466 = vmatprep.subr.mxu0 0.0
        %1467 = vmatpush1.msra.mxu0 0.0
        %1468 = vmatprep.subr.mxu0 0.0
        %1469 = vmatpush1.msra.mxu0 0.0
        %1470 = vmatprep.subr.mxu0 0.0
        %1471 = vmatpush1.msra.mxu0 0.0
        %1472 = vmatprep.subr.mxu0 0.0
        %1473 = vmatpush1.msra.mxu0 0.0
        %1474 = vmatprep.subr.mxu0 0.0
        %1475 = vmatpush1.msra.mxu0 0.0
        %1476 = vmatprep.subr.mxu0 0.0
        %1477 = vmatpush1.msra.mxu0 0.0
        %1478 = vmatprep.subr.mxu0 0.0
        %1479 = vmatpush1.msra.mxu0 0.0
        %1480 = vmatprep.subr.mxu0 0.0
        %1481 = vmatpush1.msra.mxu0 0.0
        %1482 = vmatprep.subr.mxu0 0.0
        %1483 = vmatpush1.msra.mxu0 0.0
        %1484 = vmatprep.mubr.f32.mxu0 0.0
        %1485 = vmatmul.mubr.f32.gmra.mrb[0].mxu0 %v1325
        %v1486 = vpop.f32.mrb[0].mxu0
        %v1487 = vadd.f32 0.0, %v1486
        %v1488 = vpop.f32.mrb[0].mxu0
        %v1489 = vadd.f32 0.0, %v1488
        %1490 = vmatprep.mubr.f32.mxu0 0.0
        %1491 = vmatmul.mubr.f32.gmra.mrb[0].mxu0 %v1328
        %v1492 = vpop.f32.mrb[0].mxu0
        %v1493 = vadd.f32 0.0, %v1492
        %v1494 = vpop.f32.mrb[0].mxu0
        %v1495 = vadd.f32 0.0, %v1494
        %1496 = vmatprep.mubr.f32.mxu0 0.0
        %1497 = vmatmul.mubr.f32.gmra.mrb[0].mxu0 %v1331
        %v1498 = vpop.f32.mrb[0].mxu0
        %v1499 = vadd.f32 0.0, %v1498
        %v1500 = vpop.f32.mrb[0].mxu0
        %v1501 = vadd.f32 0.0, %v1500
        %1502 = vmatprep.mubr.f32.mxu0 0.0
        %1503 = vmatmul.mubr.f32.gmra.mrb[0].mxu0 %v1334
        %v1504 = vpop.f32.mrb[0].mxu0
        %v1505 = vadd.f32 0.0, %v1504
        %v1506 = vpop.f32.mrb[0].mxu0
        %v1507 = vadd.f32 0.0, %v1506
        %1508 = vmatprep.mubr.f32.mxu0 0.0
        %1509 = vmatmul.mubr.f32.gmra.mrb[0].mxu0 %v1337
        %v1510 = vpop.f32.mrb[0].mxu0
        %v1511 = vadd.f32 0.0, %v1510
        %v1512 = vpop.f32.mrb[0].mxu0
        %v1513 = vadd.f32 0.0, %v1512
        %1514 = vmatprep.mubr.f32.mxu0 0.0
        %1515 = vmatmul.mubr.f32.gmra.mrb[0].mxu0 %v1340
        %v1516 = vpop.f32.mrb[0].mxu0
        %v1517 = vadd.f32 0.0, %v1516
        %v1518 = vpop.f32.mrb[0].mxu0
        %v1519 = vadd.f32 0.0, %v1518
        %1520 = vmatprep.mubr.f32.mxu0 0.0
        %1521 = vmatmul.mubr.f32.gmra.mrb[0].mxu0 %v1343
        %v1522 = vpop.f32.mrb[0].mxu0
        %v1523 = vadd.f32 0.0, %v1522
        %v1524 = vpop.f32.mrb[0].mxu0
        %v1525 = vadd.f32 0.0, %v1524
        %1526 = vmatprep.mubr.f32.mxu0 0.0
        %1527 = vmatmul.mubr.f32.gmra.mrb[0].mxu0 %v1346
        %v1528 = vpop.f32.mrb[0].mxu0
        %v1529 = vadd.f32 0.0, %v1528
        %v1530 = vpop.f32.mrb[0].mxu0
        %v1531 = vadd.f32 0.0, %v1530
        %1532 = vmatprep.mubr.f32.mxu0 0.0
        %1533 = vmatmul.mubr.f32.gmra.mrb[0].mxu0 %v1349
        %v1534 = vpop.f32.mrb[0].mxu0
        %v1535 = vadd.f32 0.0, %v1534
        %v1536 = vpop.f32.mrb[0].mxu0
        %v1537 = vadd.f32 0.0, %v1536
        %1538 = vmatprep.mubr.f32.mxu0 0.0
        %1539 = vmatmul.mubr.f32.gmra.mrb[0].mxu0 %v1352
        %v1540 = vpop.f32.mrb[0].mxu0
        %v1541 = vadd.f32 0.0, %v1540
        %v1542 = vpop.f32.mrb[0].mxu0
        %v1543 = vadd.f32 0.0, %v1542
        %1544 = vmatprep.mubr.f32.mxu0 0.0
        %1545 = vmatmul.mubr.f32.gmra.mrb[0].mxu0 %v1355
        %v1546 = vpop.f32.mrb[0].mxu0
        %v1547 = vadd.f32 0.0, %v1546
        %v1548 = vpop.f32.mrb[0].mxu0
        %v1549 = vadd.f32 0.0, %v1548
        %1550 = vmatprep.mubr.f32.mxu0 0.0
        %1551 = vmatmul.mubr.f32.gmra.mrb[0].mxu0 %v1358
        %v1552 = vpop.f32.mrb[0].mxu0
        %v1553 = vadd.f32 0.0, %v1552
        %v1554 = vpop.f32.mrb[0].mxu0
        %v1555 = vadd.f32 0.0, %v1554
        %1556 = vmatprep.mubr.f32.mxu0 0.0
        %1557 = vmatmul.mubr.f32.gmra.mrb[0].mxu0 %v1361
        %v1558 = vpop.f32.mrb[0].mxu0
        %v1559 = vadd.f32 0.0, %v1558
        %v1560 = vpop.f32.mrb[0].mxu0
        %v1561 = vadd.f32 0.0, %v1560
        %1562 = vmatprep.mubr.f32.mxu0 0.0
        %1563 = vmatmul.mubr.f32.gmra.mrb[0].mxu0 %v1364
        %v1564 = vpop.f32.mrb[0].mxu0
        %v1565 = vadd.f32 0.0, %v1564
        %v1566 = vpop.f32.mrb[0].mxu0
        %v1567 = vadd.f32 0.0, %v1566
        %1568 = vmatprep.mubr.f32.mxu0 0.0
        %1569 = vmatmul.mubr.f32.gmra.mrb[0].mxu0 %v1367
        %v1570 = vpop.f32.mrb[0].mxu0
        %v1571 = vadd.f32 0.0, %v1570
        %v1572 = vpop.f32.mrb[0].mxu0
        %v1573 = vadd.f32 0.0, %v1572
        %1574 = vmatprep.mubr.f32.mxu0 0.0
        %1575 = vmatmul.mubr.f32.gmra.mrb[0].mxu0 %v1370
        %v1576 = vpop.f32.mrb[0].mxu0
        %v1577 = vadd.f32 0.0, %v1576
        %v1578 = vpop.f32.mrb[0].mxu0
        %v1579 = vadd.f32 0.0, %v1578
        %1580 = vmatprep.mubr.f32.mxu0 0.0
        %1581 = vmatmul.mubr.f32.gmra.mrb[0].mxu0 %v1373
        %v1582 = vpop.f32.mrb[0].mxu0
        %v1583 = vadd.f32 0.0, %v1582
        %v1584 = vpop.f32.mrb[0].mxu0
        %v1585 = vadd.f32 0.0, %v1584
        %1586 = vmatprep.mubr.f32.mxu0 0.0
        %1587 = vmatmul.mubr.f32.gmra.mrb[0].mxu0 %v1376
        %v1588 = vpop.f32.mrb[0].mxu0
        %v1589 = vadd.f32 0.0, %v1588
        %v1590 = vpop.f32.mrb[0].mxu0
        %v1591 = vadd.f32 0.0, %v1590
        %1592 = vmatprep.mubr.f32.mxu0 0.0
        %1593 = vmatmul.mubr.f32.gmra.mrb[0].mxu0 %v1379
        %v1594 = vpop.f32.mrb[0].mxu0
        %v1595 = vadd.f32 0.0, %v1594
        %v1596 = vpop.f32.mrb[0].mxu0
        %v1597 = vadd.f32 0.0, %v1596
        %1598 = vmatprep.mubr.f32.mxu0 0.0
        %1599 = vmatmul.mubr.f32.gmra.mrb[0].mxu0 %v1382
        %v1600 = vpop.f32.mrb[0].mxu0
        %v1601 = vadd.f32 0.0, %v1600
        %v1602 = vpop.f32.mrb[0].mxu0
        %v1603 = vadd.f32 0.0, %v1602
        %1604 = vmatprep.mubr.f32.mxu0 0.0
        %1605 = vmatmul.mubr.f32.gmra.mrb[0].mxu0 %v1385
        %v1606 = vpop.f32.mrb[0].mxu0
        %v1607 = vadd.f32 0.0, %v1606
        %v1608 = vpop.f32.mrb[0].mxu0
        %v1609 = vadd.f32 0.0, %v1608
        %1610 = vmatprep.mubr.f32.mxu0 0.0
        %1611 = vmatmul.mubr.f32.gmra.mrb[0].mxu0 %v1388
        %v1612 = vpop.f32.mrb[0].mxu0
        %v1613 = vadd.f32 0.0, %v1612
        %v1614 = vpop.f32.mrb[0].mxu0
        %v1615 = vadd.f32 0.0, %v1614
        %1616 = vmatprep.mubr.f32.mxu0 0.0
        %1617 = vmatmul.mubr.f32.gmra.mrb[0].mxu0 %v1391
        %v1618 = vpop.f32.mrb[0].mxu0
        %v1619 = vadd.f32 0.0, %v1618
        %v1620 = vpop.f32.mrb[0].mxu0
        %v1621 = vadd.f32 0.0, %v1620
        %1622 = vmatprep.mubr.f32.mxu0 0.0
        %1623 = vmatmul.mubr.f32.gmra.mrb[0].mxu0 %v1394
        %v1624 = vpop.f32.mrb[0].mxu0
        %v1625 = vadd.f32 0.0, %v1624
        %v1626 = vpop.f32.mrb[0].mxu0
        %v1627 = vadd.f32 0.0, %v1626
        %1628 = vmatprep.mubr.f32.mxu0 0.0
        %1629 = vmatmul.mubr.f32.gmra.mrb[0].mxu0 %v1397
        %v1630 = vpop.f32.mrb[0].mxu0
        %v1631 = vadd.f32 0.0, %v1630
        %v1632 = vpop.f32.mrb[0].mxu0
        %v1633 = vadd.f32 0.0, %v1632
        %1634 = vmatprep.mubr.f32.mxu0 0.0
        %1635 = vmatmul.mubr.f32.gmra.mrb[0].mxu0 %v1400
        %v1636 = vpop.f32.mrb[0].mxu0
        %v1637 = vadd.f32 0.0, %v1636
        %v1638 = vpop.f32.mrb[0].mxu0
        %v1639 = vadd.f32 0.0, %v1638
        %1640 = vmatprep.mubr.f32.mxu0 0.0
        %1641 = vmatmul.mubr.f32.gmra.mrb[0].mxu0 %v1403
        %v1642 = vpop.f32.mrb[0].mxu0
        %v1643 = vadd.f32 0.0, %v1642
        %v1644 = vpop.f32.mrb[0].mxu0
        %v1645 = vadd.f32 0.0, %v1644
        %1646 = vmatprep.mubr.f32.mxu0 0.0
        %1647 = vmatmul.mubr.f32.gmra.mrb[0].mxu0 %v1406
        %v1648 = vpop.f32.mrb[0].mxu0
        %v1649 = vadd.f32 0.0, %v1648
        %v1650 = vpop.f32.mrb[0].mxu0
        %v1651 = vadd.f32 0.0, %v1650
        %1652 = vmatprep.mubr.f32.mxu0 0.0
        %1653 = vmatmul.mubr.f32.gmra.mrb[0].mxu0 %v1409
        %v1654 = vpop.f32.mrb[0].mxu0
        %v1655 = vadd.f32 0.0, %v1654
        %v1656 = vpop.f32.mrb[0].mxu0
        %v1657 = vadd.f32 0.0, %v1656
        %1658 = vmatprep.mubr.f32.mxu0 0.0
        %1659 = vmatmul.mubr.f32.gmra.mrb[0].mxu0 %v1412
        %v1660 = vpop.f32.mrb[0].mxu0
        %v1661 = vadd.f32 0.0, %v1660
        %v1662 = vpop.f32.mrb[0].mxu0
        %v1663 = vadd.f32 0.0, %v1662
        %1664 = vmatprep.mubr.f32.mxu0 0.0
        %1665 = vmatmul.mubr.f32.gmra.mrb[0].mxu0 %v1415
        %v1666 = vpop.f32.mrb[0].mxu0
        %v1667 = vadd.f32 0.0, %v1666
        %v1668 = vpop.f32.mrb[0].mxu0
        %v1669 = vadd.f32 0.0, %v1668
        %1670 = vmatprep.mubr.f32.mxu0 0.0
        %1671 = vmatmul.mubr.f32.gmra.mrb[0].mxu0 %v1418
        %v1672 = vpop.f32.mrb[0].mxu0
        %v1673 = vadd.f32 0.0, %v1672
        %v1674 = vpop.f32.mrb[0].mxu0
        %v1675 = vadd.f32 0.0, %v1674
        %1676 = vdwg.mxu0
        %v1677 = vadd.f32 %v1093, %v1487
        %v1678 = vadd.f32 %v1095, %v1489
        %v1679 = vadd.f32 %v1099, %v1493
        %v1680 = vadd.f32 %v1101, %v1495
        %v1681 = vadd.f32 %v1105, %v1499
        %v1682 = vadd.f32 %v1107, %v1501
        %v1683 = vadd.f32 %v1111, %v1505
        %v1684 = vadd.f32 %v1113, %v1507
        %v1685 = vadd.f32 %v1117, %v1511
        %v1686 = vadd.f32 %v1119, %v1513
        %v1687 = vadd.f32 %v1123, %v1517
        %v1688 = vadd.f32 %v1125, %v1519
        %v1689 = vadd.f32 %v1129, %v1523
        %v1690 = vadd.f32 %v1131, %v1525
        %v1691 = vadd.f32 %v1135, %v1529
        %v1692 = vadd.f32 %v1137, %v1531
        %v1693 = vadd.f32 %v1141, %v1535
        %v1694 = vadd.f32 %v1143, %v1537
        %v1695 = vadd.f32 %v1147, %v1541
        %v1696 = vadd.f32 %v1149, %v1543
        %v1697 = vadd.f32 %v1153, %v1547
        %v1698 = vadd.f32 %v1155, %v1549
        %v1699 = vadd.f32 %v1159, %v1553
        %v1700 = vadd.f32 %v1161, %v1555
        %v1701 = vadd.f32 %v1165, %v1559
        %v1702 = vadd.f32 %v1167, %v1561
        %v1703 = vadd.f32 %v1171, %v1565
        %v1704 = vadd.f32 %v1173, %v1567
        %v1705 = vadd.f32 %v1177, %v1571
        %v1706 = vadd.f32 %v1179, %v1573
        %v1707 = vadd.f32 %v1183, %v1577
        %v1708 = vadd.f32 %v1185, %v1579
        %v1709 = vadd.f32 %v1189, %v1583
        %v1710 = vadd.f32 %v1191, %v1585
        %v1711 = vadd.f32 %v1195, %v1589
        %v1712 = vadd.f32 %v1197, %v1591
        %v1713 = vadd.f32 %v1201, %v1595
        %v1714 = vadd.f32 %v1203, %v1597
        %v1715 = vadd.f32 %v1207, %v1601
        %v1716 = vadd.f32 %v1209, %v1603
        %v1717 = vadd.f32 %v1213, %v1607
        %v1718 = vadd.f32 %v1215, %v1609
        %v1719 = vadd.f32 %v1219, %v1613
        %v1720 = vadd.f32 %v1221, %v1615
        %v1721 = vadd.f32 %v1225, %v1619
        %v1722 = vadd.f32 %v1227, %v1621
        %v1723 = vadd.f32 %v1231, %v1625
        %v1724 = vadd.f32 %v1233, %v1627
        %v1725 = vadd.f32 %v1237, %v1631
        %v1726 = vadd.f32 %v1239, %v1633
        %v1727 = vadd.f32 %v1243, %v1637
        %v1728 = vadd.f32 %v1245, %v1639
        %v1729 = vadd.f32 %v1249, %v1643
        %v1730 = vadd.f32 %v1251, %v1645
        %v1731 = vadd.f32 %v1255, %v1649
        %v1732 = vadd.f32 %v1257, %v1651
        %v1733 = vadd.f32 %v1261, %v1655
        %v1734 = vadd.f32 %v1263, %v1657
        %v1735 = vadd.f32 %v1267, %v1661
        %v1736 = vadd.f32 %v1269, %v1663
        %v1737 = vadd.f32 %v1273, %v1667
        %v1738 = vadd.f32 %v1275, %v1669
        %v1739 = vadd.f32 %v1279, %v1673
        %v1740 = vadd.f32 %v1281, %v1675
        %v1741 = vld [vmem:[%s493 + $0x3] sm:$0xff]
        %v1742 = vld [vmem:[%s493 + $0xb] sm:$0xff]
        %v1743 = vld [vmem:[%s493 + $0x13] sm:$0xff]
        %v1744 = vld [vmem:[%s493 + $0x1b] sm:$0xff]
        %v1745 = vld [vmem:[%s493 + $0x23] sm:$0xff]
        %v1746 = vld [vmem:[%s493 + $0x2b] sm:$0xff]
        %v1747 = vld [vmem:[%s493 + $0x33] sm:$0xff]
        %v1748 = vld [vmem:[%s493 + $0x3b] sm:$0xff]
        %v1749 = vld [vmem:[%s493 + $0x43] sm:$0xff]
        %v1750 = vld [vmem:[%s493 + $0x4b] sm:$0xff]
        %v1751 = vld [vmem:[%s493 + $0x53] sm:$0xff]
        %v1752 = vld [vmem:[%s493 + $0x5b] sm:$0xff]
        %v1753 = vld [vmem:[%s493 + $0x63] sm:$0xff]
        %v1754 = vld [vmem:[%s493 + $0x6b] sm:$0xff]
        %v1755 = vld [vmem:[%s493 + $0x73] sm:$0xff]
        %v1756 = vld [vmem:[%s493 + $0x7b] sm:$0xff]
        %v1757 = vld [vmem:[%s493 + $0x83] sm:$0xff]
        %v1758 = vld [vmem:[%s493 + $0x8b] sm:$0xff]
        %v1759 = vld [vmem:[%s493 + $0x93] sm:$0xff]
        %v1760 = vld [vmem:[%s493 + $0x9b] sm:$0xff]
        %v1761 = vld [vmem:[%s493 + $0xa3] sm:$0xff]
        %v1762 = vld [vmem:[%s493 + $0xab] sm:$0xff]
        %v1763 = vld [vmem:[%s493 + $0xb3] sm:$0xff]
        %v1764 = vld [vmem:[%s493 + $0xbb] sm:$0xff]
        %v1765 = vld [vmem:[%s493 + $0xc3] sm:$0xff]
        %v1766 = vld [vmem:[%s493 + $0xcb] sm:$0xff]
        %v1767 = vld [vmem:[%s493 + $0xd3] sm:$0xff]
        %v1768 = vld [vmem:[%s493 + $0xdb] sm:$0xff]
        %v1769 = vld [vmem:[%s493 + $0xe3] sm:$0xff]
        %v1770 = vld [vmem:[%s493 + $0xeb] sm:$0xff]
        %v1771 = vld [vmem:[%s493 + $0xf3] sm:$0xff]
        %v1772 = vld [vmem:[%s493 + $0xfb] sm:$0xf]
        %s1773 = scalar_lea.vmem %s1, 192
        %v1774 = vld [vmem:[%s1773] sm:$0xff]
        %v1775 = vld [vmem:[%s1773 + $0x8] sm:$0xff]
        %v1776 = vld [vmem:[%s1773 + $0x10] sm:$0xff]
        %v1777 = vld [vmem:[%s1773 + $0x18] sm:$0xff]
        %v1778 = vld [vmem:[%s1773 + $0x20] sm:$0xff]
        %v1779 = vld [vmem:[%s1773 + $0x28] sm:$0xff]
        %v1780 = vld [vmem:[%s1773 + $0x30] sm:$0xff]
        %v1781 = vld [vmem:[%s1773 + $0x38] sm:$0xff]
        %v1783 = vsel %vm576, %v1741, 0
        %v1786 = vsel %vm576, %v1742, 0
        %v1789 = vsel %vm576, %v1743, 0
        %v1792 = vsel %vm576, %v1744, 0
        %v1795 = vsel %vm576, %v1745, 0
        %v1798 = vsel %vm576, %v1746, 0
        %v1801 = vsel %vm576, %v1747, 0
        %v1804 = vsel %vm576, %v1748, 0
        %v1807 = vsel %vm576, %v1749, 0
        %v1810 = vsel %vm576, %v1750, 0
        %v1813 = vsel %vm576, %v1751, 0
        %v1816 = vsel %vm576, %v1752, 0
        %v1819 = vsel %vm576, %v1753, 0
        %v1822 = vsel %vm576, %v1754, 0
        %v1825 = vsel %vm576, %v1755, 0
        %v1828 = vsel %vm576, %v1756, 0
        %v1831 = vsel %vm576, %v1757, 0
        %v1834 = vsel %vm576, %v1758, 0
        %v1837 = vsel %vm576, %v1759, 0
        %v1840 = vsel %vm576, %v1760, 0
        %v1843 = vsel %vm576, %v1761, 0
        %v1846 = vsel %vm576, %v1762, 0
        %v1849 = vsel %vm576, %v1763, 0
        %v1852 = vsel %vm576, %v1764, 0
        %v1855 = vsel %vm576, %v1765, 0
        %v1858 = vsel %vm576, %v1766, 0
        %v1861 = vsel %vm576, %v1767, 0
        %v1864 = vsel %vm576, %v1768, 0
        %v1867 = vsel %vm576, %v1769, 0
        %v1870 = vsel %vm576, %v1770, 0
        %v1873 = vsel %vm576, %v1771, 0
        %v1876 = vsel %vm576, %v1772, 0
        %1878 = vmatprep.subr.mxu0 %v1775
        %1879 = vmatpush1.msra.mxu0 %v1774
        %1880 = vmatprep.subr.mxu0 %v1777
        %1881 = vmatpush1.msra.mxu0 %v1776
        %1882 = vmatprep.subr.mxu0 %v1779
        %1883 = vmatpush1.msra.mxu0 %v1778
        %1884 = vmatprep.subr.mxu0 %v1781
        %1885 = vmatpush1.msra.mxu0 %v1780
        %1886 = vmatprep.subr.mxu0 0.0
        %1887 = vmatpush1.msra.mxu0 0.0
        %1888 = vmatprep.subr.mxu0 0.0
        %1889 = vmatpush1.msra.mxu0 0.0
        %1890 = vmatprep.subr.mxu0 0.0
        %1891 = vmatpush1.msra.mxu0 0.0
        %1892 = vmatprep.subr.mxu0 0.0
        %1893 = vmatpush1.msra.mxu0 0.0
        %1894 = vmatprep.subr.mxu0 0.0
        %1895 = vmatpush1.msra.mxu0 0.0
        %1896 = vmatprep.subr.mxu0 0.0
        %1897 = vmatpush1.msra.mxu0 0.0
        %1898 = vmatprep.subr.mxu0 0.0
        %1899 = vmatpush1.msra.mxu0 0.0
        %1900 = vmatprep.subr.mxu0 0.0
        %1901 = vmatpush1.msra.mxu0 0.0
        %1902 = vmatprep.subr.mxu0 0.0
        %1903 = vmatpush1.msra.mxu0 0.0
        %1904 = vmatprep.subr.mxu0 0.0
        %1905 = vmatpush1.msra.mxu0 0.0
        %1906 = vmatprep.subr.mxu0 0.0
        %1907 = vmatpush1.msra.mxu0 0.0
        %1908 = vmatprep.subr.mxu0 0.0
        %1909 = vmatpush1.msra.mxu0 0.0
        %1910 = vmatprep.subr.mxu0 0.0
        %1911 = vmatpush1.msra.mxu0 0.0
        %1912 = vmatprep.subr.mxu0 0.0
        %1913 = vmatpush1.msra.mxu0 0.0
        %1914 = vmatprep.subr.mxu0 0.0
        %1915 = vmatpush1.msra.mxu0 0.0
        %1916 = vmatprep.subr.mxu0 0.0
        %1917 = vmatpush1.msra.mxu0 0.0
        %1918 = vmatprep.subr.mxu0 0.0
        %1919 = vmatpush1.msra.mxu0 0.0
        %1920 = vmatprep.subr.mxu0 0.0
        %1921 = vmatpush1.msra.mxu0 0.0
        %1922 = vmatprep.subr.mxu0 0.0
        %1923 = vmatpush1.msra.mxu0 0.0
        %1924 = vmatprep.subr.mxu0 0.0
        %1925 = vmatpush1.msra.mxu0 0.0
        %1926 = vmatprep.subr.mxu0 0.0
        %1927 = vmatpush1.msra.mxu0 0.0
        %1928 = vmatprep.subr.mxu0 0.0
        %1929 = vmatpush1.msra.mxu0 0.0
        %1930 = vmatprep.subr.mxu0 0.0
        %1931 = vmatpush1.msra.mxu0 0.0
        %1932 = vmatprep.subr.mxu0 0.0
        %1933 = vmatpush1.msra.mxu0 0.0
        %1934 = vmatprep.subr.mxu0 0.0
        %1935 = vmatpush1.msra.mxu0 0.0
        %1936 = vmatprep.subr.mxu0 0.0
        %1937 = vmatpush1.msra.mxu0 0.0
        %1938 = vmatprep.subr.mxu0 0.0
        %1939 = vmatpush1.msra.mxu0 0.0
        %1940 = vmatprep.subr.mxu0 0.0
        %1941 = vmatpush1.msra.mxu0 0.0
        %1942 = vmatprep.mubr.f32.mxu0 0.0
        %1943 = vmatmul.mubr.f32.gmra.mrb[0].mxu0 %v1783
        %v1944 = vpop.f32.mrb[0].mxu0
        %v1945 = vadd.f32 0.0, %v1944
        %v1946 = vpop.f32.mrb[0].mxu0
        %v1947 = vadd.f32 0.0, %v1946
        %1948 = vmatprep.mubr.f32.mxu0 0.0
        %1949 = vmatmul.mubr.f32.gmra.mrb[0].mxu0 %v1786
        %v1950 = vpop.f32.mrb[0].mxu0
        %v1951 = vadd.f32 0.0, %v1950
        %v1952 = vpop.f32.mrb[0].mxu0
        %v1953 = vadd.f32 0.0, %v1952
        %1954 = vmatprep.mubr.f32.mxu0 0.0
        %1955 = vmatmul.mubr.f32.gmra.mrb[0].mxu0 %v1789
        %v1956 = vpop.f32.mrb[0].mxu0
        %v1957 = vadd.f32 0.0, %v1956
        %v1958 = vpop.f32.mrb[0].mxu0
        %v1959 = vadd.f32 0.0, %v1958
        %1960 = vmatprep.mubr.f32.mxu0 0.0
        %1961 = vmatmul.mubr.f32.gmra.mrb[0].mxu0 %v1792
        %v1962 = vpop.f32.mrb[0].mxu0
        %v1963 = vadd.f32 0.0, %v1962
        %v1964 = vpop.f32.mrb[0].mxu0
        %v1965 = vadd.f32 0.0, %v1964
        %1966 = vmatprep.mubr.f32.mxu0 0.0
        %1967 = vmatmul.mubr.f32.gmra.mrb[0].mxu0 %v1795
        %v1968 = vpop.f32.mrb[0].mxu0
        %v1969 = vadd.f32 0.0, %v1968
        %v1970 = vpop.f32.mrb[0].mxu0
        %v1971 = vadd.f32 0.0, %v1970
        %1972 = vmatprep.mubr.f32.mxu0 0.0
        %1973 = vmatmul.mubr.f32.gmra.mrb[0].mxu0 %v1798
        %v1974 = vpop.f32.mrb[0].mxu0
        %v1975 = vadd.f32 0.0, %v1974
        %v1976 = vpop.f32.mrb[0].mxu0
        %v1977 = vadd.f32 0.0, %v1976
        %1978 = vmatprep.mubr.f32.mxu0 0.0
        %1979 = vmatmul.mubr.f32.gmra.mrb[0].mxu0 %v1801
        %v1980 = vpop.f32.mrb[0].mxu0
        %v1981 = vadd.f32 0.0, %v1980
        %v1982 = vpop.f32.mrb[0].mxu0
        %v1983 = vadd.f32 0.0, %v1982
        %1984 = vmatprep.mubr.f32.mxu0 0.0
        %1985 = vmatmul.mubr.f32.gmra.mrb[0].mxu0 %v1804
        %v1986 = vpop.f32.mrb[0].mxu0
        %v1987 = vadd.f32 0.0, %v1986
        %v1988 = vpop.f32.mrb[0].mxu0
        %v1989 = vadd.f32 0.0, %v1988
        %1990 = vmatprep.mubr.f32.mxu0 0.0
        %1991 = vmatmul.mubr.f32.gmra.mrb[0].mxu0 %v1807
        %v1992 = vpop.f32.mrb[0].mxu0
        %v1993 = vadd.f32 0.0, %v1992
        %v1994 = vpop.f32.mrb[0].mxu0
        %v1995 = vadd.f32 0.0, %v1994
        %1996 = vmatprep.mubr.f32.mxu0 0.0
        %1997 = vmatmul.mubr.f32.gmra.mrb[0].mxu0 %v1810
        %v1998 = vpop.f32.mrb[0].mxu0
        %v1999 = vadd.f32 0.0, %v1998
        %v2000 = vpop.f32.mrb[0].mxu0
        %v2001 = vadd.f32 0.0, %v2000
        %2002 = vmatprep.mubr.f32.mxu0 0.0
        %2003 = vmatmul.mubr.f32.gmra.mrb[0].mxu0 %v1813
        %v2004 = vpop.f32.mrb[0].mxu0
        %v2005 = vadd.f32 0.0, %v2004
        %v2006 = vpop.f32.mrb[0].mxu0
        %v2007 = vadd.f32 0.0, %v2006
        %2008 = vmatprep.mubr.f32.mxu0 0.0
        %2009 = vmatmul.mubr.f32.gmra.mrb[0].mxu0 %v1816
        %v2010 = vpop.f32.mrb[0].mxu0
        %v2011 = vadd.f32 0.0, %v2010
        %v2012 = vpop.f32.mrb[0].mxu0
        %v2013 = vadd.f32 0.0, %v2012
        %2014 = vmatprep.mubr.f32.mxu0 0.0
        %2015 = vmatmul.mubr.f32.gmra.mrb[0].mxu0 %v1819
        %v2016 = vpop.f32.mrb[0].mxu0
        %v2017 = vadd.f32 0.0, %v2016
        %v2018 = vpop.f32.mrb[0].mxu0
        %v2019 = vadd.f32 0.0, %v2018
        %2020 = vmatprep.mubr.f32.mxu0 0.0
        %2021 = vmatmul.mubr.f32.gmra.mrb[0].mxu0 %v1822
        %v2022 = vpop.f32.mrb[0].mxu0
        %v2023 = vadd.f32 0.0, %v2022
        %v2024 = vpop.f32.mrb[0].mxu0
        %v2025 = vadd.f32 0.0, %v2024
        %2026 = vmatprep.mubr.f32.mxu0 0.0
        %2027 = vmatmul.mubr.f32.gmra.mrb[0].mxu0 %v1825
        %v2028 = vpop.f32.mrb[0].mxu0
        %v2029 = vadd.f32 0.0, %v2028
        %v2030 = vpop.f32.mrb[0].mxu0
        %v2031 = vadd.f32 0.0, %v2030
        %2032 = vmatprep.mubr.f32.mxu0 0.0
        %2033 = vmatmul.mubr.f32.gmra.mrb[0].mxu0 %v1828
        %v2034 = vpop.f32.mrb[0].mxu0
        %v2035 = vadd.f32 0.0, %v2034
        %v2036 = vpop.f32.mrb[0].mxu0
        %v2037 = vadd.f32 0.0, %v2036
        %2038 = vmatprep.mubr.f32.mxu0 0.0
        %2039 = vmatmul.mubr.f32.gmra.mrb[0].mxu0 %v1831
        %v2040 = vpop.f32.mrb[0].mxu0
        %v2041 = vadd.f32 0.0, %v2040
        %v2042 = vpop.f32.mrb[0].mxu0
        %v2043 = vadd.f32 0.0, %v2042
        %2044 = vmatprep.mubr.f32.mxu0 0.0
        %2045 = vmatmul.mubr.f32.gmra.mrb[0].mxu0 %v1834
        %v2046 = vpop.f32.mrb[0].mxu0
        %v2047 = vadd.f32 0.0, %v2046
        %v2048 = vpop.f32.mrb[0].mxu0
        %v2049 = vadd.f32 0.0, %v2048
        %2050 = vmatprep.mubr.f32.mxu0 0.0
        %2051 = vmatmul.mubr.f32.gmra.mrb[0].mxu0 %v1837
        %v2052 = vpop.f32.mrb[0].mxu0
        %v2053 = vadd.f32 0.0, %v2052
        %v2054 = vpop.f32.mrb[0].mxu0
        %v2055 = vadd.f32 0.0, %v2054
        %2056 = vmatprep.mubr.f32.mxu0 0.0
        %2057 = vmatmul.mubr.f32.gmra.mrb[0].mxu0 %v1840
        %v2058 = vpop.f32.mrb[0].mxu0
        %v2059 = vadd.f32 0.0, %v2058
        %v2060 = vpop.f32.mrb[0].mxu0
        %v2061 = vadd.f32 0.0, %v2060
        %2062 = vmatprep.mubr.f32.mxu0 0.0
        %2063 = vmatmul.mubr.f32.gmra.mrb[0].mxu0 %v1843
        %v2064 = vpop.f32.mrb[0].mxu0
        %v2065 = vadd.f32 0.0, %v2064
        %v2066 = vpop.f32.mrb[0].mxu0
        %v2067 = vadd.f32 0.0, %v2066
        %2068 = vmatprep.mubr.f32.mxu0 0.0
        %2069 = vmatmul.mubr.f32.gmra.mrb[0].mxu0 %v1846
        %v2070 = vpop.f32.mrb[0].mxu0
        %v2071 = vadd.f32 0.0, %v2070
        %v2072 = vpop.f32.mrb[0].mxu0
        %v2073 = vadd.f32 0.0, %v2072
        %2074 = vmatprep.mubr.f32.mxu0 0.0
        %2075 = vmatmul.mubr.f32.gmra.mrb[0].mxu0 %v1849
        %v2076 = vpop.f32.mrb[0].mxu0
        %v2077 = vadd.f32 0.0, %v2076
        %v2078 = vpop.f32.mrb[0].mxu0
        %v2079 = vadd.f32 0.0, %v2078
        %2080 = vmatprep.mubr.f32.mxu0 0.0
        %2081 = vmatmul.mubr.f32.gmra.mrb[0].mxu0 %v1852
        %v2082 = vpop.f32.mrb[0].mxu0
        %v2083 = vadd.f32 0.0, %v2082
        %v2084 = vpop.f32.mrb[0].mxu0
        %v2085 = vadd.f32 0.0, %v2084
        %2086 = vmatprep.mubr.f32.mxu0 0.0
        %2087 = vmatmul.mubr.f32.gmra.mrb[0].mxu0 %v1855
        %v2088 = vpop.f32.mrb[0].mxu0
        %v2089 = vadd.f32 0.0, %v2088
        %v2090 = vpop.f32.mrb[0].mxu0
        %v2091 = vadd.f32 0.0, %v2090
        %2092 = vmatprep.mubr.f32.mxu0 0.0
        %2093 = vmatmul.mubr.f32.gmra.mrb[0].mxu0 %v1858
        %v2094 = vpop.f32.mrb[0].mxu0
        %v2095 = vadd.f32 0.0, %v2094
        %v2096 = vpop.f32.mrb[0].mxu0
        %v2097 = vadd.f32 0.0, %v2096
        %2098 = vmatprep.mubr.f32.mxu0 0.0
        %2099 = vmatmul.mubr.f32.gmra.mrb[0].mxu0 %v1861
        %v2100 = vpop.f32.mrb[0].mxu0
        %v2101 = vadd.f32 0.0, %v2100
        %v2102 = vpop.f32.mrb[0].mxu0
        %v2103 = vadd.f32 0.0, %v2102
        %2104 = vmatprep.mubr.f32.mxu0 0.0
        %2105 = vmatmul.mubr.f32.gmra.mrb[0].mxu0 %v1864
        %v2106 = vpop.f32.mrb[0].mxu0
        %v2107 = vadd.f32 0.0, %v2106
        %v2108 = vpop.f32.mrb[0].mxu0
        %v2109 = vadd.f32 0.0, %v2108
        %2110 = vmatprep.mubr.f32.mxu0 0.0
        %2111 = vmatmul.mubr.f32.gmra.mrb[0].mxu0 %v1867
        %v2112 = vpop.f32.mrb[0].mxu0
        %v2113 = vadd.f32 0.0, %v2112
        %v2114 = vpop.f32.mrb[0].mxu0
        %v2115 = vadd.f32 0.0, %v2114
        %2116 = vmatprep.mubr.f32.mxu0 0.0
        %2117 = vmatmul.mubr.f32.gmra.mrb[0].mxu0 %v1870
        %v2118 = vpop.f32.mrb[0].mxu0
        %v2119 = vadd.f32 0.0, %v2118
        %v2120 = vpop.f32.mrb[0].mxu0
        %v2121 = vadd.f32 0.0, %v2120
        %2122 = vmatprep.mubr.f32.mxu0 0.0
        %2123 = vmatmul.mubr.f32.gmra.mrb[0].mxu0 %v1873
        %v2124 = vpop.f32.mrb[0].mxu0
        %v2125 = vadd.f32 0.0, %v2124
        %v2126 = vpop.f32.mrb[0].mxu0
        %v2127 = vadd.f32 0.0, %v2126
        %2128 = vmatprep.mubr.f32.mxu0 0.0
        %2129 = vmatmul.mubr.f32.gmra.mrb[0].mxu0 %v1876
        %v2130 = vpop.f32.mrb[0].mxu0
        %v2131 = vadd.f32 0.0, %v2130
        %v2132 = vpop.f32.mrb[0].mxu0
        %v2133 = vadd.f32 0.0, %v2132
        %2134 = vdwg.mxu0
        %v2135 = vadd.f32 %v1677, %v1945
        %v2136 = vadd.f32 %v1678, %v1947
        %v2137 = vadd.f32 %v1679, %v1951
        %v2138 = vadd.f32 %v1680, %v1953
        %v2139 = vadd.f32 %v1681, %v1957
        %v2140 = vadd.f32 %v1682, %v1959
        %v2141 = vadd.f32 %v1683, %v1963
        %v2142 = vadd.f32 %v1684, %v1965
        %v2143 = vadd.f32 %v1685, %v1969
        %v2144 = vadd.f32 %v1686, %v1971
        %v2145 = vadd.f32 %v1687, %v1975
        %v2146 = vadd.f32 %v1688, %v1977
        %v2147 = vadd.f32 %v1689, %v1981
        %v2148 = vadd.f32 %v1690, %v1983
        %v2149 = vadd.f32 %v1691, %v1987
        %v2150 = vadd.f32 %v1692, %v1989
        %v2151 = vadd.f32 %v1693, %v1993
        %v2152 = vadd.f32 %v1694, %v1995
        %v2153 = vadd.f32 %v1695, %v1999
        %v2154 = vadd.f32 %v1696, %v2001
        %v2155 = vadd.f32 %v1697, %v2005
        %v2156 = vadd.f32 %v1698, %v2007
        %v2157 = vadd.f32 %v1699, %v2011
        %v2158 = vadd.f32 %v1700, %v2013
        %v2159 = vadd.f32 %v1701, %v2017
        %v2160 = vadd.f32 %v1702, %v2019
        %v2161 = vadd.f32 %v1703, %v2023
        %v2162 = vadd.f32 %v1704, %v2025
        %v2163 = vadd.f32 %v1705, %v2029
        %v2164 = vadd.f32 %v1706, %v2031
        %v2165 = vadd.f32 %v1707, %v2035
        %v2166 = vadd.f32 %v1708, %v2037
        %v2167 = vadd.f32 %v1709, %v2041
        %v2168 = vadd.f32 %v1710, %v2043
        %v2169 = vadd.f32 %v1711, %v2047
        %v2170 = vadd.f32 %v1712, %v2049
        %v2171 = vadd.f32 %v1713, %v2053
        %v2172 = vadd.f32 %v1714, %v2055
        %v2173 = vadd.f32 %v1715, %v2059
        %v2174 = vadd.f32 %v1716, %v2061
        %v2175 = vadd.f32 %v1717, %v2065
        %v2176 = vadd.f32 %v1718, %v2067
        %v2177 = vadd.f32 %v1719, %v2071
        %v2178 = vadd.f32 %v1720, %v2073
        %v2179 = vadd.f32 %v1721, %v2077
        %v2180 = vadd.f32 %v1722, %v2079
        %v2181 = vadd.f32 %v1723, %v2083
        %v2182 = vadd.f32 %v1724, %v2085
        %v2183 = vadd.f32 %v1725, %v2089
        %v2184 = vadd.f32 %v1726, %v2091
        %v2185 = vadd.f32 %v1727, %v2095
        %v2186 = vadd.f32 %v1728, %v2097
        %v2187 = vadd.f32 %v1729, %v2101
        %v2188 = vadd.f32 %v1730, %v2103
        %v2189 = vadd.f32 %v1731, %v2107
        %v2190 = vadd.f32 %v1732, %v2109
        %v2191 = vadd.f32 %v1733, %v2113
        %v2192 = vadd.f32 %v1734, %v2115
        %v2193 = vadd.f32 %v1735, %v2119
        %v2194 = vadd.f32 %v1736, %v2121
        %v2195 = vadd.f32 %v1737, %v2125
        %v2196 = vadd.f32 %v1738, %v2127
        %v2197 = vadd.f32 %v1739, %v2131
        %v2198 = vadd.f32 %v1740, %v2133
        %v2199 = vld [vmem:[%s493 + $0x4] sm:$0xff]
        %v2200 = vld [vmem:[%s493 + $0xc] sm:$0xff]
        %v2201 = vld [vmem:[%s493 + $0x14] sm:$0xff]
        %v2202 = vld [vmem:[%s493 + $0x1c] sm:$0xff]
        %v2203 = vld [vmem:[%s493 + $0x24] sm:$0xff]
        %v2204 = vld [vmem:[%s493 + $0x2c] sm:$0xff]
        %v2205 = vld [vmem:[%s493 + $0x34] sm:$0xff]
        %v2206 = vld [vmem:[%s493 + $0x3c] sm:$0xff]
        %v2207 = vld [vmem:[%s493 + $0x44] sm:$0xff]
        %v2208 = vld [vmem:[%s493 + $0x4c] sm:$0xff]
        %v2209 = vld [vmem:[%s493 + $0x54] sm:$0xff]
        %v2210 = vld [vmem:[%s493 + $0x5c] sm:$0xff]
        %v2211 = vld [vmem:[%s493 + $0x64] sm:$0xff]
        %v2212 = vld [vmem:[%s493 + $0x6c] sm:$0xff]
        %v2213 = vld [vmem:[%s493 + $0x74] sm:$0xff]
        %v2214 = vld [vmem:[%s493 + $0x7c] sm:$0xff]
        %v2215 = vld [vmem:[%s493 + $0x84] sm:$0xff]
        %v2216 = vld [vmem:[%s493 + $0x8c] sm:$0xff]
        %v2217 = vld [vmem:[%s493 + $0x94] sm:$0xff]
        %v2218 = vld [vmem:[%s493 + $0x9c] sm:$0xff]
        %v2219 = vld [vmem:[%s493 + $0xa4] sm:$0xff]
        %v2220 = vld [vmem:[%s493 + $0xac] sm:$0xff]
        %v2221 = vld [vmem:[%s493 + $0xb4] sm:$0xff]
        %v2222 = vld [vmem:[%s493 + $0xbc] sm:$0xff]
        %v2223 = vld [vmem:[%s493 + $0xc4] sm:$0xff]
        %v2224 = vld [vmem:[%s493 + $0xcc] sm:$0xff]
        %v2225 = vld [vmem:[%s493 + $0xd4] sm:$0xff]
        %v2226 = vld [vmem:[%s493 + $0xdc] sm:$0xff]
        %v2227 = vld [vmem:[%s493 + $0xe4] sm:$0xff]
        %v2228 = vld [vmem:[%s493 + $0xec] sm:$0xff]
        %v2229 = vld [vmem:[%s493 + $0xf4] sm:$0xff]
        %v2230 = vld [vmem:[%s493 + $0xfc] sm:$0xf]
        %s2231 = scalar_lea.vmem %s1, 256
        %v2232 = vld [vmem:[%s2231] sm:$0xff]
        %v2233 = vld [vmem:[%s2231 + $0x8] sm:$0xff]
        %v2234 = vld [vmem:[%s2231 + $0x10] sm:$0xff]
        %v2235 = vld [vmem:[%s2231 + $0x18] sm:$0xff]
        %v2236 = vld [vmem:[%s2231 + $0x20] sm:$0xff]
        %v2237 = vld [vmem:[%s2231 + $0x28] sm:$0xff]
        %v2238 = vld [vmem:[%s2231 + $0x30] sm:$0xff]
        %v2239 = vld [vmem:[%s2231 + $0x38] sm:$0xff]
        %v2241 = vsel %vm576, %v2199, 0
        %v2244 = vsel %vm576, %v2200, 0
        %v2247 = vsel %vm576, %v2201, 0
        %v2250 = vsel %vm576, %v2202, 0
        %v2253 = vsel %vm576, %v2203, 0
        %v2256 = vsel %vm576, %v2204, 0
        %v2259 = vsel %vm576, %v2205, 0
        %v2262 = vsel %vm576, %v2206, 0
        %v2265 = vsel %vm576, %v2207, 0
        %v2268 = vsel %vm576, %v2208, 0
        %v2271 = vsel %vm576, %v2209, 0
        %v2274 = vsel %vm576, %v2210, 0
        %v2277 = vsel %vm576, %v2211, 0
        %v2280 = vsel %vm576, %v2212, 0
        %v2283 = vsel %vm576, %v2213, 0
        %v2286 = vsel %vm576, %v2214, 0
        %v2289 = vsel %vm576, %v2215, 0
        %v2292 = vsel %vm576, %v2216, 0
        %v2295 = vsel %vm576, %v2217, 0
        %v2298 = vsel %vm576, %v2218, 0
        %v2301 = vsel %vm576, %v2219, 0
        %v2304 = vsel %vm576, %v2220, 0
        %v2307 = vsel %vm576, %v2221, 0
        %v2310 = vsel %vm576, %v2222, 0
        %v2313 = vsel %vm576, %v2223, 0
        %v2316 = vsel %vm576, %v2224, 0
        %v2319 = vsel %vm576, %v2225, 0
        %v2322 = vsel %vm576, %v2226, 0
        %v2325 = vsel %vm576, %v2227, 0
        %v2328 = vsel %vm576, %v2228, 0
        %v2331 = vsel %vm576, %v2229, 0
        %v2334 = vsel %vm576, %v2230, 0
        %2336 = vmatprep.subr.mxu0 %v2233
        %2337 = vmatpush1.msra.mxu0 %v2232
        %2338 = vmatprep.subr.mxu0 %v2235
        %2339 = vmatpush1.msra.mxu0 %v2234
        %2340 = vmatprep.subr.mxu0 %v2237
        %2341 = vmatpush1.msra.mxu0 %v2236
        %2342 = vmatprep.subr.mxu0 %v2239
        %2343 = vmatpush1.msra.mxu0 %v2238
        %2344 = vmatprep.subr.mxu0 0.0
        %2345 = vmatpush1.msra.mxu0 0.0
        %2346 = vmatprep.subr.mxu0 0.0
        %2347 = vmatpush1.msra.mxu0 0.0
        %2348 = vmatprep.subr.mxu0 0.0
        %2349 = vmatpush1.msra.mxu0 0.0
        %2350 = vmatprep.subr.mxu0 0.0
        %2351 = vmatpush1.msra.mxu0 0.0
        %2352 = vmatprep.subr.mxu0 0.0
        %2353 = vmatpush1.msra.mxu0 0.0
        %2354 = vmatprep.subr.mxu0 0.0
        %2355 = vmatpush1.msra.mxu0 0.0
        %2356 = vmatprep.subr.mxu0 0.0
        %2357 = vmatpush1.msra.mxu0 0.0
        %2358 = vmatprep.subr.mxu0 0.0
        %2359 = vmatpush1.msra.mxu0 0.0
        %2360 = vmatprep.subr.mxu0 0.0
        %2361 = vmatpush1.msra.mxu0 0.0
        %2362 = vmatprep.subr.mxu0 0.0
        %2363 = vmatpush1.msra.mxu0 0.0
        %2364 = vmatprep.subr.mxu0 0.0
        %2365 = vmatpush1.msra.mxu0 0.0
        %2366 = vmatprep.subr.mxu0 0.0
        %2367 = vmatpush1.msra.mxu0 0.0
        %2368 = vmatprep.subr.mxu0 0.0
        %2369 = vmatpush1.msra.mxu0 0.0
        %2370 = vmatprep.subr.mxu0 0.0
        %2371 = vmatpush1.msra.mxu0 0.0
        %2372 = vmatprep.subr.mxu0 0.0
        %2373 = vmatpush1.msra.mxu0 0.0
        %2374 = vmatprep.subr.mxu0 0.0
        %2375 = vmatpush1.msra.mxu0 0.0
        %2376 = vmatprep.subr.mxu0 0.0
        %2377 = vmatpush1.msra.mxu0 0.0
        %2378 = vmatprep.subr.mxu0 0.0
        %2379 = vmatpush1.msra.mxu0 0.0
        %2380 = vmatprep.subr.mxu0 0.0
        %2381 = vmatpush1.msra.mxu0 0.0
        %2382 = vmatprep.subr.mxu0 0.0
        %2383 = vmatpush1.msra.mxu0 0.0
        %2384 = vmatprep.subr.mxu0 0.0
        %2385 = vmatpush1.msra.mxu0 0.0
        %2386 = vmatprep.subr.mxu0 0.0
        %2387 = vmatpush1.msra.mxu0 0.0
        %2388 = vmatprep.subr.mxu0 0.0
        %2389 = vmatpush1.msra.mxu0 0.0
        %2390 = vmatprep.subr.mxu0 0.0
        %2391 = vmatpush1.msra.mxu0 0.0
        %2392 = vmatprep.subr.mxu0 0.0
        %2393 = vmatpush1.msra.mxu0 0.0
        %2394 = vmatprep.subr.mxu0 0.0
        %2395 = vmatpush1.msra.mxu0 0.0
        %2396 = vmatprep.subr.mxu0 0.0
        %2397 = vmatpush1.msra.mxu0 0.0
        %2398 = vmatprep.subr.mxu0 0.0
        %2399 = vmatpush1.msra.mxu0 0.0
        %2400 = vmatprep.mubr.f32.mxu0 0.0
        %2401 = vmatmul.mubr.f32.gmra.mrb[0].mxu0 %v2241
        %v2402 = vpop.f32.mrb[0].mxu0
        %v2403 = vadd.f32 0.0, %v2402
        %v2404 = vpop.f32.mrb[0].mxu0
        %v2405 = vadd.f32 0.0, %v2404
        %2406 = vmatprep.mubr.f32.mxu0 0.0
        %2407 = vmatmul.mubr.f32.gmra.mrb[0].mxu0 %v2244
        %v2408 = vpop.f32.mrb[0].mxu0
        %v2409 = vadd.f32 0.0, %v2408
        %v2410 = vpop.f32.mrb[0].mxu0
        %v2411 = vadd.f32 0.0, %v2410
        %2412 = vmatprep.mubr.f32.mxu0 0.0
        %2413 = vmatmul.mubr.f32.gmra.mrb[0].mxu0 %v2247
        %v2414 = vpop.f32.mrb[0].mxu0
        %v2415 = vadd.f32 0.0, %v2414
        %v2416 = vpop.f32.mrb[0].mxu0
        %v2417 = vadd.f32 0.0, %v2416
        %2418 = vmatprep.mubr.f32.mxu0 0.0
        %2419 = vmatmul.mubr.f32.gmra.mrb[0].mxu0 %v2250
        %v2420 = vpop.f32.mrb[0].mxu0
        %v2421 = vadd.f32 0.0, %v2420
        %v2422 = vpop.f32.mrb[0].mxu0
        %v2423 = vadd.f32 0.0, %v2422
        %2424 = vmatprep.mubr.f32.mxu0 0.0
        %2425 = vmatmul.mubr.f32.gmra.mrb[0].mxu0 %v2253
        %v2426 = vpop.f32.mrb[0].mxu0
        %v2427 = vadd.f32 0.0, %v2426
        %v2428 = vpop.f32.mrb[0].mxu0
        %v2429 = vadd.f32 0.0, %v2428
        %2430 = vmatprep.mubr.f32.mxu0 0.0
        %2431 = vmatmul.mubr.f32.gmra.mrb[0].mxu0 %v2256
        %v2432 = vpop.f32.mrb[0].mxu0
        %v2433 = vadd.f32 0.0, %v2432
        %v2434 = vpop.f32.mrb[0].mxu0
        %v2435 = vadd.f32 0.0, %v2434
        %2436 = vmatprep.mubr.f32.mxu0 0.0
        %2437 = vmatmul.mubr.f32.gmra.mrb[0].mxu0 %v2259
        %v2438 = vpop.f32.mrb[0].mxu0
        %v2439 = vadd.f32 0.0, %v2438
        %v2440 = vpop.f32.mrb[0].mxu0
        %v2441 = vadd.f32 0.0, %v2440
        %2442 = vmatprep.mubr.f32.mxu0 0.0
        %2443 = vmatmul.mubr.f32.gmra.mrb[0].mxu0 %v2262
        %v2444 = vpop.f32.mrb[0].mxu0
        %v2445 = vadd.f32 0.0, %v2444
        %v2446 = vpop.f32.mrb[0].mxu0
        %v2447 = vadd.f32 0.0, %v2446
        %2448 = vmatprep.mubr.f32.mxu0 0.0
        %2449 = vmatmul.mubr.f32.gmra.mrb[0].mxu0 %v2265
        %v2450 = vpop.f32.mrb[0].mxu0
        %v2451 = vadd.f32 0.0, %v2450
        %v2452 = vpop.f32.mrb[0].mxu0
        %v2453 = vadd.f32 0.0, %v2452
        %2454 = vmatprep.mubr.f32.mxu0 0.0
        %2455 = vmatmul.mubr.f32.gmra.mrb[0].mxu0 %v2268
        %v2456 = vpop.f32.mrb[0].mxu0
        %v2457 = vadd.f32 0.0, %v2456
        %v2458 = vpop.f32.mrb[0].mxu0
        %v2459 = vadd.f32 0.0, %v2458
        %2460 = vmatprep.mubr.f32.mxu0 0.0
        %2461 = vmatmul.mubr.f32.gmra.mrb[0].mxu0 %v2271
        %v2462 = vpop.f32.mrb[0].mxu0
        %v2463 = vadd.f32 0.0, %v2462
        %v2464 = vpop.f32.mrb[0].mxu0
        %v2465 = vadd.f32 0.0, %v2464
        %2466 = vmatprep.mubr.f32.mxu0 0.0
        %2467 = vmatmul.mubr.f32.gmra.mrb[0].mxu0 %v2274
        %v2468 = vpop.f32.mrb[0].mxu0
        %v2469 = vadd.f32 0.0, %v2468
        %v2470 = vpop.f32.mrb[0].mxu0
        %v2471 = vadd.f32 0.0, %v2470
        %2472 = vmatprep.mubr.f32.mxu0 0.0
        %2473 = vmatmul.mubr.f32.gmra.mrb[0].mxu0 %v2277
        %v2474 = vpop.f32.mrb[0].mxu0
        %v2475 = vadd.f32 0.0, %v2474
        %v2476 = vpop.f32.mrb[0].mxu0
        %v2477 = vadd.f32 0.0, %v2476
        %2478 = vmatprep.mubr.f32.mxu0 0.0
        %2479 = vmatmul.mubr.f32.gmra.mrb[0].mxu0 %v2280
        %v2480 = vpop.f32.mrb[0].mxu0
        %v2481 = vadd.f32 0.0, %v2480
        %v2482 = vpop.f32.mrb[0].mxu0
        %v2483 = vadd.f32 0.0, %v2482
        %2484 = vmatprep.mubr.f32.mxu0 0.0
        %2485 = vmatmul.mubr.f32.gmra.mrb[0].mxu0 %v2283
        %v2486 = vpop.f32.mrb[0].mxu0
        %v2487 = vadd.f32 0.0, %v2486
        %v2488 = vpop.f32.mrb[0].mxu0
        %v2489 = vadd.f32 0.0, %v2488
        %2490 = vmatprep.mubr.f32.mxu0 0.0
        %2491 = vmatmul.mubr.f32.gmra.mrb[0].mxu0 %v2286
        %v2492 = vpop.f32.mrb[0].mxu0
        %v2493 = vadd.f32 0.0, %v2492
        %v2494 = vpop.f32.mrb[0].mxu0
        %v2495 = vadd.f32 0.0, %v2494
        %2496 = vmatprep.mubr.f32.mxu0 0.0
        %2497 = vmatmul.mubr.f32.gmra.mrb[0].mxu0 %v2289
        %v2498 = vpop.f32.mrb[0].mxu0
        %v2499 = vadd.f32 0.0, %v2498
        %v2500 = vpop.f32.mrb[0].mxu0
        %v2501 = vadd.f32 0.0, %v2500
        %2502 = vmatprep.mubr.f32.mxu0 0.0
        %2503 = vmatmul.mubr.f32.gmra.mrb[0].mxu0 %v2292
        %v2504 = vpop.f32.mrb[0].mxu0
        %v2505 = vadd.f32 0.0, %v2504
        %v2506 = vpop.f32.mrb[0].mxu0
        %v2507 = vadd.f32 0.0, %v2506
        %2508 = vmatprep.mubr.f32.mxu0 0.0
        %2509 = vmatmul.mubr.f32.gmra.mrb[0].mxu0 %v2295
        %v2510 = vpop.f32.mrb[0].mxu0
        %v2511 = vadd.f32 0.0, %v2510
        %v2512 = vpop.f32.mrb[0].mxu0
        %v2513 = vadd.f32 0.0, %v2512
        %2514 = vmatprep.mubr.f32.mxu0 0.0
        %2515 = vmatmul.mubr.f32.gmra.mrb[0].mxu0 %v2298
        %v2516 = vpop.f32.mrb[0].mxu0
        %v2517 = vadd.f32 0.0, %v2516
        %v2518 = vpop.f32.mrb[0].mxu0
        %v2519 = vadd.f32 0.0, %v2518
        %2520 = vmatprep.mubr.f32.mxu0 0.0
        %2521 = vmatmul.mubr.f32.gmra.mrb[0].mxu0 %v2301
        %v2522 = vpop.f32.mrb[0].mxu0
        %v2523 = vadd.f32 0.0, %v2522
        %v2524 = vpop.f32.mrb[0].mxu0
        %v2525 = vadd.f32 0.0, %v2524
        %2526 = vmatprep.mubr.f32.mxu0 0.0
        %2527 = vmatmul.mubr.f32.gmra.mrb[0].mxu0 %v2304
        %v2528 = vpop.f32.mrb[0].mxu0
        %v2529 = vadd.f32 0.0, %v2528
        %v2530 = vpop.f32.mrb[0].mxu0
        %v2531 = vadd.f32 0.0, %v2530
        %2532 = vmatprep.mubr.f32.mxu0 0.0
        %2533 = vmatmul.mubr.f32.gmra.mrb[0].mxu0 %v2307
        %v2534 = vpop.f32.mrb[0].mxu0
        %v2535 = vadd.f32 0.0, %v2534
        %v2536 = vpop.f32.mrb[0].mxu0
        %v2537 = vadd.f32 0.0, %v2536
        %2538 = vmatprep.mubr.f32.mxu0 0.0
        %2539 = vmatmul.mubr.f32.gmra.mrb[0].mxu0 %v2310
        %v2540 = vpop.f32.mrb[0].mxu0
        %v2541 = vadd.f32 0.0, %v2540
        %v2542 = vpop.f32.mrb[0].mxu0
        %v2543 = vadd.f32 0.0, %v2542
        %2544 = vmatprep.mubr.f32.mxu0 0.0
        %2545 = vmatmul.mubr.f32.gmra.mrb[0].mxu0 %v2313
        %v2546 = vpop.f32.mrb[0].mxu0
        %v2547 = vadd.f32 0.0, %v2546
        %v2548 = vpop.f32.mrb[0].mxu0
        %v2549 = vadd.f32 0.0, %v2548
        %2550 = vmatprep.mubr.f32.mxu0 0.0
        %2551 = vmatmul.mubr.f32.gmra.mrb[0].mxu0 %v2316
        %v2552 = vpop.f32.mrb[0].mxu0
        %v2553 = vadd.f32 0.0, %v2552
        %v2554 = vpop.f32.mrb[0].mxu0
        %v2555 = vadd.f32 0.0, %v2554
        %2556 = vmatprep.mubr.f32.mxu0 0.0
        %2557 = vmatmul.mubr.f32.gmra.mrb[0].mxu0 %v2319
        %v2558 = vpop.f32.mrb[0].mxu0
        %v2559 = vadd.f32 0.0, %v2558
        %v2560 = vpop.f32.mrb[0].mxu0
        %v2561 = vadd.f32 0.0, %v2560
        %2562 = vmatprep.mubr.f32.mxu0 0.0
        %2563 = vmatmul.mubr.f32.gmra.mrb[0].mxu0 %v2322
        %v2564 = vpop.f32.mrb[0].mxu0
        %v2565 = vadd.f32 0.0, %v2564
        %v2566 = vpop.f32.mrb[0].mxu0
        %v2567 = vadd.f32 0.0, %v2566
        %2568 = vmatprep.mubr.f32.mxu0 0.0
        %2569 = vmatmul.mubr.f32.gmra.mrb[0].mxu0 %v2325
        %v2570 = vpop.f32.mrb[0].mxu0
        %v2571 = vadd.f32 0.0, %v2570
        %v2572 = vpop.f32.mrb[0].mxu0
        %v2573 = vadd.f32 0.0, %v2572
        %2574 = vmatprep.mubr.f32.mxu0 0.0
        %2575 = vmatmul.mubr.f32.gmra.mrb[0].mxu0 %v2328
        %v2576 = vpop.f32.mrb[0].mxu0
        %v2577 = vadd.f32 0.0, %v2576
        %v2578 = vpop.f32.mrb[0].mxu0
        %v2579 = vadd.f32 0.0, %v2578
        %2580 = vmatprep.mubr.f32.mxu0 0.0
        %2581 = vmatmul.mubr.f32.gmra.mrb[0].mxu0 %v2331
        %v2582 = vpop.f32.mrb[0].mxu0
        %v2583 = vadd.f32 0.0, %v2582
        %v2584 = vpop.f32.mrb[0].mxu0
        %v2585 = vadd.f32 0.0, %v2584
        %2586 = vmatprep.mubr.f32.mxu0 0.0
        %2587 = vmatmul.mubr.f32.gmra.mrb[0].mxu0 %v2334
        %v2588 = vpop.f32.mrb[0].mxu0
        %v2589 = vadd.f32 0.0, %v2588
        %v2590 = vpop.f32.mrb[0].mxu0
        %v2591 = vadd.f32 0.0, %v2590
        %2592 = vdwg.mxu0
        %v2593 = vadd.f32 %v2135, %v2403
        %v2594 = vadd.f32 %v2136, %v2405
        %v2595 = vadd.f32 %v2137, %v2409
        %v2596 = vadd.f32 %v2138, %v2411
        %v2597 = vadd.f32 %v2139, %v2415
        %v2598 = vadd.f32 %v2140, %v2417
        %v2599 = vadd.f32 %v2141, %v2421
        %v2600 = vadd.f32 %v2142, %v2423
        %v2601 = vadd.f32 %v2143, %v2427
        %v2602 = vadd.f32 %v2144, %v2429
        %v2603 = vadd.f32 %v2145, %v2433
        %v2604 = vadd.f32 %v2146, %v2435
        %v2605 = vadd.f32 %v2147, %v2439
        %v2606 = vadd.f32 %v2148, %v2441
        %v2607 = vadd.f32 %v2149, %v2445
        %v2608 = vadd.f32 %v2150, %v2447
        %v2609 = vadd.f32 %v2151, %v2451
        %v2610 = vadd.f32 %v2152, %v2453
        %v2611 = vadd.f32 %v2153, %v2457
        %v2612 = vadd.f32 %v2154, %v2459
        %v2613 = vadd.f32 %v2155, %v2463
        %v2614 = vadd.f32 %v2156, %v2465
        %v2615 = vadd.f32 %v2157, %v2469
        %v2616 = vadd.f32 %v2158, %v2471
        %v2617 = vadd.f32 %v2159, %v2475
        %v2618 = vadd.f32 %v2160, %v2477
        %v2619 = vadd.f32 %v2161, %v2481
        %v2620 = vadd.f32 %v2162, %v2483
        %v2621 = vadd.f32 %v2163, %v2487
        %v2622 = vadd.f32 %v2164, %v2489
        %v2623 = vadd.f32 %v2165, %v2493
        %v2624 = vadd.f32 %v2166, %v2495
        %v2625 = vadd.f32 %v2167, %v2499
        %v2626 = vadd.f32 %v2168, %v2501
        %v2627 = vadd.f32 %v2169, %v2505
        %v2628 = vadd.f32 %v2170, %v2507
        %v2629 = vadd.f32 %v2171, %v2511
        %v2630 = vadd.f32 %v2172, %v2513
        %v2631 = vadd.f32 %v2173, %v2517
        %v2632 = vadd.f32 %v2174, %v2519
        %v2633 = vadd.f32 %v2175, %v2523
        %v2634 = vadd.f32 %v2176, %v2525
        %v2635 = vadd.f32 %v2177, %v2529
        %v2636 = vadd.f32 %v2178, %v2531
        %v2637 = vadd.f32 %v2179, %v2535
        %v2638 = vadd.f32 %v2180, %v2537
        %v2639 = vadd.f32 %v2181, %v2541
        %v2640 = vadd.f32 %v2182, %v2543
        %v2641 = vadd.f32 %v2183, %v2547
        %v2642 = vadd.f32 %v2184, %v2549
        %v2643 = vadd.f32 %v2185, %v2553
        %v2644 = vadd.f32 %v2186, %v2555
        %v2645 = vadd.f32 %v2187, %v2559
        %v2646 = vadd.f32 %v2188, %v2561
        %v2647 = vadd.f32 %v2189, %v2565
        %v2648 = vadd.f32 %v2190, %v2567
        %v2649 = vadd.f32 %v2191, %v2571
        %v2650 = vadd.f32 %v2192, %v2573
        %v2651 = vadd.f32 %v2193, %v2577
        %v2652 = vadd.f32 %v2194, %v2579
        %v2653 = vadd.f32 %v2195, %v2583
        %v2654 = vadd.f32 %v2196, %v2585
        %v2655 = vadd.f32 %v2197, %v2589
        %v2656 = vadd.f32 %v2198, %v2591
        %v2657 = vld [vmem:[%s2] sm:$0x3]
        %v2659 = vlaneseq
        %v2660 = vshrl.u32 %v2659, 7
        %v2661 = vsub.s32 0, %v2660
        %v2662 = vrot.slane %v2657, %v2661
        %v2663 = vlaneseq
        %v2664 = vshrl.u32 %v2663, 7
        %v2665 = vsub.s32 1, %v2664
        %v2666 = vrot.slane %v2657, %v2665
        %v2669 = vadd.f32 %v2593, %v2662
        %v2670 = vadd.f32 %v2594, %v2666
        %v2671 = vadd.f32 %v2595, %v2662
        %v2672 = vadd.f32 %v2596, %v2666
        %v2673 = vadd.f32 %v2597, %v2662
        %v2674 = vadd.f32 %v2598, %v2666
        %v2675 = vadd.f32 %v2599, %v2662
        %v2676 = vadd.f32 %v2600, %v2666
        %v2677 = vadd.f32 %v2601, %v2662
        %v2678 = vadd.f32 %v2602, %v2666
        %v2679 = vadd.f32 %v2603, %v2662
        %v2680 = vadd.f32 %v2604, %v2666
        %v2681 = vadd.f32 %v2605, %v2662
        %v2682 = vadd.f32 %v2606, %v2666
        %v2683 = vadd.f32 %v2607, %v2662
        %v2684 = vadd.f32 %v2608, %v2666
        %v2685 = vadd.f32 %v2609, %v2662
        %v2686 = vadd.f32 %v2610, %v2666
        %v2687 = vadd.f32 %v2611, %v2662
        %v2688 = vadd.f32 %v2612, %v2666
        %v2689 = vadd.f32 %v2613, %v2662
        %v2690 = vadd.f32 %v2614, %v2666
        %v2691 = vadd.f32 %v2615, %v2662
        %v2692 = vadd.f32 %v2616, %v2666
        %v2693 = vadd.f32 %v2617, %v2662
        %v2694 = vadd.f32 %v2618, %v2666
        %v2695 = vadd.f32 %v2619, %v2662
        %v2696 = vadd.f32 %v2620, %v2666
        %v2697 = vadd.f32 %v2621, %v2662
        %v2698 = vadd.f32 %v2622, %v2666
        %v2699 = vadd.f32 %v2623, %v2662
        %v2700 = vadd.f32 %v2624, %v2666
        %v2701 = vadd.f32 %v2625, %v2662
        %v2702 = vadd.f32 %v2626, %v2666
        %v2703 = vadd.f32 %v2627, %v2662
        %v2704 = vadd.f32 %v2628, %v2666
        %v2705 = vadd.f32 %v2629, %v2662
        %v2706 = vadd.f32 %v2630, %v2666
        %v2707 = vadd.f32 %v2631, %v2662
        %v2708 = vadd.f32 %v2632, %v2666
        %v2709 = vadd.f32 %v2633, %v2662
        %v2710 = vadd.f32 %v2634, %v2666
        %v2711 = vadd.f32 %v2635, %v2662
        %v2712 = vadd.f32 %v2636, %v2666
        %v2713 = vadd.f32 %v2637, %v2662
        %v2714 = vadd.f32 %v2638, %v2666
        %v2715 = vadd.f32 %v2639, %v2662
        %v2716 = vadd.f32 %v2640, %v2666
        %v2717 = vadd.f32 %v2641, %v2662
        %v2718 = vadd.f32 %v2642, %v2666
        %v2719 = vadd.f32 %v2643, %v2662
        %v2720 = vadd.f32 %v2644, %v2666
        %v2721 = vadd.f32 %v2645, %v2662
        %v2722 = vadd.f32 %v2646, %v2666
        %v2723 = vadd.f32 %v2647, %v2662
        %v2724 = vadd.f32 %v2648, %v2666
        %v2725 = vadd.f32 %v2649, %v2662
        %v2726 = vadd.f32 %v2650, %v2666
        %v2727 = vadd.f32 %v2651, %v2662
        %v2728 = vadd.f32 %v2652, %v2666
        %v2729 = vadd.f32 %v2653, %v2662
        %v2730 = vadd.f32 %v2654, %v2666
        %v2731 = vadd.f32 %v2655, %v2662
        %v2732 = vadd.f32 %v2656, %v2666
        %v2733 = vtanh.pop %v2669
        %v2734 = vtanh.pop %v2670
        %v2735 = vtanh.pop %v2671
        %v2736 = vtanh.pop %v2672
        %v2737 = vtanh.pop %v2673
        %v2738 = vtanh.pop %v2674
        %v2739 = vtanh.pop %v2675
        %v2740 = vtanh.pop %v2676
        %v2741 = vtanh.pop %v2677
        %v2742 = vtanh.pop %v2678
        %v2743 = vtanh.pop %v2679
        %v2744 = vtanh.pop %v2680
        %v2745 = vtanh.pop %v2681
        %v2746 = vtanh.pop %v2682
        %v2747 = vtanh.pop %v2683
        %v2748 = vtanh.pop %v2684
        %v2749 = vtanh.pop %v2685
        %v2750 = vtanh.pop %v2686
        %v2751 = vtanh.pop %v2687
        %v2752 = vtanh.pop %v2688
        %v2753 = vtanh.pop %v2689
        %v2754 = vtanh.pop %v2690
        %v2755 = vtanh.pop %v2691
        %v2756 = vtanh.pop %v2692
        %v2757 = vtanh.pop %v2693
        %v2758 = vtanh.pop %v2694
        %v2759 = vtanh.pop %v2695
        %v2760 = vtanh.pop %v2696
        %v2761 = vtanh.pop %v2697
        %v2762 = vtanh.pop %v2698
        %v2763 = vtanh.pop %v2699
        %v2764 = vtanh.pop %v2700
        %v2765 = vtanh.pop %v2701
        %v2766 = vtanh.pop %v2702
        %v2767 = vtanh.pop %v2703
        %v2768 = vtanh.pop %v2704
        %v2769 = vtanh.pop %v2705
        %v2770 = vtanh.pop %v2706
        %v2771 = vtanh.pop %v2707
        %v2772 = vtanh.pop %v2708
        %v2773 = vtanh.pop %v2709
        %v2774 = vtanh.pop %v2710
        %v2775 = vtanh.pop %v2711
        %v2776 = vtanh.pop %v2712
        %v2777 = vtanh.pop %v2713
        %v2778 = vtanh.pop %v2714
        %v2779 = vtanh.pop %v2715
        %v2780 = vtanh.pop %v2716
        %v2781 = vtanh.pop %v2717
        %v2782 = vtanh.pop %v2718
        %v2783 = vtanh.pop %v2719
        %v2784 = vtanh.pop %v2720
        %v2785 = vtanh.pop %v2721
        %v2786 = vtanh.pop %v2722
        %v2787 = vtanh.pop %v2723
        %v2788 = vtanh.pop %v2724
        %v2789 = vtanh.pop %v2725
        %v2790 = vtanh.pop %v2726
        %v2791 = vtanh.pop %v2727
        %v2792 = vtanh.pop %v2728
        %v2793 = vtanh.pop %v2729
        %v2794 = vtanh.pop %v2730
        %v2795 = vtanh.pop %v2731
        %v2796 = vtanh.pop %v2732
        %v2797 = vld [vmem:[%s3] sm:$0xff]
        %v2798 = vld [vmem:[%s3 + $0x8] sm:$0xff]
        %v2799 = vld [vmem:[%s3 + $0x10] sm:$0xff]
        %v2800 = vld [vmem:[%s3 + $0x18] sm:$0xff]
        %v2801 = vld [vmem:[%s3 + $0x20] sm:$0xff]
        %v2802 = vld [vmem:[%s3 + $0x28] sm:$0xff]
        %v2803 = vld [vmem:[%s3 + $0x30] sm:$0xff]
        %v2804 = vld [vmem:[%s3 + $0x38] sm:$0xff]
        %v2805 = vld [vmem:[%s3 + $0x40] sm:$0xff]
        %v2806 = vld [vmem:[%s3 + $0x48] sm:$0xff]
        %v2807 = vld [vmem:[%s3 + $0x50] sm:$0xff]
        %v2808 = vld [vmem:[%s3 + $0x58] sm:$0xff]
        %v2809 = vld [vmem:[%s3 + $0x60] sm:$0xff]
        %v2810 = vld [vmem:[%s3 + $0x68] sm:$0xff]
        %v2811 = vld [vmem:[%s3 + $0x70] sm:$0xff]
        %v2812 = vld [vmem:[%s3 + $0x78] sm:$0xff]
        %v2813 = vld [vmem:[%s3 + $0x80] sm:$0xff]
        %v2814 = vld [vmem:[%s3 + $0x88] sm:$0xff]
        %v2815 = vld [vmem:[%s3 + $0x90] sm:$0xff]
        %v2816 = vld [vmem:[%s3 + $0x98] sm:$0xff]
        %v2817 = vld [vmem:[%s3 + $0xa0] sm:$0xff]
        %v2818 = vld [vmem:[%s3 + $0xa8] sm:$0xff]
        %v2819 = vld [vmem:[%s3 + $0xb0] sm:$0xff]
        %v2820 = vld [vmem:[%s3 + $0xb8] sm:$0xff]
        %v2821 = vld [vmem:[%s3 + $0xc0] sm:$0xff]
        %v2822 = vld [vmem:[%s3 + $0xc8] sm:$0xff]
        %v2823 = vld [vmem:[%s3 + $0xd0] sm:$0xff]
        %v2824 = vld [vmem:[%s3 + $0xd8] sm:$0xff]
        %vm2825 = vcmask 1014784
        %v2827 = vsel %vm2825, %v2798, 0
        %v2830 = vsel %vm2825, %v2800, 0
        %v2833 = vsel %vm2825, %v2802, 0
        %v2836 = vsel %vm2825, %v2804, 0
        %v2839 = vsel %vm2825, %v2806, 0
        %v2842 = vsel %vm2825, %v2808, 0
        %v2845 = vsel %vm2825, %v2810, 0
        %v2848 = vsel %vm2825, %v2812, 0
        %v2851 = vsel %vm2825, %v2814, 0
        %v2854 = vsel %vm2825, %v2816, 0
        %v2857 = vsel %vm2825, %v2818, 0
        %v2860 = vsel %vm2825, %v2820, 0
        %v2863 = vsel %vm2825, %v2822, 0
        %v2866 = vsel %vm2825, %v2824, 0
        %vm2868 = vcmask 1043456
        %v2870 = vsel %vm2868, %v2795, 0
        %v2873 = vsel %vm2868, %v2796, 0
        %2875 = vmatprep.subr.mxu0 %v2734
        %2876 = vmatpush1.msra.mxu0 %v2733
        %2877 = vmatprep.subr.mxu0 %v2736
        %2878 = vmatpush1.msra.mxu0 %v2735
        %2879 = vmatprep.subr.mxu0 %v2738
        %2880 = vmatpush1.msra.mxu0 %v2737
        %2881 = vmatprep.subr.mxu0 %v2740
        %2882 = vmatpush1.msra.mxu0 %v2739
        %2883 = vmatprep.subr.mxu0 %v2742
        %2884 = vmatpush1.msra.mxu0 %v2741
        %2885 = vmatprep.subr.mxu0 %v2744
        %2886 = vmatpush1.msra.mxu0 %v2743
        %2887 = vmatprep.subr.mxu0 %v2746
        %2888 = vmatpush1.msra.mxu0 %v2745
        %2889 = vmatprep.subr.mxu0 %v2748
        %2890 = vmatpush1.msra.mxu0 %v2747
        %2891 = vmatprep.subr.mxu0 %v2750
        %2892 = vmatpush1.msra.mxu0 %v2749
        %2893 = vmatprep.subr.mxu0 %v2752
        %2894 = vmatpush1.msra.mxu0 %v2751
        %2895 = vmatprep.subr.mxu0 %v2754
        %2896 = vmatpush1.msra.mxu0 %v2753
        %2897 = vmatprep.subr.mxu0 %v2756
        %2898 = vmatpush1.msra.mxu0 %v2755
        %2899 = vmatprep.subr.mxu0 %v2758
        %2900 = vmatpush1.msra.mxu0 %v2757
        %2901 = vmatprep.subr.mxu0 %v2760
        %2902 = vmatpush1.msra.mxu0 %v2759
        %2903 = vmatprep.subr.mxu0 %v2762
        %2904 = vmatpush1.msra.mxu0 %v2761
        %2905 = vmatprep.subr.mxu0 %v2764
        %2906 = vmatpush1.msra.mxu0 %v2763
        %2907 = vmatprep.subr.mxu0 %v2766
        %2908 = vmatpush1.msra.mxu0 %v2765
        %2909 = vmatprep.subr.mxu0 %v2768
        %2910 = vmatpush1.msra.mxu0 %v2767
        %2911 = vmatprep.subr.mxu0 %v2770
        %2912 = vmatpush1.msra.mxu0 %v2769
        %2913 = vmatprep.subr.mxu0 %v2772
        %2914 = vmatpush1.msra.mxu0 %v2771
        %2915 = vmatprep.subr.mxu0 %v2774
        %2916 = vmatpush1.msra.mxu0 %v2773
        %2917 = vmatprep.subr.mxu0 %v2776
        %2918 = vmatpush1.msra.mxu0 %v2775
        %2919 = vmatprep.subr.mxu0 %v2778
        %2920 = vmatpush1.msra.mxu0 %v2777
        %2921 = vmatprep.subr.mxu0 %v2780
        %2922 = vmatpush1.msra.mxu0 %v2779
        %2923 = vmatprep.subr.mxu0 %v2782
        %2924 = vmatpush1.msra.mxu0 %v2781
        %2925 = vmatprep.subr.mxu0 %v2784
        %2926 = vmatpush1.msra.mxu0 %v2783
        %2927 = vmatprep.subr.mxu0 %v2786
        %2928 = vmatpush1.msra.mxu0 %v2785
        %2929 = vmatprep.subr.mxu0 %v2788
        %2930 = vmatpush1.msra.mxu0 %v2787
        %2931 = vmatprep.subr.mxu0 %v2790
        %2932 = vmatpush1.msra.mxu0 %v2789
        %2933 = vmatprep.subr.mxu0 %v2792
        %2934 = vmatpush1.msra.mxu0 %v2791
        %2935 = vmatprep.subr.mxu0 %v2794
        %2936 = vmatpush1.msra.mxu0 %v2793
        %2937 = vmatprep.subr.mxu0 %v2873
        %2938 = vmatpush1.msra.mxu0 %v2870
        %2939 = vmatprep.mubr.f32.mxu0 %v2827
        %2940 = vmatmul.mubr.f32.gmra.mrb[0].mxu0 %v2797
        %v2941 = vpop.f32.mrb[0].mxu0
        %v2942 = vadd.f32 0.0, %v2941
        %v2943 = vpop.f32.mrb[0].mxu0
        %v2944 = vadd.f32 0.0, %v2943
        %2945 = vmatprep.mubr.f32.mxu0 %v2830
        %2946 = vmatmul.mubr.f32.gmra.mrb[0].mxu0 %v2799
        %v2947 = vpop.f32.mrb[0].mxu0
        %v2948 = vadd.f32 0.0, %v2947
        %v2949 = vpop.f32.mrb[0].mxu0
        %v2950 = vadd.f32 0.0, %v2949
        %2951 = vmatprep.mubr.f32.mxu0 %v2833
        %2952 = vmatmul.mubr.f32.gmra.mrb[0].mxu0 %v2801
        %v2953 = vpop.f32.mrb[0].mxu0
        %v2954 = vadd.f32 0.0, %v2953
        %v2955 = vpop.f32.mrb[0].mxu0
        %v2956 = vadd.f32 0.0, %v2955
        %2957 = vmatprep.mubr.f32.mxu0 %v2836
        %2958 = vmatmul.mubr.f32.gmra.mrb[0].mxu0 %v2803
        %v2959 = vpop.f32.mrb[0].mxu0
        %v2960 = vadd.f32 0.0, %v2959
        %v2961 = vpop.f32.mrb[0].mxu0
        %v2962 = vadd.f32 0.0, %v2961
        %2963 = vmatprep.mubr.f32.mxu0 %v2839
        %2964 = vmatmul.mubr.f32.gmra.mrb[0].mxu0 %v2805
        %v2965 = vpop.f32.mrb[0].mxu0
        %v2966 = vadd.f32 0.0, %v2965
        %v2967 = vpop.f32.mrb[0].mxu0
        %v2968 = vadd.f32 0.0, %v2967
        %2969 = vmatprep.mubr.f32.mxu0 %v2842
        %2970 = vmatmul.mubr.f32.gmra.mrb[0].mxu0 %v2807
        %v2971 = vpop.f32.mrb[0].mxu0
        %v2972 = vadd.f32 0.0, %v2971
        %v2973 = vpop.f32.mrb[0].mxu0
        %v2974 = vadd.f32 0.0, %v2973
        %2975 = vmatprep.mubr.f32.mxu0 %v2845
        %2976 = vmatmul.mubr.f32.gmra.mrb[0].mxu0 %v2809
        %v2977 = vpop.f32.mrb[0].mxu0
        %v2978 = vadd.f32 0.0, %v2977
        %v2979 = vpop.f32.mrb[0].mxu0
        %v2980 = vadd.f32 0.0, %v2979
        %2981 = vmatprep.mubr.f32.mxu0 %v2848
        %2982 = vmatmul.mubr.f32.gmra.mrb[0].mxu0 %v2811
        %v2983 = vpop.f32.mrb[0].mxu0
        %v2984 = vadd.f32 0.0, %v2983
        %v2985 = vpop.f32.mrb[0].mxu0
        %v2986 = vadd.f32 0.0, %v2985
        %2987 = vmatprep.mubr.f32.mxu0 %v2851
        %2988 = vmatmul.mubr.f32.gmra.mrb[0].mxu0 %v2813
        %v2989 = vpop.f32.mrb[0].mxu0
        %v2990 = vadd.f32 0.0, %v2989
        %v2991 = vpop.f32.mrb[0].mxu0
        %v2992 = vadd.f32 0.0, %v2991
        %2993 = vmatprep.mubr.f32.mxu0 %v2854
        %2994 = vmatmul.mubr.f32.gmra.mrb[0].mxu0 %v2815
        %v2995 = vpop.f32.mrb[0].mxu0
        %v2996 = vadd.f32 0.0, %v2995
        %v2997 = vpop.f32.mrb[0].mxu0
        %v2998 = vadd.f32 0.0, %v2997
        %2999 = vmatprep.mubr.f32.mxu0 %v2857
        %3000 = vmatmul.mubr.f32.gmra.mrb[0].mxu0 %v2817
        %v3001 = vpop.f32.mrb[0].mxu0
        %v3002 = vadd.f32 0.0, %v3001
        %v3003 = vpop.f32.mrb[0].mxu0
        %v3004 = vadd.f32 0.0, %v3003
        %3005 = vmatprep.mubr.f32.mxu0 %v2860
        %3006 = vmatmul.mubr.f32.gmra.mrb[0].mxu0 %v2819
        %v3007 = vpop.f32.mrb[0].mxu0
        %v3008 = vadd.f32 0.0, %v3007
        %v3009 = vpop.f32.mrb[0].mxu0
        %v3010 = vadd.f32 0.0, %v3009
        %3011 = vmatprep.mubr.f32.mxu0 %v2863
        %3012 = vmatmul.mubr.f32.gmra.mrb[0].mxu0 %v2821
        %v3013 = vpop.f32.mrb[0].mxu0
        %v3014 = vadd.f32 0.0, %v3013
        %v3015 = vpop.f32.mrb[0].mxu0
        %v3016 = vadd.f32 0.0, %v3015
        %3017 = vmatprep.mubr.f32.mxu0 %v2866
        %3018 = vmatmul.mubr.f32.gmra.mrb[0].mxu0 %v2823
        %v3019 = vpop.f32.mrb[0].mxu0
        %v3020 = vadd.f32 0.0, %v3019
        %v3021 = vpop.f32.mrb[0].mxu0
        %v3022 = vadd.f32 0.0, %v3021
        %3023 = vdwg.mxu0
        %v3024 = vld [vmem:[%s4] sm:$0xff]
        %v3025 = vld [vmem:[%s4 + $0x8] sm:$0xff]
        %v3026 = vld [vmem:[%s4 + $0x10] sm:$0xff]
        %v3027 = vld [vmem:[%s4 + $0x18] sm:$0xff]
        %v3028 = vld [vmem:[%s4 + $0x20] sm:$0xff]
        %v3029 = vld [vmem:[%s4 + $0x28] sm:$0xff]
        %v3030 = vld [vmem:[%s4 + $0x30] sm:$0xff]
        %v3031 = vld [vmem:[%s4 + $0x38] sm:$0xff]
        %v3032 = vld [vmem:[%s4 + $0x40] sm:$0xff]
        %v3033 = vld [vmem:[%s4 + $0x48] sm:$0xff]
        %v3034 = vld [vmem:[%s4 + $0x50] sm:$0xff]
        %v3035 = vld [vmem:[%s4 + $0x58] sm:$0xff]
        %v3036 = vld [vmem:[%s4 + $0x60] sm:$0xff]
        %v3037 = vld [vmem:[%s4 + $0x68] sm:$0xff]
        %v3038 = vld [vmem:[%s4 + $0x70] sm:$0xff]
        %v3039 = vld [vmem:[%s4 + $0x78] sm:$0xff]
        %v3040 = vld [vmem:[%s4 + $0x80] sm:$0xff]
        %v3041 = vld [vmem:[%s4 + $0x88] sm:$0xff]
        %v3042 = vld [vmem:[%s4 + $0x90] sm:$0xff]
        %v3043 = vld [vmem:[%s4 + $0x98] sm:$0xff]
        %v3044 = vld [vmem:[%s4 + $0xa0] sm:$0xff]
        %vm3045 = vcmask 326656
        %v3047 = vsel %vm3045, %v2944, 0
        %v3050 = vsel %vm3045, %v2950, 0
        %v3053 = vsel %vm3045, %v2956, 0
        %v3056 = vsel %vm3045, %v2962, 0
        %v3059 = vsel %vm3045, %v2968, 0
        %v3062 = vsel %vm3045, %v2974, 0
        %v3065 = vsel %vm3045, %v2980, 0
        %v3068 = vsel %vm3045, %v2986, 0
        %v3071 = vsel %vm3045, %v2992, 0
        %v3074 = vsel %vm3045, %v2998, 0
        %v3077 = vsel %vm3045, %v3004, 0
        %v3080 = vsel %vm3045, %v3010, 0
        %v3083 = vsel %vm3045, %v3016, 0
        %v3086 = vsel %vm3045, %v3022, 0
        %3088 = vmatprep.subr.mxu0 0.0
        %3089 = vmatpush1.msra.mxu0 %v3024
        %3090 = vmatprep.subr.mxu0 0.0
        %3091 = vmatpush1.msra.mxu0 %v3025
        %3092 = vmatprep.subr.mxu0 0.0
        %3093 = vmatpush1.msra.mxu0 %v3026
        %3094 = vmatprep.subr.mxu0 0.0
        %3095 = vmatpush1.msra.mxu0 %v3027
        %3096 = vmatprep.subr.mxu0 0.0
        %3097 = vmatpush1.msra.mxu0 %v3028
        %3098 = vmatprep.subr.mxu0 0.0
        %3099 = vmatpush1.msra.mxu0 %v3029
        %3100 = vmatprep.subr.mxu0 0.0
        %3101 = vmatpush1.msra.mxu0 %v3030
        %3102 = vmatprep.subr.mxu0 0.0
        %3103 = vmatpush1.msra.mxu0 %v3031
        %3104 = vmatprep.subr.mxu0 0.0
        %3105 = vmatpush1.msra.mxu0 %v3032
        %3106 = vmatprep.subr.mxu0 0.0
        %3107 = vmatpush1.msra.mxu0 %v3033
        %3108 = vmatprep.subr.mxu0 0.0
        %3109 = vmatpush1.msra.mxu0 %v3034
        %3110 = vmatprep.subr.mxu0 0.0
        %3111 = vmatpush1.msra.mxu0 %v3035
        %3112 = vmatprep.subr.mxu0 0.0
        %3113 = vmatpush1.msra.mxu0 %v3036
        %3114 = vmatprep.subr.mxu0 0.0
        %3115 = vmatpush1.msra.mxu0 %v3037
        %3116 = vmatprep.subr.mxu0 0.0
        %3117 = vmatpush1.msra.mxu0 %v3038
        %3118 = vmatprep.subr.mxu0 0.0
        %3119 = vmatpush1.msra.mxu0 %v3039
        %3120 = vmatprep.subr.mxu0 0.0
        %3121 = vmatpush1.msra.mxu0 %v3040
        %3122 = vmatprep.subr.mxu0 0.0
        %3123 = vmatpush1.msra.mxu0 %v3041
        %3124 = vmatprep.subr.mxu0 0.0
        %3125 = vmatpush1.msra.mxu0 %v3042
        %3126 = vmatprep.subr.mxu0 0.0
        %3127 = vmatpush1.msra.mxu0 %v3043
        %3128 = vmatprep.subr.mxu0 0.0
        %3129 = vmatpush1.msra.mxu0 %v3044
        %3130 = vmatprep.subr.mxu0 0.0
        %3131 = vmatpush1.msra.mxu0 0.0
        %3132 = vmatprep.subr.mxu0 0.0
        %3133 = vmatpush1.msra.mxu0 0.0
        %3134 = vmatprep.subr.mxu0 0.0
        %3135 = vmatpush1.msra.mxu0 0.0
        %3136 = vmatprep.subr.mxu0 0.0
        %3137 = vmatpush1.msra.mxu0 0.0
        %3138 = vmatprep.subr.mxu0 0.0
        %3139 = vmatpush1.msra.mxu0 0.0
        %3140 = vmatprep.subr.mxu0 0.0
        %3141 = vmatpush1.msra.mxu0 0.0
        %3142 = vmatprep.subr.mxu0 0.0
        %3143 = vmatpush1.msra.mxu0 0.0
        %3144 = vmatprep.subr.mxu0 0.0
        %3145 = vmatpush1.msra.mxu0 0.0
        %3146 = vmatprep.subr.mxu0 0.0
        %3147 = vmatpush1.msra.mxu0 0.0
        %3148 = vmatprep.subr.mxu0 0.0
        %3149 = vmatpush1.msra.mxu0 0.0
        %3150 = vmatprep.subr.mxu0 0.0
        %3151 = vmatpush1.msra.mxu0 0.0
        %3152 = vmatprep.mubr.f32.mxu0 %v3047
        %3153 = vmatmul.mubr.f32.gmra.mrb[0].mxu0 %v2942
        %v3154 = vpop.f32.mrb[0].mxu0
        %v3155 = vadd.f32 0.0, %v3154
        %v3156 = vpop.f32.mrb[0].mxu0
        %3157 = vmatprep.mubr.f32.mxu0 %v3050
        %3158 = vmatmul.mubr.f32.gmra.mrb[0].mxu0 %v2948
        %v3159 = vpop.f32.mrb[0].mxu0
        %v3160 = vadd.f32 0.0, %v3159
        %v3161 = vpop.f32.mrb[0].mxu0
        %3162 = vmatprep.mubr.f32.mxu0 %v3053
        %3163 = vmatmul.mubr.f32.gmra.mrb[0].mxu0 %v2954
        %v3164 = vpop.f32.mrb[0].mxu0
        %v3165 = vadd.f32 0.0, %v3164
        %v3166 = vpop.f32.mrb[0].mxu0
        %3167 = vmatprep.mubr.f32.mxu0 %v3056
        %3168 = vmatmul.mubr.f32.gmra.mrb[0].mxu0 %v2960
        %v3169 = vpop.f32.mrb[0].mxu0
        %v3170 = vadd.f32 0.0, %v3169
        %v3171 = vpop.f32.mrb[0].mxu0
        %3172 = vmatprep.mubr.f32.mxu0 %v3059
        %3173 = vmatmul.mubr.f32.gmra.mrb[0].mxu0 %v2966
        %v3174 = vpop.f32.mrb[0].mxu0
        %v3175 = vadd.f32 0.0, %v3174
        %v3176 = vpop.f32.mrb[0].mxu0
        %3177 = vmatprep.mubr.f32.mxu0 %v3062
        %3178 = vmatmul.mubr.f32.gmra.mrb[0].mxu0 %v2972
        %v3179 = vpop.f32.mrb[0].mxu0
        %v3180 = vadd.f32 0.0, %v3179
        %v3181 = vpop.f32.mrb[0].mxu0
        %3182 = vmatprep.mubr.f32.mxu0 %v3065
        %3183 = vmatmul.mubr.f32.gmra.mrb[0].mxu0 %v2978
        %v3184 = vpop.f32.mrb[0].mxu0
        %v3185 = vadd.f32 0.0, %v3184
        %v3186 = vpop.f32.mrb[0].mxu0
        %3187 = vmatprep.mubr.f32.mxu0 %v3068
        %3188 = vmatmul.mubr.f32.gmra.mrb[0].mxu0 %v2984
        %v3189 = vpop.f32.mrb[0].mxu0
        %v3190 = vadd.f32 0.0, %v3189
        %v3191 = vpop.f32.mrb[0].mxu0
        %3192 = vmatprep.mubr.f32.mxu0 %v3071
        %3193 = vmatmul.mubr.f32.gmra.mrb[0].mxu0 %v2990
        %v3194 = vpop.f32.mrb[0].mxu0
        %v3195 = vadd.f32 0.0, %v3194
        %v3196 = vpop.f32.mrb[0].mxu0
        %3197 = vmatprep.mubr.f32.mxu0 %v3074
        %3198 = vmatmul.mubr.f32.gmra.mrb[0].mxu0 %v2996
        %v3199 = vpop.f32.mrb[0].mxu0
        %v3200 = vadd.f32 0.0, %v3199
        %v3201 = vpop.f32.mrb[0].mxu0
        %3202 = vmatprep.mubr.f32.mxu0 %v3077
        %3203 = vmatmul.mubr.f32.gmra.mrb[0].mxu0 %v3002
        %v3204 = vpop.f32.mrb[0].mxu0
        %v3205 = vadd.f32 0.0, %v3204
        %v3206 = vpop.f32.mrb[0].mxu0
        %3207 = vmatprep.mubr.f32.mxu0 %v3080
        %3208 = vmatmul.mubr.f32.gmra.mrb[0].mxu0 %v3008
        %v3209 = vpop.f32.mrb[0].mxu0
        %v3210 = vadd.f32 0.0, %v3209
        %v3211 = vpop.f32.mrb[0].mxu0
        %3212 = vmatprep.mubr.f32.mxu0 %v3083
        %3213 = vmatmul.mubr.f32.gmra.mrb[0].mxu0 %v3014
        %v3214 = vpop.f32.mrb[0].mxu0
        %v3215 = vadd.f32 0.0, %v3214
        %v3216 = vpop.f32.mrb[0].mxu0
        %3217 = vmatprep.mubr.f32.mxu0 %v3086
        %3218 = vmatmul.mubr.f32.gmra.mrb[0].mxu0 %v3020
        %v3219 = vpop.f32.mrb[0].mxu0
        %v3220 = vadd.f32 0.0, %v3219
        %v3221 = vpop.f32.mrb[0].mxu0
        %3222 = vdwg.mxu0
        %vm3223 = vcmask 687104
        %3224 = vst.msk [vmem:[#allocation2] sm:$0xff] %vm3223, %v3155
        %3225 = vst.msk [vmem:[#allocation2 + $0x8] sm:$0xff] %vm3223, %v3160
        %3226 = vst.msk [vmem:[#allocation2 + $0x10] sm:$0xff] %vm3223, %v3165
        %3227 = vst.msk [vmem:[#allocation2 + $0x18] sm:$0xff] %vm3223, %v3170
        %3228 = vst.msk [vmem:[#allocation2 + $0x20] sm:$0xff] %vm3223, %v3175
        %3229 = vst.msk [vmem:[#allocation2 + $0x28] sm:$0xff] %vm3223, %v3180
        %3230 = vst.msk [vmem:[#allocation2 + $0x30] sm:$0xff] %vm3223, %v3185
        %3231 = vst.msk [vmem:[#allocation2 + $0x38] sm:$0xff] %vm3223, %v3190
        %3232 = vst.msk [vmem:[#allocation2 + $0x40] sm:$0xff] %vm3223, %v3195
        %3233 = vst.msk [vmem:[#allocation2 + $0x48] sm:$0xff] %vm3223, %v3200
        %3234 = vst.msk [vmem:[#allocation2 + $0x50] sm:$0xff] %vm3223, %v3205
        %3235 = vst.msk [vmem:[#allocation2 + $0x58] sm:$0xff] %vm3223, %v3210
        %3236 = vst.msk [vmem:[#allocation2 + $0x60] sm:$0xff] %vm3223, %v3215
        %3237 = vst.msk [vmem:[#allocation2 + $0x68] sm:$0xff] %vm3223, %v3220
        %v3238 = vld [vmem:[#allocation2] sm:$0xff]
        %v3239 = vld [vmem:[#allocation2 + $0x8] sm:$0xff]
        %v3240 = vld [vmem:[#allocation2 + $0x10] sm:$0xff]
        %v3241 = vld [vmem:[#allocation2 + $0x18] sm:$0xff]
        %v3242 = vld [vmem:[#allocation2 + $0x20] sm:$0xff]
        %v3243 = vld [vmem:[#allocation2 + $0x28] sm:$0xff]
        %v3244 = vld [vmem:[#allocation2 + $0x30] sm:$0xff]
        %v3245 = vld [vmem:[#allocation2 + $0x38] sm:$0xff]
        %v3246 = vld [vmem:[#allocation2 + $0x40] sm:$0xff]
        %v3247 = vld [vmem:[#allocation2 + $0x48] sm:$0xff]
        %v3248 = vld [vmem:[#allocation2 + $0x50] sm:$0xff]
        %v3249 = vld [vmem:[#allocation2 + $0x58] sm:$0xff]
        %v3250 = vld [vmem:[#allocation2 + $0x60] sm:$0xff]
        %v3251 = vld [vmem:[#allocation2 + $0x68] sm:$0xf]
        %v3252 = vld [vmem:[%s5] sm:$0xff]
        %v3253 = vld [vmem:[%s5 + $0x8] sm:$0xff]
        %v3254 = vld [vmem:[%s5 + $0x10] sm:$0xff]
        %v3255 = vld [vmem:[%s5 + $0x18] sm:$0xff]
        %v3256 = vld [vmem:[%s5 + $0x20] sm:$0xff]
        %v3257 = vld [vmem:[%s5 + $0x28] sm:$0xff]
        %v3258 = vld [vmem:[%s5 + $0x30] sm:$0xff]
        %v3259 = vld [vmem:[%s5 + $0x38] sm:$0xff]
        %v3260 = vld [vmem:[%s5 + $0x40] sm:$0xff]
        %v3261 = vld [vmem:[%s5 + $0x48] sm:$0xff]
        %v3262 = vld [vmem:[%s5 + $0x50] sm:$0xff]
        %v3263 = vld [vmem:[%s5 + $0x58] sm:$0xff]
        %v3264 = vld [vmem:[%s5 + $0x60] sm:$0xff]
        %v3265 = vld [vmem:[%s5 + $0x68] sm:$0xff]
        %v3266 = vld [vmem:[%s5 + $0x70] sm:$0xff]
        %v3267 = vld [vmem:[%s5 + $0x78] sm:$0xff]
        %v3268 = vld [vmem:[%s5 + $0x80] sm:$0xff]
        %v3269 = vld [vmem:[%s5 + $0x88] sm:$0xff]
        %v3270 = vld [vmem:[%s5 + $0x90] sm:$0xff]
        %v3271 = vld [vmem:[%s5 + $0x98] sm:$0xff]
        %v3272 = vld [vmem:[%s5 + $0xa0] sm:$0xf]
        %v3273 = vld [vmem:[%s5 + $0xa8] sm:$0xf]
        %v3274 = vld [vmem:[#allocation2 + $0x1] sm:$0xff]
        %v3275 = vld [vmem:[#allocation2 + $0x9] sm:$0xff]
        %v3276 = vld [vmem:[#allocation2 + $0x11] sm:$0xff]
        %v3277 = vld [vmem:[#allocation2 + $0x19] sm:$0xff]
        %v3278 = vld [vmem:[#allocation2 + $0x21] sm:$0xff]
        %v3279 = vld [vmem:[#allocation2 + $0x29] sm:$0xff]
        %v3280 = vld [vmem:[#allocation2 + $0x31] sm:$0xff]
        %v3281 = vld [vmem:[#allocation2 + $0x39] sm:$0xff]
        %v3282 = vld [vmem:[#allocation2 + $0x41] sm:$0xff]
        %v3283 = vld [vmem:[#allocation2 + $0x49] sm:$0xff]
        %v3284 = vld [vmem:[#allocation2 + $0x51] sm:$0xff]
        %v3285 = vld [vmem:[#allocation2 + $0x59] sm:$0xff]
        %v3286 = vld [vmem:[#allocation2 + $0x61] sm:$0xff]
        %v3287 = vld [vmem:[#allocation2 + $0x69] sm:$0xf]
        %s3288 = scalar_lea.vmem %s5, 176
        %v3289 = vld [vmem:[%s3288] sm:$0xff]
        %v3290 = vld [vmem:[%s3288 + $0x8] sm:$0xff]
        %v3291 = vld [vmem:[%s3288 + $0x10] sm:$0xff]
        %v3292 = vld [vmem:[%s3288 + $0x18] sm:$0xff]
        %v3293 = vld [vmem:[%s3288 + $0x20] sm:$0xff]
        %v3294 = vld [vmem:[%s3288 + $0x28] sm:$0xff]
        %v3295 = vld [vmem:[%s3288 + $0x30] sm:$0xff]
        %v3296 = vld [vmem:[%s3288 + $0x38] sm:$0xff]
        %v3297 = vld [vmem:[%s3288 + $0x40] sm:$0xff]
        %v3298 = vld [vmem:[%s3288 + $0x48] sm:$0xff]
        %v3299 = vld [vmem:[%s3288 + $0x50] sm:$0xff]
        %v3300 = vld [vmem:[%s3288 + $0x58] sm:$0xff]
        %v3301 = vld [vmem:[%s3288 + $0x60] sm:$0xff]
        %v3302 = vld [vmem:[%s3288 + $0x68] sm:$0xff]
        %v3303 = vld [vmem:[%s3288 + $0x70] sm:$0xff]
        %v3304 = vld [vmem:[%s3288 + $0x78] sm:$0xff]
        %v3305 = vld [vmem:[%s3288 + $0x80] sm:$0xff]
        %v3306 = vld [vmem:[%s3288 + $0x88] sm:$0xff]
        %v3307 = vld [vmem:[%s3288 + $0x90] sm:$0xff]
        %v3308 = vld [vmem:[%s3288 + $0x98] sm:$0xff]
        %v3309 = vld [vmem:[%s3288 + $0xa0] sm:$0xf]
        %v3310 = vld [vmem:[%s3288 + $0xa8] sm:$0xf]
        %v3312 = vsel %vm3223, %v3274, 0
        %v3315 = vsel %vm3223, %v3275, 0
        %v3318 = vsel %vm3223, %v3276, 0
        %v3321 = vsel %vm3223, %v3277, 0
        %v3324 = vsel %vm3223, %v3278, 0
        %v3327 = vsel %vm3223, %v3279, 0
        %v3330 = vsel %vm3223, %v3280, 0
        %v3333 = vsel %vm3223, %v3281, 0
        %v3336 = vsel %vm3223, %v3282, 0
        %v3339 = vsel %vm3223, %v3283, 0
        %v3342 = vsel %vm3223, %v3284, 0
        %v3345 = vsel %vm3223, %v3285, 0
        %v3348 = vsel %vm3223, %v3286, 0
        %v3351 = vsel %vm3223, %v3287, 0
        %v3354 = vsel %vm2868, %v3309, 0
        %v3357 = vsel %vm2868, %v3310, 0
        %3359 = vmatprep.subr.mxu0 %v3290
        %3360 = vmatpush1.msra.mxu0 %v3289
        %3361 = vmatprep.subr.mxu0 %v3292
        %3362 = vmatpush1.msra.mxu0 %v3291
        %3363 = vmatprep.subr.mxu0 %v3294
        %3364 = vmatpush1.msra.mxu0 %v3293
        %3365 = vmatprep.subr.mxu0 %v3296
        %3366 = vmatpush1.msra.mxu0 %v3295
        %3367 = vmatprep.subr.mxu0 %v3298
        %3368 = vmatpush1.msra.mxu0 %v3297
        %3369 = vmatprep.subr.mxu0 %v3300
        %3370 = vmatpush1.msra.mxu0 %v3299
        %3371 = vmatprep.subr.mxu0 %v3302
        %3372 = vmatpush1.msra.mxu0 %v3301
        %3373 = vmatprep.subr.mxu0 %v3304
        %3374 = vmatpush1.msra.mxu0 %v3303
        %3375 = vmatprep.subr.mxu0 %v3306
        %3376 = vmatpush1.msra.mxu0 %v3305
        %3377 = vmatprep.subr.mxu0 %v3308
        %3378 = vmatpush1.msra.mxu0 %v3307
        %3379 = vmatprep.subr.mxu0 %v3357
        %3380 = vmatpush1.msra.mxu0 %v3354
        %3381 = vmatprep.subr.mxu0 0.0
        %3382 = vmatpush1.msra.mxu0 0.0
        %3383 = vmatprep.subr.mxu0 0.0
        %3384 = vmatpush1.msra.mxu0 0.0
        %3385 = vmatprep.subr.mxu0 0.0
        %3386 = vmatpush1.msra.mxu0 0.0
        %3387 = vmatprep.subr.mxu0 0.0
        %3388 = vmatpush1.msra.mxu0 0.0
        %3389 = vmatprep.subr.mxu0 0.0
        %3390 = vmatpush1.msra.mxu0 0.0
        %3391 = vmatprep.subr.mxu0 0.0
        %3392 = vmatpush1.msra.mxu0 0.0
        %3393 = vmatprep.subr.mxu0 0.0
        %3394 = vmatpush1.msra.mxu0 0.0
        %3395 = vmatprep.subr.mxu0 0.0
        %3396 = vmatpush1.msra.mxu0 0.0
        %3397 = vmatprep.subr.mxu0 0.0
        %3398 = vmatpush1.msra.mxu0 0.0
        %3399 = vmatprep.subr.mxu0 0.0
        %3400 = vmatpush1.msra.mxu0 0.0
        %3401 = vmatprep.subr.mxu0 0.0
        %3402 = vmatpush1.msra.mxu0 0.0
        %3403 = vmatprep.subr.mxu0 0.0
        %3404 = vmatpush1.msra.mxu0 0.0
        %3405 = vmatprep.subr.mxu0 0.0
        %3406 = vmatpush1.msra.mxu0 0.0
        %3407 = vmatprep.subr.mxu0 0.0
        %3408 = vmatpush1.msra.mxu0 0.0
        %3409 = vmatprep.subr.mxu0 0.0
        %3410 = vmatpush1.msra.mxu0 0.0
        %3411 = vmatprep.subr.mxu0 0.0
        %3412 = vmatpush1.msra.mxu0 0.0
        %3413 = vmatprep.subr.mxu0 0.0
        %3414 = vmatpush1.msra.mxu0 0.0
        %3415 = vmatprep.subr.mxu0 0.0
        %3416 = vmatpush1.msra.mxu0 0.0
        %3417 = vmatprep.subr.mxu0 0.0
        %3418 = vmatpush1.msra.mxu0 0.0
        %3419 = vmatprep.subr.mxu0 0.0
        %3420 = vmatpush1.msra.mxu0 0.0
        %3421 = vmatprep.subr.mxu0 0.0
        %3422 = vmatpush1.msra.mxu0 0.0
        %3423 = vmatprep.mubr.f32.mxu0 0.0
        %3424 = vmatmul.mubr.f32.gmra.mrb[0].mxu0 %v3312
        %v3425 = vpop.f32.mrb[0].mxu0
        %v3426 = vadd.f32 0.0, %v3425
        %v3427 = vpop.f32.mrb[0].mxu0
        %v3428 = vadd.f32 0.0, %v3427
        %3429 = vmatprep.mubr.f32.mxu0 0.0
        %3430 = vmatmul.mubr.f32.gmra.mrb[0].mxu0 %v3315
        %v3431 = vpop.f32.mrb[0].mxu0
        %v3432 = vadd.f32 0.0, %v3431
        %v3433 = vpop.f32.mrb[0].mxu0
        %v3434 = vadd.f32 0.0, %v3433
        %3435 = vmatprep.mubr.f32.mxu0 0.0
        %3436 = vmatmul.mubr.f32.gmra.mrb[0].mxu0 %v3318
        %v3437 = vpop.f32.mrb[0].mxu0
        %v3438 = vadd.f32 0.0, %v3437
        %v3439 = vpop.f32.mrb[0].mxu0
        %v3440 = vadd.f32 0.0, %v3439
        %3441 = vmatprep.mubr.f32.mxu0 0.0
        %3442 = vmatmul.mubr.f32.gmra.mrb[0].mxu0 %v3321
        %v3443 = vpop.f32.mrb[0].mxu0
        %v3444 = vadd.f32 0.0, %v3443
        %v3445 = vpop.f32.mrb[0].mxu0
        %v3446 = vadd.f32 0.0, %v3445
        %3447 = vmatprep.mubr.f32.mxu0 0.0
        %3448 = vmatmul.mubr.f32.gmra.mrb[0].mxu0 %v3324
        %v3449 = vpop.f32.mrb[0].mxu0
        %v3450 = vadd.f32 0.0, %v3449
        %v3451 = vpop.f32.mrb[0].mxu0
        %v3452 = vadd.f32 0.0, %v3451
        %3453 = vmatprep.mubr.f32.mxu0 0.0
        %3454 = vmatmul.mubr.f32.gmra.mrb[0].mxu0 %v3327
        %v3455 = vpop.f32.mrb[0].mxu0
        %v3456 = vadd.f32 0.0, %v3455
        %v3457 = vpop.f32.mrb[0].mxu0
        %v3458 = vadd.f32 0.0, %v3457
        %3459 = vmatprep.mubr.f32.mxu0 0.0
        %3460 = vmatmul.mubr.f32.gmra.mrb[0].mxu0 %v3330
        %v3461 = vpop.f32.mrb[0].mxu0
        %v3462 = vadd.f32 0.0, %v3461
        %v3463 = vpop.f32.mrb[0].mxu0
        %v3464 = vadd.f32 0.0, %v3463
        %3465 = vmatprep.mubr.f32.mxu0 0.0
        %3466 = vmatmul.mubr.f32.gmra.mrb[0].mxu0 %v3333
        %v3467 = vpop.f32.mrb[0].mxu0
        %v3468 = vadd.f32 0.0, %v3467
        %v3469 = vpop.f32.mrb[0].mxu0
        %v3470 = vadd.f32 0.0, %v3469
        %3471 = vmatprep.mubr.f32.mxu0 0.0
        %3472 = vmatmul.mubr.f32.gmra.mrb[0].mxu0 %v3336
        %v3473 = vpop.f32.mrb[0].mxu0
        %v3474 = vadd.f32 0.0, %v3473
        %v3475 = vpop.f32.mrb[0].mxu0
        %v3476 = vadd.f32 0.0, %v3475
        %3477 = vmatprep.mubr.f32.mxu0 0.0
        %3478 = vmatmul.mubr.f32.gmra.mrb[0].mxu0 %v3339
        %v3479 = vpop.f32.mrb[0].mxu0
        %v3480 = vadd.f32 0.0, %v3479
        %v3481 = vpop.f32.mrb[0].mxu0
        %v3482 = vadd.f32 0.0, %v3481
        %3483 = vmatprep.mubr.f32.mxu0 0.0
        %3484 = vmatmul.mubr.f32.gmra.mrb[0].mxu0 %v3342
        %v3485 = vpop.f32.mrb[0].mxu0
        %v3486 = vadd.f32 0.0, %v3485
        %v3487 = vpop.f32.mrb[0].mxu0
        %v3488 = vadd.f32 0.0, %v3487
        %3489 = vmatprep.mubr.f32.mxu0 0.0
        %3490 = vmatmul.mubr.f32.gmra.mrb[0].mxu0 %v3345
        %v3491 = vpop.f32.mrb[0].mxu0
        %v3492 = vadd.f32 0.0, %v3491
        %v3493 = vpop.f32.mrb[0].mxu0
        %v3494 = vadd.f32 0.0, %v3493
        %3495 = vmatprep.mubr.f32.mxu0 0.0
        %3496 = vmatmul.mubr.f32.gmra.mrb[0].mxu0 %v3348
        %v3497 = vpop.f32.mrb[0].mxu0
        %v3498 = vadd.f32 0.0, %v3497
        %v3499 = vpop.f32.mrb[0].mxu0
        %v3500 = vadd.f32 0.0, %v3499
        %3501 = vmatprep.mubr.f32.mxu0 0.0
        %3502 = vmatmul.mubr.f32.gmra.mrb[0].mxu0 %v3351
        %v3503 = vpop.f32.mrb[0].mxu0
        %v3504 = vadd.f32 0.0, %v3503
        %v3505 = vpop.f32.mrb[0].mxu0
        %v3506 = vadd.f32 0.0, %v3505
        %3507 = vdwg.mxu0
        %v3509 = vsel %vm3223, %v3238, 0
        %v3512 = vsel %vm3223, %v3239, 0
        %v3515 = vsel %vm3223, %v3240, 0
        %v3518 = vsel %vm3223, %v3241, 0
        %v3521 = vsel %vm3223, %v3242, 0
        %v3524 = vsel %vm3223, %v3243, 0
        %v3527 = vsel %vm3223, %v3244, 0
        %v3530 = vsel %vm3223, %v3245, 0
        %v3533 = vsel %vm3223, %v3246, 0
        %v3536 = vsel %vm3223, %v3247, 0
        %v3539 = vsel %vm3223, %v3248, 0
        %v3542 = vsel %vm3223, %v3249, 0
        %v3545 = vsel %vm3223, %v3250, 0
        %v3548 = vsel %vm3223, %v3251, 0
        %v3551 = vsel %vm2868, %v3272, 0
        %v3554 = vsel %vm2868, %v3273, 0
        %3556 = vmatprep.subr.mxu0 %v3253
        %3557 = vmatpush1.msra.mxu0 %v3252
        %3558 = vmatprep.subr.mxu0 %v3255
        %3559 = vmatpush1.msra.mxu0 %v3254
        %3560 = vmatprep.subr.mxu0 %v3257
        %3561 = vmatpush1.msra.mxu0 %v3256
        %3562 = vmatprep.subr.mxu0 %v3259
        %3563 = vmatpush1.msra.mxu0 %v3258
        %3564 = vmatprep.subr.mxu0 %v3261
        %3565 = vmatpush1.msra.mxu0 %v3260
        %3566 = vmatprep.subr.mxu0 %v3263
        %3567 = vmatpush1.msra.mxu0 %v3262
        %3568 = vmatprep.subr.mxu0 %v3265
        %3569 = vmatpush1.msra.mxu0 %v3264
        %3570 = vmatprep.subr.mxu0 %v3267
        %3571 = vmatpush1.msra.mxu0 %v3266
        %3572 = vmatprep.subr.mxu0 %v3269
        %3573 = vmatpush1.msra.mxu0 %v3268
        %3574 = vmatprep.subr.mxu0 %v3271
        %3575 = vmatpush1.msra.mxu0 %v3270
        %3576 = vmatprep.subr.mxu0 %v3554
        %3577 = vmatpush1.msra.mxu0 %v3551
        %3578 = vmatprep.subr.mxu0 0.0
        %3579 = vmatpush1.msra.mxu0 0.0
        %3580 = vmatprep.subr.mxu0 0.0
        %3581 = vmatpush1.msra.mxu0 0.0
        %3582 = vmatprep.subr.mxu0 0.0
        %3583 = vmatpush1.msra.mxu0 0.0
        %3584 = vmatprep.subr.mxu0 0.0
        %3585 = vmatpush1.msra.mxu0 0.0
        %3586 = vmatprep.subr.mxu0 0.0
        %3587 = vmatpush1.msra.mxu0 0.0
        %3588 = vmatprep.subr.mxu0 0.0
        %3589 = vmatpush1.msra.mxu0 0.0
        %3590 = vmatprep.subr.mxu0 0.0
        %3591 = vmatpush1.msra.mxu0 0.0
        %3592 = vmatprep.subr.mxu0 0.0
        %3593 = vmatpush1.msra.mxu0 0.0
        %3594 = vmatprep.subr.mxu0 0.0
        %3595 = vmatpush1.msra.mxu0 0.0
        %3596 = vmatprep.subr.mxu0 0.0
        %3597 = vmatpush1.msra.mxu0 0.0
        %3598 = vmatprep.subr.mxu0 0.0
        %3599 = vmatpush1.msra.mxu0 0.0
        %3600 = vmatprep.subr.mxu0 0.0
        %3601 = vmatpush1.msra.mxu0 0.0
        %3602 = vmatprep.subr.mxu0 0.0
        %3603 = vmatpush1.msra.mxu0 0.0
        %3604 = vmatprep.subr.mxu0 0.0
        %3605 = vmatpush1.msra.mxu0 0.0
        %3606 = vmatprep.subr.mxu0 0.0
        %3607 = vmatpush1.msra.mxu0 0.0
        %3608 = vmatprep.subr.mxu0 0.0
        %3609 = vmatpush1.msra.mxu0 0.0
        %3610 = vmatprep.subr.mxu0 0.0
        %3611 = vmatpush1.msra.mxu0 0.0
        %3612 = vmatprep.subr.mxu0 0.0
        %3613 = vmatpush1.msra.mxu0 0.0
        %3614 = vmatprep.subr.mxu0 0.0
        %3615 = vmatpush1.msra.mxu0 0.0
        %3616 = vmatprep.subr.mxu0 0.0
        %3617 = vmatpush1.msra.mxu0 0.0
        %3618 = vmatprep.subr.mxu0 0.0
        %3619 = vmatpush1.msra.mxu0 0.0
        %3620 = vmatprep.mubr.f32.mxu0 0.0
        %3621 = vmatmul.mubr.f32.gmra.mrb[0].mxu0 %v3509
        %v3622 = vpop.f32.mrb[0].mxu0
        %v3623 = vadd.f32 %v3426, %v3622
        %v3624 = vpop.f32.mrb[0].mxu0
        %v3625 = vadd.f32 %v3428, %v3624
        %3626 = vmatprep.mubr.f32.mxu0 0.0
        %3627 = vmatmul.mubr.f32.gmra.mrb[0].mxu0 %v3512
        %v3628 = vpop.f32.mrb[0].mxu0
        %v3629 = vadd.f32 %v3432, %v3628
        %v3630 = vpop.f32.mrb[0].mxu0
        %v3631 = vadd.f32 %v3434, %v3630
        %3632 = vmatprep.mubr.f32.mxu0 0.0
        %3633 = vmatmul.mubr.f32.gmra.mrb[0].mxu0 %v3515
        %v3634 = vpop.f32.mrb[0].mxu0
        %v3635 = vadd.f32 %v3438, %v3634
        %v3636 = vpop.f32.mrb[0].mxu0
        %v3637 = vadd.f32 %v3440, %v3636
        %3638 = vmatprep.mubr.f32.mxu0 0.0
        %3639 = vmatmul.mubr.f32.gmra.mrb[0].mxu0 %v3518
        %v3640 = vpop.f32.mrb[0].mxu0
        %v3641 = vadd.f32 %v3444, %v3640
        %v3642 = vpop.f32.mrb[0].mxu0
        %v3643 = vadd.f32 %v3446, %v3642
        %3644 = vmatprep.mubr.f32.mxu0 0.0
        %3645 = vmatmul.mubr.f32.gmra.mrb[0].mxu0 %v3521
        %v3646 = vpop.f32.mrb[0].mxu0
        %v3647 = vadd.f32 %v3450, %v3646
        %v3648 = vpop.f32.mrb[0].mxu0
        %v3649 = vadd.f32 %v3452, %v3648
        %3650 = vmatprep.mubr.f32.mxu0 0.0
        %3651 = vmatmul.mubr.f32.gmra.mrb[0].mxu0 %v3524
        %v3652 = vpop.f32.mrb[0].mxu0
        %v3653 = vadd.f32 %v3456, %v3652
        %v3654 = vpop.f32.mrb[0].mxu0
        %v3655 = vadd.f32 %v3458, %v3654
        %3656 = vmatprep.mubr.f32.mxu0 0.0
        %3657 = vmatmul.mubr.f32.gmra.mrb[0].mxu0 %v3527
        %v3658 = vpop.f32.mrb[0].mxu0
        %v3659 = vadd.f32 %v3462, %v3658
        %v3660 = vpop.f32.mrb[0].mxu0
        %v3661 = vadd.f32 %v3464, %v3660
        %3662 = vmatprep.mubr.f32.mxu0 0.0
        %3663 = vmatmul.mubr.f32.gmra.mrb[0].mxu0 %v3530
        %v3664 = vpop.f32.mrb[0].mxu0
        %v3665 = vadd.f32 %v3468, %v3664
        %v3666 = vpop.f32.mrb[0].mxu0
        %v3667 = vadd.f32 %v3470, %v3666
        %3668 = vmatprep.mubr.f32.mxu0 0.0
        %3669 = vmatmul.mubr.f32.gmra.mrb[0].mxu0 %v3533
        %v3670 = vpop.f32.mrb[0].mxu0
        %v3671 = vadd.f32 %v3474, %v3670
        %v3672 = vpop.f32.mrb[0].mxu0
        %v3673 = vadd.f32 %v3476, %v3672
        %3674 = vmatprep.mubr.f32.mxu0 0.0
        %3675 = vmatmul.mubr.f32.gmra.mrb[0].mxu0 %v3536
        %v3676 = vpop.f32.mrb[0].mxu0
        %v3677 = vadd.f32 %v3480, %v3676
        %v3678 = vpop.f32.mrb[0].mxu0
        %v3679 = vadd.f32 %v3482, %v3678
        %3680 = vmatprep.mubr.f32.mxu0 0.0
        %3681 = vmatmul.mubr.f32.gmra.mrb[0].mxu0 %v3539
        %v3682 = vpop.f32.mrb[0].mxu0
        %v3683 = vadd.f32 %v3486, %v3682
        %v3684 = vpop.f32.mrb[0].mxu0
        %v3685 = vadd.f32 %v3488, %v3684
        %3686 = vmatprep.mubr.f32.mxu0 0.0
        %3687 = vmatmul.mubr.f32.gmra.mrb[0].mxu0 %v3542
        %v3688 = vpop.f32.mrb[0].mxu0
        %v3689 = vadd.f32 %v3492, %v3688
        %v3690 = vpop.f32.mrb[0].mxu0
        %v3691 = vadd.f32 %v3494, %v3690
        %3692 = vmatprep.mubr.f32.mxu0 0.0
        %3693 = vmatmul.mubr.f32.gmra.mrb[0].mxu0 %v3545
        %v3694 = vpop.f32.mrb[0].mxu0
        %v3695 = vadd.f32 %v3498, %v3694
        %v3696 = vpop.f32.mrb[0].mxu0
        %v3697 = vadd.f32 %v3500, %v3696
        %3698 = vmatprep.mubr.f32.mxu0 0.0
        %3699 = vmatmul.mubr.f32.gmra.mrb[0].mxu0 %v3548
        %v3700 = vpop.f32.mrb[0].mxu0
        %v3701 = vadd.f32 %v3504, %v3700
        %v3702 = vpop.f32.mrb[0].mxu0
        %v3703 = vadd.f32 %v3506, %v3702
        %3704 = vdwg.mxu0
        %v3705 = vld [vmem:[#allocation2 + $0x2] sm:$0xff]
        %v3706 = vld [vmem:[#allocation2 + $0xa] sm:$0xff]
        %v3707 = vld [vmem:[#allocation2 + $0x12] sm:$0xff]
        %v3708 = vld [vmem:[#allocation2 + $0x1a] sm:$0xff]
        %v3709 = vld [vmem:[#allocation2 + $0x22] sm:$0xff]
        %v3710 = vld [vmem:[#allocation2 + $0x2a] sm:$0xff]
        %v3711 = vld [vmem:[#allocation2 + $0x32] sm:$0xff]
        %v3712 = vld [vmem:[#allocation2 + $0x3a] sm:$0xff]
        %v3713 = vld [vmem:[#allocation2 + $0x42] sm:$0xff]
        %v3714 = vld [vmem:[#allocation2 + $0x4a] sm:$0xff]
        %v3715 = vld [vmem:[#allocation2 + $0x52] sm:$0xff]
        %v3716 = vld [vmem:[#allocation2 + $0x5a] sm:$0xff]
        %v3717 = vld [vmem:[#allocation2 + $0x62] sm:$0xff]
        %v3718 = vld [vmem:[#allocation2 + $0x6a] sm:$0xf]
        %s3719 = scalar_lea.vmem %s5, 352
        %v3720 = vld [vmem:[%s3719] sm:$0xff]
        %v3721 = vld [vmem:[%s3719 + $0x8] sm:$0xff]
        %v3722 = vld [vmem:[%s3719 + $0x10] sm:$0xff]
        %v3723 = vld [vmem:[%s3719 + $0x18] sm:$0xff]
        %v3724 = vld [vmem:[%s3719 + $0x20] sm:$0xff]
        %v3725 = vld [vmem:[%s3719 + $0x28] sm:$0xff]
        %v3726 = vld [vmem:[%s3719 + $0x30] sm:$0xff]
        %v3727 = vld [vmem:[%s3719 + $0x38] sm:$0xff]
        %v3728 = vld [vmem:[%s3719 + $0x40] sm:$0xff]
        %v3729 = vld [vmem:[%s3719 + $0x48] sm:$0xff]
        %v3730 = vld [vmem:[%s3719 + $0x50] sm:$0xff]
        %v3731 = vld [vmem:[%s3719 + $0x58] sm:$0xff]
        %v3732 = vld [vmem:[%s3719 + $0x60] sm:$0xff]
        %v3733 = vld [vmem:[%s3719 + $0x68] sm:$0xff]
        %v3734 = vld [vmem:[%s3719 + $0x70] sm:$0xff]
        %v3735 = vld [vmem:[%s3719 + $0x78] sm:$0xff]
        %v3736 = vld [vmem:[%s3719 + $0x80] sm:$0xff]
        %v3737 = vld [vmem:[%s3719 + $0x88] sm:$0xff]
        %v3738 = vld [vmem:[%s3719 + $0x90] sm:$0xff]
        %v3739 = vld [vmem:[%s3719 + $0x98] sm:$0xff]
        %v3740 = vld [vmem:[%s3719 + $0xa0] sm:$0xf]
        %v3741 = vld [vmem:[%s3719 + $0xa8] sm:$0xf]
        %v3743 = vsel %vm3223, %v3705, 0
        %v3746 = vsel %vm3223, %v3706, 0
        %v3749 = vsel %vm3223, %v3707, 0
        %v3752 = vsel %vm3223, %v3708, 0
        %v3755 = vsel %vm3223, %v3709, 0
        %v3758 = vsel %vm3223, %v3710, 0
        %v3761 = vsel %vm3223, %v3711, 0
        %v3764 = vsel %vm3223, %v3712, 0
        %v3767 = vsel %vm3223, %v3713, 0
        %v3770 = vsel %vm3223, %v3714, 0
        %v3773 = vsel %vm3223, %v3715, 0
        %v3776 = vsel %vm3223, %v3716, 0
        %v3779 = vsel %vm3223, %v3717, 0
        %v3782 = vsel %vm3223, %v3718, 0
        %v3785 = vsel %vm2868, %v3740, 0
        %v3788 = vsel %vm2868, %v3741, 0
        %3790 = vmatprep.subr.mxu0 %v3721
        %3791 = vmatpush1.msra.mxu0 %v3720
        %3792 = vmatprep.subr.mxu0 %v3723
        %3793 = vmatpush1.msra.mxu0 %v3722
        %3794 = vmatprep.subr.mxu0 %v3725
        %3795 = vmatpush1.msra.mxu0 %v3724
        %3796 = vmatprep.subr.mxu0 %v3727
        %3797 = vmatpush1.msra.mxu0 %v3726
        %3798 = vmatprep.subr.mxu0 %v3729
        %3799 = vmatpush1.msra.mxu0 %v3728
        %3800 = vmatprep.subr.mxu0 %v3731
        %3801 = vmatpush1.msra.mxu0 %v3730
        %3802 = vmatprep.subr.mxu0 %v3733
        %3803 = vmatpush1.msra.mxu0 %v3732
        %3804 = vmatprep.subr.mxu0 %v3735
        %3805 = vmatpush1.msra.mxu0 %v3734
        %3806 = vmatprep.subr.mxu0 %v3737
        %3807 = vmatpush1.msra.mxu0 %v3736
        %3808 = vmatprep.subr.mxu0 %v3739
        %3809 = vmatpush1.msra.mxu0 %v3738
        %3810 = vmatprep.subr.mxu0 %v3788
        %3811 = vmatpush1.msra.mxu0 %v3785
        %3812 = vmatprep.subr.mxu0 0.0
        %3813 = vmatpush1.msra.mxu0 0.0
        %3814 = vmatprep.subr.mxu0 0.0
        %3815 = vmatpush1.msra.mxu0 0.0
        %3816 = vmatprep.subr.mxu0 0.0
        %3817 = vmatpush1.msra.mxu0 0.0
        %3818 = vmatprep.subr.mxu0 0.0
        %3819 = vmatpush1.msra.mxu0 0.0
        %3820 = vmatprep.subr.mxu0 0.0
        %3821 = vmatpush1.msra.mxu0 0.0
        %3822 = vmatprep.subr.mxu0 0.0
        %3823 = vmatpush1.msra.mxu0 0.0
        %3824 = vmatprep.subr.mxu0 0.0
        %3825 = vmatpush1.msra.mxu0 0.0
        %3826 = vmatprep.subr.mxu0 0.0
        %3827 = vmatpush1.msra.mxu0 0.0
        %3828 = vmatprep.subr.mxu0 0.0
        %3829 = vmatpush1.msra.mxu0 0.0
        %3830 = vmatprep.subr.mxu0 0.0
        %3831 = vmatpush1.msra.mxu0 0.0
        %3832 = vmatprep.subr.mxu0 0.0
        %3833 = vmatpush1.msra.mxu0 0.0
        %3834 = vmatprep.subr.mxu0 0.0
        %3835 = vmatpush1.msra.mxu0 0.0
        %3836 = vmatprep.subr.mxu0 0.0
        %3837 = vmatpush1.msra.mxu0 0.0
        %3838 = vmatprep.subr.mxu0 0.0
        %3839 = vmatpush1.msra.mxu0 0.0
        %3840 = vmatprep.subr.mxu0 0.0
        %3841 = vmatpush1.msra.mxu0 0.0
        %3842 = vmatprep.subr.mxu0 0.0
        %3843 = vmatpush1.msra.mxu0 0.0
        %3844 = vmatprep.subr.mxu0 0.0
        %3845 = vmatpush1.msra.mxu0 0.0
        %3846 = vmatprep.subr.mxu0 0.0
        %3847 = vmatpush1.msra.mxu0 0.0
        %3848 = vmatprep.subr.mxu0 0.0
        %3849 = vmatpush1.msra.mxu0 0.0
        %3850 = vmatprep.subr.mxu0 0.0
        %3851 = vmatpush1.msra.mxu0 0.0
        %3852 = vmatprep.subr.mxu0 0.0
        %3853 = vmatpush1.msra.mxu0 0.0
        %3854 = vmatprep.mubr.f32.mxu0 0.0
        %3855 = vmatmul.mubr.f32.gmra.mrb[0].mxu0 %v3743
        %v3856 = vpop.f32.mrb[0].mxu0
        %v3857 = vadd.f32 0.0, %v3856
        %v3858 = vpop.f32.mrb[0].mxu0
        %v3859 = vadd.f32 0.0, %v3858
        %3860 = vmatprep.mubr.f32.mxu0 0.0
        %3861 = vmatmul.mubr.f32.gmra.mrb[0].mxu0 %v3746
        %v3862 = vpop.f32.mrb[0].mxu0
        %v3863 = vadd.f32 0.0, %v3862
        %v3864 = vpop.f32.mrb[0].mxu0
        %v3865 = vadd.f32 0.0, %v3864
        %3866 = vmatprep.mubr.f32.mxu0 0.0
        %3867 = vmatmul.mubr.f32.gmra.mrb[0].mxu0 %v3749
        %v3868 = vpop.f32.mrb[0].mxu0
        %v3869 = vadd.f32 0.0, %v3868
        %v3870 = vpop.f32.mrb[0].mxu0
        %v3871 = vadd.f32 0.0, %v3870
        %3872 = vmatprep.mubr.f32.mxu0 0.0
        %3873 = vmatmul.mubr.f32.gmra.mrb[0].mxu0 %v3752
        %v3874 = vpop.f32.mrb[0].mxu0
        %v3875 = vadd.f32 0.0, %v3874
        %v3876 = vpop.f32.mrb[0].mxu0
        %v3877 = vadd.f32 0.0, %v3876
        %3878 = vmatprep.mubr.f32.mxu0 0.0
        %3879 = vmatmul.mubr.f32.gmra.mrb[0].mxu0 %v3755
        %v3880 = vpop.f32.mrb[0].mxu0
        %v3881 = vadd.f32 0.0, %v3880
        %v3882 = vpop.f32.mrb[0].mxu0
        %v3883 = vadd.f32 0.0, %v3882
        %3884 = vmatprep.mubr.f32.mxu0 0.0
        %3885 = vmatmul.mubr.f32.gmra.mrb[0].mxu0 %v3758
        %v3886 = vpop.f32.mrb[0].mxu0
        %v3887 = vadd.f32 0.0, %v3886
        %v3888 = vpop.f32.mrb[0].mxu0
        %v3889 = vadd.f32 0.0, %v3888
        %3890 = vmatprep.mubr.f32.mxu0 0.0
        %3891 = vmatmul.mubr.f32.gmra.mrb[0].mxu0 %v3761
        %v3892 = vpop.f32.mrb[0].mxu0
        %v3893 = vadd.f32 0.0, %v3892
        %v3894 = vpop.f32.mrb[0].mxu0
        %v3895 = vadd.f32 0.0, %v3894
        %3896 = vmatprep.mubr.f32.mxu0 0.0
        %3897 = vmatmul.mubr.f32.gmra.mrb[0].mxu0 %v3764
        %v3898 = vpop.f32.mrb[0].mxu0
        %v3899 = vadd.f32 0.0, %v3898
        %v3900 = vpop.f32.mrb[0].mxu0
        %v3901 = vadd.f32 0.0, %v3900
        %3902 = vmatprep.mubr.f32.mxu0 0.0
        %3903 = vmatmul.mubr.f32.gmra.mrb[0].mxu0 %v3767
        %v3904 = vpop.f32.mrb[0].mxu0
        %v3905 = vadd.f32 0.0, %v3904
        %v3906 = vpop.f32.mrb[0].mxu0
        %v3907 = vadd.f32 0.0, %v3906
        %3908 = vmatprep.mubr.f32.mxu0 0.0
        %3909 = vmatmul.mubr.f32.gmra.mrb[0].mxu0 %v3770
        %v3910 = vpop.f32.mrb[0].mxu0
        %v3911 = vadd.f32 0.0, %v3910
        %v3912 = vpop.f32.mrb[0].mxu0
        %v3913 = vadd.f32 0.0, %v3912
        %3914 = vmatprep.mubr.f32.mxu0 0.0
        %3915 = vmatmul.mubr.f32.gmra.mrb[0].mxu0 %v3773
        %v3916 = vpop.f32.mrb[0].mxu0
        %v3917 = vadd.f32 0.0, %v3916
        %v3918 = vpop.f32.mrb[0].mxu0
        %v3919 = vadd.f32 0.0, %v3918
        %3920 = vmatprep.mubr.f32.mxu0 0.0
        %3921 = vmatmul.mubr.f32.gmra.mrb[0].mxu0 %v3776
        %v3922 = vpop.f32.mrb[0].mxu0
        %v3923 = vadd.f32 0.0, %v3922
        %v3924 = vpop.f32.mrb[0].mxu0
        %v3925 = vadd.f32 0.0, %v3924
        %3926 = vmatprep.mubr.f32.mxu0 0.0
        %3927 = vmatmul.mubr.f32.gmra.mrb[0].mxu0 %v3779
        %v3928 = vpop.f32.mrb[0].mxu0
        %v3929 = vadd.f32 0.0, %v3928
        %v3930 = vpop.f32.mrb[0].mxu0
        %v3931 = vadd.f32 0.0, %v3930
        %3932 = vmatprep.mubr.f32.mxu0 0.0
        %3933 = vmatmul.mubr.f32.gmra.mrb[0].mxu0 %v3782
        %v3934 = vpop.f32.mrb[0].mxu0
        %v3935 = vadd.f32 0.0, %v3934
        %v3936 = vpop.f32.mrb[0].mxu0
        %v3937 = vadd.f32 0.0, %v3936
        %3938 = vdwg.mxu0
        %v3939 = vadd.f32 %v3623, %v3857
        %v3940 = vadd.f32 %v3625, %v3859
        %v3941 = vadd.f32 %v3629, %v3863
        %v3942 = vadd.f32 %v3631, %v3865
        %v3943 = vadd.f32 %v3635, %v3869
        %v3944 = vadd.f32 %v3637, %v3871
        %v3945 = vadd.f32 %v3641, %v3875
        %v3946 = vadd.f32 %v3643, %v3877
        %v3947 = vadd.f32 %v3647, %v3881
        %v3948 = vadd.f32 %v3649, %v3883
        %v3949 = vadd.f32 %v3653, %v3887
        %v3950 = vadd.f32 %v3655, %v3889
        %v3951 = vadd.f32 %v3659, %v3893
        %v3952 = vadd.f32 %v3661, %v3895
        %v3953 = vadd.f32 %v3665, %v3899
        %v3954 = vadd.f32 %v3667, %v3901
        %v3955 = vadd.f32 %v3671, %v3905
        %v3956 = vadd.f32 %v3673, %v3907
        %v3957 = vadd.f32 %v3677, %v3911
        %v3958 = vadd.f32 %v3679, %v3913
        %v3959 = vadd.f32 %v3683, %v3917
        %v3960 = vadd.f32 %v3685, %v3919
        %v3961 = vadd.f32 %v3689, %v3923
        %v3962 = vadd.f32 %v3691, %v3925
        %v3963 = vadd.f32 %v3695, %v3929
        %v3964 = vadd.f32 %v3697, %v3931
        %v3965 = vadd.f32 %v3701, %v3935
        %v3966 = vadd.f32 %v3703, %v3937
        %v3967 = vld [vmem:[#allocation2 + $0x3] sm:$0xff]
        %v3968 = vld [vmem:[#allocation2 + $0xb] sm:$0xff]
        %v3969 = vld [vmem:[#allocation2 + $0x13] sm:$0xff]
        %v3970 = vld [vmem:[#allocation2 + $0x1b] sm:$0xff]
        %v3971 = vld [vmem:[#allocation2 + $0x23] sm:$0xff]
        %v3972 = vld [vmem:[#allocation2 + $0x2b] sm:$0xff]
        %v3973 = vld [vmem:[#allocation2 + $0x33] sm:$0xff]
        %v3974 = vld [vmem:[#allocation2 + $0x3b] sm:$0xff]
        %v3975 = vld [vmem:[#allocation2 + $0x43] sm:$0xff]
        %v3976 = vld [vmem:[#allocation2 + $0x4b] sm:$0xff]
        %v3977 = vld [vmem:[#allocation2 + $0x53] sm:$0xff]
        %v3978 = vld [vmem:[#allocation2 + $0x5b] sm:$0xff]
        %v3979 = vld [vmem:[#allocation2 + $0x63] sm:$0xff]
        %v3980 = vld [vmem:[#allocation2 + $0x6b] sm:$0xf]
        %s3981 = scalar_lea.vmem %s5, 528
        %v3982 = vld [vmem:[%s3981] sm:$0xff]
        %v3983 = vld [vmem:[%s3981 + $0x8] sm:$0xff]
        %v3984 = vld [vmem:[%s3981 + $0x10] sm:$0xff]
        %v3985 = vld [vmem:[%s3981 + $0x18] sm:$0xff]
        %v3986 = vld [vmem:[%s3981 + $0x20] sm:$0xff]
        %v3987 = vld [vmem:[%s3981 + $0x28] sm:$0xff]
        %v3988 = vld [vmem:[%s3981 + $0x30] sm:$0xff]
        %v3989 = vld [vmem:[%s3981 + $0x38] sm:$0xff]
        %v3990 = vld [vmem:[%s3981 + $0x40] sm:$0xff]
        %v3991 = vld [vmem:[%s3981 + $0x48] sm:$0xff]
        %v3992 = vld [vmem:[%s3981 + $0x50] sm:$0xff]
        %v3993 = vld [vmem:[%s3981 + $0x58] sm:$0xff]
        %v3994 = vld [vmem:[%s3981 + $0x60] sm:$0xff]
        %v3995 = vld [vmem:[%s3981 + $0x68] sm:$0xff]
        %v3996 = vld [vmem:[%s3981 + $0x70] sm:$0xff]
        %v3997 = vld [vmem:[%s3981 + $0x78] sm:$0xff]
        %v3998 = vld [vmem:[%s3981 + $0x80] sm:$0xff]
        %v3999 = vld [vmem:[%s3981 + $0x88] sm:$0xff]
        %v4000 = vld [vmem:[%s3981 + $0x90] sm:$0xff]
        %v4001 = vld [vmem:[%s3981 + $0x98] sm:$0xff]
        %v4002 = vld [vmem:[%s3981 + $0xa0] sm:$0xf]
        %v4003 = vld [vmem:[%s3981 + $0xa8] sm:$0xf]
        %v4005 = vsel %vm3223, %v3967, 0
        %v4008 = vsel %vm3223, %v3968, 0
        %v4011 = vsel %vm3223, %v3969, 0
        %v4014 = vsel %vm3223, %v3970, 0
        %v4017 = vsel %vm3223, %v3971, 0
        %v4020 = vsel %vm3223, %v3972, 0
        %v4023 = vsel %vm3223, %v3973, 0
        %v4026 = vsel %vm3223, %v3974, 0
        %v4029 = vsel %vm3223, %v3975, 0
        %v4032 = vsel %vm3223, %v3976, 0
        %v4035 = vsel %vm3223, %v3977, 0
        %v4038 = vsel %vm3223, %v3978, 0
        %v4041 = vsel %vm3223, %v3979, 0
        %v4044 = vsel %vm3223, %v3980, 0
        %v4047 = vsel %vm2868, %v4002, 0
        %v4050 = vsel %vm2868, %v4003, 0
        %4052 = vmatprep.subr.mxu0 %v3983
        %4053 = vmatpush1.msra.mxu0 %v3982
        %4054 = vmatprep.subr.mxu0 %v3985
        %4055 = vmatpush1.msra.mxu0 %v3984
        %4056 = vmatprep.subr.mxu0 %v3987
        %4057 = vmatpush1.msra.mxu0 %v3986
        %4058 = vmatprep.subr.mxu0 %v3989
        %4059 = vmatpush1.msra.mxu0 %v3988
        %4060 = vmatprep.subr.mxu0 %v3991
        %4061 = vmatpush1.msra.mxu0 %v3990
        %4062 = vmatprep.subr.mxu0 %v3993
        %4063 = vmatpush1.msra.mxu0 %v3992
        %4064 = vmatprep.subr.mxu0 %v3995
        %4065 = vmatpush1.msra.mxu0 %v3994
        %4066 = vmatprep.subr.mxu0 %v3997
        %4067 = vmatpush1.msra.mxu0 %v3996
        %4068 = vmatprep.subr.mxu0 %v3999
        %4069 = vmatpush1.msra.mxu0 %v3998
        %4070 = vmatprep.subr.mxu0 %v4001
        %4071 = vmatpush1.msra.mxu0 %v4000
        %4072 = vmatprep.subr.mxu0 %v4050
        %4073 = vmatpush1.msra.mxu0 %v4047
        %4074 = vmatprep.subr.mxu0 0.0
        %4075 = vmatpush1.msra.mxu0 0.0
        %4076 = vmatprep.subr.mxu0 0.0
        %4077 = vmatpush1.msra.mxu0 0.0
        %4078 = vmatprep.subr.mxu0 0.0
        %4079 = vmatpush1.msra.mxu0 0.0
        %4080 = vmatprep.subr.mxu0 0.0
        %4081 = vmatpush1.msra.mxu0 0.0
        %4082 = vmatprep.subr.mxu0 0.0
        %4083 = vmatpush1.msra.mxu0 0.0
        %4084 = vmatprep.subr.mxu0 0.0
        %4085 = vmatpush1.msra.mxu0 0.0
        %4086 = vmatprep.subr.mxu0 0.0
        %4087 = vmatpush1.msra.mxu0 0.0
        %4088 = vmatprep.subr.mxu0 0.0
        %4089 = vmatpush1.msra.mxu0 0.0
        %4090 = vmatprep.subr.mxu0 0.0
        %4091 = vmatpush1.msra.mxu0 0.0
        %4092 = vmatprep.subr.mxu0 0.0
        %4093 = vmatpush1.msra.mxu0 0.0
        %4094 = vmatprep.subr.mxu0 0.0
        %4095 = vmatpush1.msra.mxu0 0.0
        %4096 = vmatprep.subr.mxu0 0.0
        %4097 = vmatpush1.msra.mxu0 0.0
        %4098 = vmatprep.subr.mxu0 0.0
        %4099 = vmatpush1.msra.mxu0 0.0
        %4100 = vmatprep.subr.mxu0 0.0
        %4101 = vmatpush1.msra.mxu0 0.0
        %4102 = vmatprep.subr.mxu0 0.0
        %4103 = vmatpush1.msra.mxu0 0.0
        %4104 = vmatprep.subr.mxu0 0.0
        %4105 = vmatpush1.msra.mxu0 0.0
        %4106 = vmatprep.subr.mxu0 0.0
        %4107 = vmatpush1.msra.mxu0 0.0
        %4108 = vmatprep.subr.mxu0 0.0
        %4109 = vmatpush1.msra.mxu0 0.0
        %4110 = vmatprep.subr.mxu0 0.0
        %4111 = vmatpush1.msra.mxu0 0.0
        %4112 = vmatprep.subr.mxu0 0.0
        %4113 = vmatpush1.msra.mxu0 0.0
        %4114 = vmatprep.subr.mxu0 0.0
        %4115 = vmatpush1.msra.mxu0 0.0
        %4116 = vmatprep.mubr.f32.mxu0 0.0
        %4117 = vmatmul.mubr.f32.gmra.mrb[0].mxu0 %v4005
        %v4118 = vpop.f32.mrb[0].mxu0
        %v4119 = vadd.f32 0.0, %v4118
        %v4120 = vpop.f32.mrb[0].mxu0
        %v4121 = vadd.f32 0.0, %v4120
        %4122 = vmatprep.mubr.f32.mxu0 0.0
        %4123 = vmatmul.mubr.f32.gmra.mrb[0].mxu0 %v4008
        %v4124 = vpop.f32.mrb[0].mxu0
        %v4125 = vadd.f32 0.0, %v4124
        %v4126 = vpop.f32.mrb[0].mxu0
        %v4127 = vadd.f32 0.0, %v4126
        %4128 = vmatprep.mubr.f32.mxu0 0.0
        %4129 = vmatmul.mubr.f32.gmra.mrb[0].mxu0 %v4011
        %v4130 = vpop.f32.mrb[0].mxu0
        %v4131 = vadd.f32 0.0, %v4130
        %v4132 = vpop.f32.mrb[0].mxu0
        %v4133 = vadd.f32 0.0, %v4132
        %4134 = vmatprep.mubr.f32.mxu0 0.0
        %4135 = vmatmul.mubr.f32.gmra.mrb[0].mxu0 %v4014
        %v4136 = vpop.f32.mrb[0].mxu0
        %v4137 = vadd.f32 0.0, %v4136
        %v4138 = vpop.f32.mrb[0].mxu0
        %v4139 = vadd.f32 0.0, %v4138
        %4140 = vmatprep.mubr.f32.mxu0 0.0
        %4141 = vmatmul.mubr.f32.gmra.mrb[0].mxu0 %v4017
        %v4142 = vpop.f32.mrb[0].mxu0
        %v4143 = vadd.f32 0.0, %v4142
        %v4144 = vpop.f32.mrb[0].mxu0
        %v4145 = vadd.f32 0.0, %v4144
        %4146 = vmatprep.mubr.f32.mxu0 0.0
        %4147 = vmatmul.mubr.f32.gmra.mrb[0].mxu0 %v4020
        %v4148 = vpop.f32.mrb[0].mxu0
        %v4149 = vadd.f32 0.0, %v4148
        %v4150 = vpop.f32.mrb[0].mxu0
        %v4151 = vadd.f32 0.0, %v4150
        %4152 = vmatprep.mubr.f32.mxu0 0.0
        %4153 = vmatmul.mubr.f32.gmra.mrb[0].mxu0 %v4023
        %v4154 = vpop.f32.mrb[0].mxu0
        %v4155 = vadd.f32 0.0, %v4154
        %v4156 = vpop.f32.mrb[0].mxu0
        %v4157 = vadd.f32 0.0, %v4156
        %4158 = vmatprep.mubr.f32.mxu0 0.0
        %4159 = vmatmul.mubr.f32.gmra.mrb[0].mxu0 %v4026
        %v4160 = vpop.f32.mrb[0].mxu0
        %v4161 = vadd.f32 0.0, %v4160
        %v4162 = vpop.f32.mrb[0].mxu0
        %v4163 = vadd.f32 0.0, %v4162
        %4164 = vmatprep.mubr.f32.mxu0 0.0
        %4165 = vmatmul.mubr.f32.gmra.mrb[0].mxu0 %v4029
        %v4166 = vpop.f32.mrb[0].mxu0
        %v4167 = vadd.f32 0.0, %v4166
        %v4168 = vpop.f32.mrb[0].mxu0
        %v4169 = vadd.f32 0.0, %v4168
        %4170 = vmatprep.mubr.f32.mxu0 0.0
        %4171 = vmatmul.mubr.f32.gmra.mrb[0].mxu0 %v4032
        %v4172 = vpop.f32.mrb[0].mxu0
        %v4173 = vadd.f32 0.0, %v4172
        %v4174 = vpop.f32.mrb[0].mxu0
        %v4175 = vadd.f32 0.0, %v4174
        %4176 = vmatprep.mubr.f32.mxu0 0.0
        %4177 = vmatmul.mubr.f32.gmra.mrb[0].mxu0 %v4035
        %v4178 = vpop.f32.mrb[0].mxu0
        %v4179 = vadd.f32 0.0, %v4178
        %v4180 = vpop.f32.mrb[0].mxu0
        %v4181 = vadd.f32 0.0, %v4180
        %4182 = vmatprep.mubr.f32.mxu0 0.0
        %4183 = vmatmul.mubr.f32.gmra.mrb[0].mxu0 %v4038
        %v4184 = vpop.f32.mrb[0].mxu0
        %v4185 = vadd.f32 0.0, %v4184
        %v4186 = vpop.f32.mrb[0].mxu0
        %v4187 = vadd.f32 0.0, %v4186
        %4188 = vmatprep.mubr.f32.mxu0 0.0
        %4189 = vmatmul.mubr.f32.gmra.mrb[0].mxu0 %v4041
        %v4190 = vpop.f32.mrb[0].mxu0
        %v4191 = vadd.f32 0.0, %v4190
        %v4192 = vpop.f32.mrb[0].mxu0
        %v4193 = vadd.f32 0.0, %v4192
        %4194 = vmatprep.mubr.f32.mxu0 0.0
        %4195 = vmatmul.mubr.f32.gmra.mrb[0].mxu0 %v4044
        %v4196 = vpop.f32.mrb[0].mxu0
        %v4197 = vadd.f32 0.0, %v4196
        %v4198 = vpop.f32.mrb[0].mxu0
        %v4199 = vadd.f32 0.0, %v4198
        %4200 = vdwg.mxu0
        %v4201 = vadd.f32 %v3939, %v4119
        %v4202 = vadd.f32 %v3940, %v4121
        %v4203 = vadd.f32 %v3941, %v4125
        %v4204 = vadd.f32 %v3942, %v4127
        %v4205 = vadd.f32 %v3943, %v4131
        %v4206 = vadd.f32 %v3944, %v4133
        %v4207 = vadd.f32 %v3945, %v4137
        %v4208 = vadd.f32 %v3946, %v4139
        %v4209 = vadd.f32 %v3947, %v4143
        %v4210 = vadd.f32 %v3948, %v4145
        %v4211 = vadd.f32 %v3949, %v4149
        %v4212 = vadd.f32 %v3950, %v4151
        %v4213 = vadd.f32 %v3951, %v4155
        %v4214 = vadd.f32 %v3952, %v4157
        %v4215 = vadd.f32 %v3953, %v4161
        %v4216 = vadd.f32 %v3954, %v4163
        %v4217 = vadd.f32 %v3955, %v4167
        %v4218 = vadd.f32 %v3956, %v4169
        %v4219 = vadd.f32 %v3957, %v4173
        %v4220 = vadd.f32 %v3958, %v4175
        %v4221 = vadd.f32 %v3959, %v4179
        %v4222 = vadd.f32 %v3960, %v4181
        %v4223 = vadd.f32 %v3961, %v4185
        %v4224 = vadd.f32 %v3962, %v4187
        %v4225 = vadd.f32 %v3963, %v4191
        %v4226 = vadd.f32 %v3964, %v4193
        %v4227 = vadd.f32 %v3965, %v4197
        %v4228 = vadd.f32 %v3966, %v4199
        %v4229 = vld [vmem:[#allocation2 + $0x4] sm:$0xff]
        %v4230 = vld [vmem:[#allocation2 + $0xc] sm:$0xff]
        %v4231 = vld [vmem:[#allocation2 + $0x14] sm:$0xff]
        %v4232 = vld [vmem:[#allocation2 + $0x1c] sm:$0xff]
        %v4233 = vld [vmem:[#allocation2 + $0x24] sm:$0xff]
        %v4234 = vld [vmem:[#allocation2 + $0x2c] sm:$0xff]
        %v4235 = vld [vmem:[#allocation2 + $0x34] sm:$0xff]
        %v4236 = vld [vmem:[#allocation2 + $0x3c] sm:$0xff]
        %v4237 = vld [vmem:[#allocation2 + $0x44] sm:$0xff]
        %v4238 = vld [vmem:[#allocation2 + $0x4c] sm:$0xff]
        %v4239 = vld [vmem:[#allocation2 + $0x54] sm:$0xff]
        %v4240 = vld [vmem:[#allocation2 + $0x5c] sm:$0xff]
        %v4241 = vld [vmem:[#allocation2 + $0x64] sm:$0xff]
        %v4242 = vld [vmem:[#allocation2 + $0x6c] sm:$0xf]
        %s4243 = scalar_lea.vmem %s5, 704
        %v4244 = vld [vmem:[%s4243] sm:$0xff]
        %v4245 = vld [vmem:[%s4243 + $0x8] sm:$0xff]
        %v4246 = vld [vmem:[%s4243 + $0x10] sm:$0xff]
        %v4247 = vld [vmem:[%s4243 + $0x18] sm:$0xff]
        %v4248 = vld [vmem:[%s4243 + $0x20] sm:$0xff]
        %v4249 = vld [vmem:[%s4243 + $0x28] sm:$0xff]
        %v4250 = vld [vmem:[%s4243 + $0x30] sm:$0xff]
        %v4251 = vld [vmem:[%s4243 + $0x38] sm:$0xff]
        %v4252 = vld [vmem:[%s4243 + $0x40] sm:$0xff]
        %v4253 = vld [vmem:[%s4243 + $0x48] sm:$0xff]
        %v4254 = vld [vmem:[%s4243 + $0x50] sm:$0xff]
        %v4255 = vld [vmem:[%s4243 + $0x58] sm:$0xff]
        %v4256 = vld [vmem:[%s4243 + $0x60] sm:$0xff]
        %v4257 = vld [vmem:[%s4243 + $0x68] sm:$0xff]
        %v4258 = vld [vmem:[%s4243 + $0x70] sm:$0xff]
        %v4259 = vld [vmem:[%s4243 + $0x78] sm:$0xff]
        %v4260 = vld [vmem:[%s4243 + $0x80] sm:$0xff]
        %v4261 = vld [vmem:[%s4243 + $0x88] sm:$0xff]
        %v4262 = vld [vmem:[%s4243 + $0x90] sm:$0xff]
        %v4263 = vld [vmem:[%s4243 + $0x98] sm:$0xff]
        %v4264 = vld [vmem:[%s4243 + $0xa0] sm:$0xf]
        %v4265 = vld [vmem:[%s4243 + $0xa8] sm:$0xf]
        %v4267 = vsel %vm3223, %v4229, 0
        %v4270 = vsel %vm3223, %v4230, 0
        %v4273 = vsel %vm3223, %v4231, 0
        %v4276 = vsel %vm3223, %v4232, 0
        %v4279 = vsel %vm3223, %v4233, 0
        %v4282 = vsel %vm3223, %v4234, 0
        %v4285 = vsel %vm3223, %v4235, 0
        %v4288 = vsel %vm3223, %v4236, 0
        %v4291 = vsel %vm3223, %v4237, 0
        %v4294 = vsel %vm3223, %v4238, 0
        %v4297 = vsel %vm3223, %v4239, 0
        %v4300 = vsel %vm3223, %v4240, 0
        %v4303 = vsel %vm3223, %v4241, 0
        %v4306 = vsel %vm3223, %v4242, 0
        %v4309 = vsel %vm2868, %v4264, 0
        %v4312 = vsel %vm2868, %v4265, 0
        %4314 = vmatprep.subr.mxu0 %v4245
        %4315 = vmatpush1.msra.mxu0 %v4244
        %4316 = vmatprep.subr.mxu0 %v4247
        %4317 = vmatpush1.msra.mxu0 %v4246
        %4318 = vmatprep.subr.mxu0 %v4249
        %4319 = vmatpush1.msra.mxu0 %v4248
        %4320 = vmatprep.subr.mxu0 %v4251
        %4321 = vmatpush1.msra.mxu0 %v4250
        %4322 = vmatprep.subr.mxu0 %v4253
        %4323 = vmatpush1.msra.mxu0 %v4252
        %4324 = vmatprep.subr.mxu0 %v4255
        %4325 = vmatpush1.msra.mxu0 %v4254
        %4326 = vmatprep.subr.mxu0 %v4257
        %4327 = vmatpush1.msra.mxu0 %v4256
        %4328 = vmatprep.subr.mxu0 %v4259
        %4329 = vmatpush1.msra.mxu0 %v4258
        %4330 = vmatprep.subr.mxu0 %v4261
        %4331 = vmatpush1.msra.mxu0 %v4260
        %4332 = vmatprep.subr.mxu0 %v4263
        %4333 = vmatpush1.msra.mxu0 %v4262
        %4334 = vmatprep.subr.mxu0 %v4312
        %4335 = vmatpush1.msra.mxu0 %v4309
        %4336 = vmatprep.subr.mxu0 0.0
        %4337 = vmatpush1.msra.mxu0 0.0
        %4338 = vmatprep.subr.mxu0 0.0
        %4339 = vmatpush1.msra.mxu0 0.0
        %4340 = vmatprep.subr.mxu0 0.0
        %4341 = vmatpush1.msra.mxu0 0.0
        %4342 = vmatprep.subr.mxu0 0.0
        %4343 = vmatpush1.msra.mxu0 0.0
        %4344 = vmatprep.subr.mxu0 0.0
        %4345 = vmatpush1.msra.mxu0 0.0
        %4346 = vmatprep.subr.mxu0 0.0
        %4347 = vmatpush1.msra.mxu0 0.0
        %4348 = vmatprep.subr.mxu0 0.0
        %4349 = vmatpush1.msra.mxu0 0.0
        %4350 = vmatprep.subr.mxu0 0.0
        %4351 = vmatpush1.msra.mxu0 0.0
        %4352 = vmatprep.subr.mxu0 0.0
        %4353 = vmatpush1.msra.mxu0 0.0
        %4354 = vmatprep.subr.mxu0 0.0
        %4355 = vmatpush1.msra.mxu0 0.0
        %4356 = vmatprep.subr.mxu0 0.0
        %4357 = vmatpush1.msra.mxu0 0.0
        %4358 = vmatprep.subr.mxu0 0.0
        %4359 = vmatpush1.msra.mxu0 0.0
        %4360 = vmatprep.subr.mxu0 0.0
        %4361 = vmatpush1.msra.mxu0 0.0
        %4362 = vmatprep.subr.mxu0 0.0
        %4363 = vmatpush1.msra.mxu0 0.0
        %4364 = vmatprep.subr.mxu0 0.0
        %4365 = vmatpush1.msra.mxu0 0.0
        %4366 = vmatprep.subr.mxu0 0.0
        %4367 = vmatpush1.msra.mxu0 0.0
        %4368 = vmatprep.subr.mxu0 0.0
        %4369 = vmatpush1.msra.mxu0 0.0
        %4370 = vmatprep.subr.mxu0 0.0
        %4371 = vmatpush1.msra.mxu0 0.0
        %4372 = vmatprep.subr.mxu0 0.0
        %4373 = vmatpush1.msra.mxu0 0.0
        %4374 = vmatprep.subr.mxu0 0.0
        %4375 = vmatpush1.msra.mxu0 0.0
        %4376 = vmatprep.subr.mxu0 0.0
        %4377 = vmatpush1.msra.mxu0 0.0
        %4378 = vmatprep.mubr.f32.mxu0 0.0
        %4379 = vmatmul.mubr.f32.gmra.mrb[0].mxu0 %v4267
        %v4380 = vpop.f32.mrb[0].mxu0
        %v4381 = vadd.f32 0.0, %v4380
        %v4382 = vpop.f32.mrb[0].mxu0
        %v4383 = vadd.f32 0.0, %v4382
        %4384 = vmatprep.mubr.f32.mxu0 0.0
        %4385 = vmatmul.mubr.f32.gmra.mrb[0].mxu0 %v4270
        %v4386 = vpop.f32.mrb[0].mxu0
        %v4387 = vadd.f32 0.0, %v4386
        %v4388 = vpop.f32.mrb[0].mxu0
        %v4389 = vadd.f32 0.0, %v4388
        %4390 = vmatprep.mubr.f32.mxu0 0.0
        %4391 = vmatmul.mubr.f32.gmra.mrb[0].mxu0 %v4273
        %v4392 = vpop.f32.mrb[0].mxu0
        %v4393 = vadd.f32 0.0, %v4392
        %v4394 = vpop.f32.mrb[0].mxu0
        %v4395 = vadd.f32 0.0, %v4394
        %4396 = vmatprep.mubr.f32.mxu0 0.0
        %4397 = vmatmul.mubr.f32.gmra.mrb[0].mxu0 %v4276
        %v4398 = vpop.f32.mrb[0].mxu0
        %v4399 = vadd.f32 0.0, %v4398
        %v4400 = vpop.f32.mrb[0].mxu0
        %v4401 = vadd.f32 0.0, %v4400
        %4402 = vmatprep.mubr.f32.mxu0 0.0
        %4403 = vmatmul.mubr.f32.gmra.mrb[0].mxu0 %v4279
        %v4404 = vpop.f32.mrb[0].mxu0
        %v4405 = vadd.f32 0.0, %v4404
        %v4406 = vpop.f32.mrb[0].mxu0
        %v4407 = vadd.f32 0.0, %v4406
        %4408 = vmatprep.mubr.f32.mxu0 0.0
        %4409 = vmatmul.mubr.f32.gmra.mrb[0].mxu0 %v4282
        %v4410 = vpop.f32.mrb[0].mxu0
        %v4411 = vadd.f32 0.0, %v4410
        %v4412 = vpop.f32.mrb[0].mxu0
        %v4413 = vadd.f32 0.0, %v4412
        %4414 = vmatprep.mubr.f32.mxu0 0.0
        %4415 = vmatmul.mubr.f32.gmra.mrb[0].mxu0 %v4285
        %v4416 = vpop.f32.mrb[0].mxu0
        %v4417 = vadd.f32 0.0, %v4416
        %v4418 = vpop.f32.mrb[0].mxu0
        %v4419 = vadd.f32 0.0, %v4418
        %4420 = vmatprep.mubr.f32.mxu0 0.0
        %4421 = vmatmul.mubr.f32.gmra.mrb[0].mxu0 %v4288
        %v4422 = vpop.f32.mrb[0].mxu0
        %v4423 = vadd.f32 0.0, %v4422
        %v4424 = vpop.f32.mrb[0].mxu0
        %v4425 = vadd.f32 0.0, %v4424
        %4426 = vmatprep.mubr.f32.mxu0 0.0
        %4427 = vmatmul.mubr.f32.gmra.mrb[0].mxu0 %v4291
        %v4428 = vpop.f32.mrb[0].mxu0
        %v4429 = vadd.f32 0.0, %v4428
        %v4430 = vpop.f32.mrb[0].mxu0
        %v4431 = vadd.f32 0.0, %v4430
        %4432 = vmatprep.mubr.f32.mxu0 0.0
        %4433 = vmatmul.mubr.f32.gmra.mrb[0].mxu0 %v4294
        %v4434 = vpop.f32.mrb[0].mxu0
        %v4435 = vadd.f32 0.0, %v4434
        %v4436 = vpop.f32.mrb[0].mxu0
        %v4437 = vadd.f32 0.0, %v4436
        %4438 = vmatprep.mubr.f32.mxu0 0.0
        %4439 = vmatmul.mubr.f32.gmra.mrb[0].mxu0 %v4297
        %v4440 = vpop.f32.mrb[0].mxu0
        %v4441 = vadd.f32 0.0, %v4440
        %v4442 = vpop.f32.mrb[0].mxu0
        %v4443 = vadd.f32 0.0, %v4442
        %4444 = vmatprep.mubr.f32.mxu0 0.0
        %4445 = vmatmul.mubr.f32.gmra.mrb[0].mxu0 %v4300
        %v4446 = vpop.f32.mrb[0].mxu0
        %v4447 = vadd.f32 0.0, %v4446
        %v4448 = vpop.f32.mrb[0].mxu0
        %v4449 = vadd.f32 0.0, %v4448
        %4450 = vmatprep.mubr.f32.mxu0 0.0
        %4451 = vmatmul.mubr.f32.gmra.mrb[0].mxu0 %v4303
        %v4452 = vpop.f32.mrb[0].mxu0
        %v4453 = vadd.f32 0.0, %v4452
        %v4454 = vpop.f32.mrb[0].mxu0
        %v4455 = vadd.f32 0.0, %v4454
        %4456 = vmatprep.mubr.f32.mxu0 0.0
        %4457 = vmatmul.mubr.f32.gmra.mrb[0].mxu0 %v4306
        %v4458 = vpop.f32.mrb[0].mxu0
        %v4459 = vadd.f32 0.0, %v4458
        %v4460 = vpop.f32.mrb[0].mxu0
        %v4461 = vadd.f32 0.0, %v4460
        %4462 = vdwg.mxu0
        %v4463 = vadd.f32 %v4201, %v4381
        %v4464 = vadd.f32 %v4202, %v4383
        %v4465 = vadd.f32 %v4203, %v4387
        %v4466 = vadd.f32 %v4204, %v4389
        %v4467 = vadd.f32 %v4205, %v4393
        %v4468 = vadd.f32 %v4206, %v4395
        %v4469 = vadd.f32 %v4207, %v4399
        %v4470 = vadd.f32 %v4208, %v4401
        %v4471 = vadd.f32 %v4209, %v4405
        %v4472 = vadd.f32 %v4210, %v4407
        %v4473 = vadd.f32 %v4211, %v4411
        %v4474 = vadd.f32 %v4212, %v4413
        %v4475 = vadd.f32 %v4213, %v4417
        %v4476 = vadd.f32 %v4214, %v4419
        %v4477 = vadd.f32 %v4215, %v4423
        %v4478 = vadd.f32 %v4216, %v4425
        %v4479 = vadd.f32 %v4217, %v4429
        %v4480 = vadd.f32 %v4218, %v4431
        %v4481 = vadd.f32 %v4219, %v4435
        %v4482 = vadd.f32 %v4220, %v4437
        %v4483 = vadd.f32 %v4221, %v4441
        %v4484 = vadd.f32 %v4222, %v4443
        %v4485 = vadd.f32 %v4223, %v4447
        %v4486 = vadd.f32 %v4224, %v4449
        %v4487 = vadd.f32 %v4225, %v4453
        %v4488 = vadd.f32 %v4226, %v4455
        %v4489 = vadd.f32 %v4227, %v4459
        %v4490 = vadd.f32 %v4228, %v4461
        %v4491 = vld [vmem:[%s6] sm:$0x3]
        %v4493 = vlaneseq
        %v4494 = vshrl.u32 %v4493, 7
        %v4495 = vsub.s32 0, %v4494
        %v4496 = vrot.slane %v4491, %v4495
        %v4497 = vlaneseq
        %v4498 = vshrl.u32 %v4497, 7
        %v4499 = vsub.s32 1, %v4498
        %v4500 = vrot.slane %v4491, %v4499
        %v4503 = vadd.f32 %v4463, %v4496
        %v4504 = vadd.f32 %v4464, %v4500
        %v4505 = vadd.f32 %v4465, %v4496
        %v4506 = vadd.f32 %v4466, %v4500
        %v4507 = vadd.f32 %v4467, %v4496
        %v4508 = vadd.f32 %v4468, %v4500
        %v4509 = vadd.f32 %v4469, %v4496
        %v4510 = vadd.f32 %v4470, %v4500
        %v4511 = vadd.f32 %v4471, %v4496
        %v4512 = vadd.f32 %v4472, %v4500
        %v4513 = vadd.f32 %v4473, %v4496
        %v4514 = vadd.f32 %v4474, %v4500
        %v4515 = vadd.f32 %v4475, %v4496
        %v4516 = vadd.f32 %v4476, %v4500
        %v4517 = vadd.f32 %v4477, %v4496
        %v4518 = vadd.f32 %v4478, %v4500
        %v4519 = vadd.f32 %v4479, %v4496
        %v4520 = vadd.f32 %v4480, %v4500
        %v4521 = vadd.f32 %v4481, %v4496
        %v4522 = vadd.f32 %v4482, %v4500
        %v4523 = vadd.f32 %v4483, %v4496
        %v4524 = vadd.f32 %v4484, %v4500
        %v4525 = vadd.f32 %v4485, %v4496
        %v4526 = vadd.f32 %v4486, %v4500
        %v4527 = vadd.f32 %v4487, %v4496
        %v4528 = vadd.f32 %v4488, %v4500
        %v4529 = vadd.f32 %v4489, %v4496
        %v4530 = vadd.f32 %v4490, %v4500
        %v4531 = vtanh.pop %v4503
        %v4532 = vtanh.pop %v4504
        %v4533 = vtanh.pop %v4505
        %v4534 = vtanh.pop %v4506
        %v4535 = vtanh.pop %v4507
        %v4536 = vtanh.pop %v4508
        %v4537 = vtanh.pop %v4509
        %v4538 = vtanh.pop %v4510
        %v4539 = vtanh.pop %v4511
        %v4540 = vtanh.pop %v4512
        %v4541 = vtanh.pop %v4513
        %v4542 = vtanh.pop %v4514
        %v4543 = vtanh.pop %v4515
        %v4544 = vtanh.pop %v4516
        %v4545 = vtanh.pop %v4517
        %v4546 = vtanh.pop %v4518
        %v4547 = vtanh.pop %v4519
        %v4548 = vtanh.pop %v4520
        %v4549 = vtanh.pop %v4521
        %v4550 = vtanh.pop %v4522
        %v4551 = vtanh.pop %v4523
        %v4552 = vtanh.pop %v4524
        %v4553 = vtanh.pop %v4525
        %v4554 = vtanh.pop %v4526
        %v4555 = vtanh.pop %v4527
        %v4556 = vtanh.pop %v4528
        %v4557 = vtanh.pop %v4529
        %v4558 = vtanh.pop %v4530
        %v4559 = vld [vmem:[%s7] sm:$0xff]
        %v4560 = vld [vmem:[%s7 + $0x8] sm:$0xff]
        %v4561 = vld [vmem:[%s7 + $0x10] sm:$0xff]
        %v4562 = vld [vmem:[%s7 + $0x18] sm:$0xff]
        %v4563 = vld [vmem:[%s7 + $0x20] sm:$0xff]
        %vm4564 = vcmask 883712
        %v4566 = vsel %vm4564, %v4559, 0
        %v4569 = vsel %vm4564, %v4560, 0
        %v4572 = vsel %vm4564, %v4561, 0
        %v4575 = vsel %vm4564, %v4562, 0
        %v4578 = vsel %vm4564, %v4563, 0
        %v4581 = vsel %vm2868, %v4557, 0
        %v4584 = vsel %vm2868, %v4558, 0
        %4586 = vmatprep.subr.mxu0 %v4532
        %4587 = vmatpush1.msra.mxu0 %v4531
        %4588 = vmatprep.subr.mxu0 %v4534
        %4589 = vmatpush1.msra.mxu0 %v4533
        %4590 = vmatprep.subr.mxu0 %v4536
        %4591 = vmatpush1.msra.mxu0 %v4535
        %4592 = vmatprep.subr.mxu0 %v4538
        %4593 = vmatpush1.msra.mxu0 %v4537
        %4594 = vmatprep.subr.mxu0 %v4540
        %4595 = vmatpush1.msra.mxu0 %v4539
        %4596 = vmatprep.subr.mxu0 %v4542
        %4597 = vmatpush1.msra.mxu0 %v4541
        %4598 = vmatprep.subr.mxu0 %v4544
        %4599 = vmatpush1.msra.mxu0 %v4543
        %4600 = vmatprep.subr.mxu0 %v4546
        %4601 = vmatpush1.msra.mxu0 %v4545
        %4602 = vmatprep.subr.mxu0 %v4548
        %4603 = vmatpush1.msra.mxu0 %v4547
        %4604 = vmatprep.subr.mxu0 %v4550
        %4605 = vmatpush1.msra.mxu0 %v4549
        %4606 = vmatprep.subr.mxu0 %v4552
        %4607 = vmatpush1.msra.mxu0 %v4551
        %4608 = vmatprep.subr.mxu0 %v4554
        %4609 = vmatpush1.msra.mxu0 %v4553
        %4610 = vmatprep.subr.mxu0 %v4556
        %4611 = vmatpush1.msra.mxu0 %v4555
        %4612 = vmatprep.subr.mxu0 %v4584
        %4613 = vmatpush1.msra.mxu0 %v4581
        %4614 = vmatprep.subr.mxu0 0.0
        %4615 = vmatpush1.msra.mxu0 0.0
        %4616 = vmatprep.subr.mxu0 0.0
        %4617 = vmatpush1.msra.mxu0 0.0
        %4618 = vmatprep.subr.mxu0 0.0
        %4619 = vmatpush1.msra.mxu0 0.0
        %4620 = vmatprep.subr.mxu0 0.0
        %4621 = vmatpush1.msra.mxu0 0.0
        %4622 = vmatprep.subr.mxu0 0.0
        %4623 = vmatpush1.msra.mxu0 0.0
        %4624 = vmatprep.subr.mxu0 0.0
        %4625 = vmatpush1.msra.mxu0 0.0
        %4626 = vmatprep.subr.mxu0 0.0
        %4627 = vmatpush1.msra.mxu0 0.0
        %4628 = vmatprep.subr.mxu0 0.0
        %4629 = vmatpush1.msra.mxu0 0.0
        %4630 = vmatprep.subr.mxu0 0.0
        %4631 = vmatpush1.msra.mxu0 0.0
        %4632 = vmatprep.subr.mxu0 0.0
        %4633 = vmatpush1.msra.mxu0 0.0
        %4634 = vmatprep.subr.mxu0 0.0
        %4635 = vmatpush1.msra.mxu0 0.0
        %4636 = vmatprep.subr.mxu0 0.0
        %4637 = vmatpush1.msra.mxu0 0.0
        %4638 = vmatprep.subr.mxu0 0.0
        %4639 = vmatpush1.msra.mxu0 0.0
        %4640 = vmatprep.subr.mxu0 0.0
        %4641 = vmatpush1.msra.mxu0 0.0
        %4642 = vmatprep.subr.mxu0 0.0
        %4643 = vmatpush1.msra.mxu0 0.0
        %4644 = vmatprep.subr.mxu0 0.0
        %4645 = vmatpush1.msra.mxu0 0.0
        %4646 = vmatprep.subr.mxu0 0.0
        %4647 = vmatpush1.msra.mxu0 0.0
        %4648 = vmatprep.subr.mxu0 0.0
        %4649 = vmatpush1.msra.mxu0 0.0
        %4650 = vmatprep.mubr.f32.mxu0 0.0
        %4651 = vmatmul.mubr.f32.gmra.mrb[0].mxu0 %v4566
        %v4652 = vpop.f32.mrb[0].mxu0
        %v4653 = vadd.f32 0.0, %v4652
        %v4654 = vpop.f32.mrb[0].mxu0
        %v4655 = vadd.f32 0.0, %v4654
        %4656 = vmatprep.mubr.f32.mxu0 0.0
        %4657 = vmatmul.mubr.f32.gmra.mrb[0].mxu0 %v4569
        %v4658 = vpop.f32.mrb[0].mxu0
        %v4659 = vadd.f32 0.0, %v4658
        %v4660 = vpop.f32.mrb[0].mxu0
        %v4661 = vadd.f32 0.0, %v4660
        %4662 = vmatprep.mubr.f32.mxu0 0.0
        %4663 = vmatmul.mubr.f32.gmra.mrb[0].mxu0 %v4572
        %v4664 = vpop.f32.mrb[0].mxu0
        %v4665 = vadd.f32 0.0, %v4664
        %v4666 = vpop.f32.mrb[0].mxu0
        %v4667 = vadd.f32 0.0, %v4666
        %4668 = vmatprep.mubr.f32.mxu0 0.0
        %4669 = vmatmul.mubr.f32.gmra.mrb[0].mxu0 %v4575
        %v4670 = vpop.f32.mrb[0].mxu0
        %v4671 = vadd.f32 0.0, %v4670
        %v4672 = vpop.f32.mrb[0].mxu0
        %v4673 = vadd.f32 0.0, %v4672
        %4674 = vmatprep.mubr.f32.mxu0 0.0
        %4675 = vmatmul.mubr.f32.gmra.mrb[0].mxu0 %v4578
        %v4676 = vpop.f32.mrb[0].mxu0
        %v4677 = vadd.f32 0.0, %v4676
        %v4678 = vpop.f32.mrb[0].mxu0
        %v4679 = vadd.f32 0.0, %v4678
        %4680 = vdwg.mxu0
        %v4681 = vld [vmem:[%s8] sm:$0xff]
        %v4682 = vld [vmem:[%s8 + $0x8] sm:$0xff]
        %v4683 = vld [vmem:[%s8 + $0x10] sm:$0xff]
        %v4684 = vld [vmem:[%s8 + $0x18] sm:$0xff]
        %v4685 = vld [vmem:[%s8 + $0x20] sm:$0xff]
        %v4686 = vld [vmem:[%s8 + $0x28] sm:$0xff]
        %v4687 = vld [vmem:[%s8 + $0x30] sm:$0xff]
        %v4688 = vld [vmem:[%s8 + $0x38] sm:$0xff]
        %v4689 = vld [vmem:[%s8 + $0x40] sm:$0xff]
        %v4690 = vld [vmem:[%s8 + $0x48] sm:$0xff]
        %v4691 = vld [vmem:[%s8 + $0x50] sm:$0xff]
        %v4692 = vld [vmem:[%s8 + $0x58] sm:$0xff]
        %v4693 = vld [vmem:[%s8 + $0x60] sm:$0xff]
        %v4694 = vld [vmem:[%s8 + $0x68] sm:$0xff]
        %v4695 = vld [vmem:[%s8 + $0x70] sm:$0xff]
        %v4696 = vld [vmem:[%s8 + $0x78] sm:$0xff]
        %v4697 = vld [vmem:[%s8 + $0x80] sm:$0xff]
        %v4698 = vld [vmem:[%s8 + $0x88] sm:$0xff]
        %v4699 = vld [vmem:[%s8 + $0x90] sm:$0xff]
        %v4700 = vld [vmem:[%s8 + $0x98] sm:$0xff]
        %v4702 = vsel %vm576, %v4655, 0
        %v4705 = vsel %vm576, %v4661, 0
        %v4708 = vsel %vm576, %v4667, 0
        %v4711 = vsel %vm576, %v4673, 0
        %v4714 = vsel %vm576, %v4679, 0
        %4716 = vmatprep.subr.mxu0 0.0
        %4717 = vmatpush1.msra.mxu0 %v4681
        %4718 = vmatprep.subr.mxu0 0.0
        %4719 = vmatpush1.msra.mxu0 %v4682
        %4720 = vmatprep.subr.mxu0 0.0
        %4721 = vmatpush1.msra.mxu0 %v4683
        %4722 = vmatprep.subr.mxu0 0.0
        %4723 = vmatpush1.msra.mxu0 %v4684
        %4724 = vmatprep.subr.mxu0 0.0
        %4725 = vmatpush1.msra.mxu0 %v4685
        %4726 = vmatprep.subr.mxu0 0.0
        %4727 = vmatpush1.msra.mxu0 %v4686
        %4728 = vmatprep.subr.mxu0 0.0
        %4729 = vmatpush1.msra.mxu0 %v4687
        %4730 = vmatprep.subr.mxu0 0.0
        %4731 = vmatpush1.msra.mxu0 %v4688
        %4732 = vmatprep.subr.mxu0 0.0
        %4733 = vmatpush1.msra.mxu0 %v4689
        %4734 = vmatprep.subr.mxu0 0.0
        %4735 = vmatpush1.msra.mxu0 %v4690
        %4736 = vmatprep.subr.mxu0 0.0
        %4737 = vmatpush1.msra.mxu0 %v4691
        %4738 = vmatprep.subr.mxu0 0.0
        %4739 = vmatpush1.msra.mxu0 %v4692
        %4740 = vmatprep.subr.mxu0 0.0
        %4741 = vmatpush1.msra.mxu0 %v4693
        %4742 = vmatprep.subr.mxu0 0.0
        %4743 = vmatpush1.msra.mxu0 %v4694
        %4744 = vmatprep.subr.mxu0 0.0
        %4745 = vmatpush1.msra.mxu0 %v4695
        %4746 = vmatprep.subr.mxu0 0.0
        %4747 = vmatpush1.msra.mxu0 %v4696
        %4748 = vmatprep.subr.mxu0 0.0
        %4749 = vmatpush1.msra.mxu0 %v4697
        %4750 = vmatprep.subr.mxu0 0.0
        %4751 = vmatpush1.msra.mxu0 %v4698
        %4752 = vmatprep.subr.mxu0 0.0
        %4753 = vmatpush1.msra.mxu0 %v4699
        %4754 = vmatprep.subr.mxu0 0.0
        %4755 = vmatpush1.msra.mxu0 %v4700
        %4756 = vmatprep.subr.mxu0 0.0
        %4757 = vmatpush1.msra.mxu0 0.0
        %4758 = vmatprep.subr.mxu0 0.0
        %4759 = vmatpush1.msra.mxu0 0.0
        %4760 = vmatprep.subr.mxu0 0.0
        %4761 = vmatpush1.msra.mxu0 0.0
        %4762 = vmatprep.subr.mxu0 0.0
        %4763 = vmatpush1.msra.mxu0 0.0
        %4764 = vmatprep.subr.mxu0 0.0
        %4765 = vmatpush1.msra.mxu0 0.0
        %4766 = vmatprep.subr.mxu0 0.0
        %4767 = vmatpush1.msra.mxu0 0.0
        %4768 = vmatprep.subr.mxu0 0.0
        %4769 = vmatpush1.msra.mxu0 0.0
        %4770 = vmatprep.subr.mxu0 0.0
        %4771 = vmatpush1.msra.mxu0 0.0
        %4772 = vmatprep.subr.mxu0 0.0
        %4773 = vmatpush1.msra.mxu0 0.0
        %4774 = vmatprep.subr.mxu0 0.0
        %4775 = vmatpush1.msra.mxu0 0.0
        %4776 = vmatprep.subr.mxu0 0.0
        %4777 = vmatpush1.msra.mxu0 0.0
        %4778 = vmatprep.subr.mxu0 0.0
        %4779 = vmatpush1.msra.mxu0 0.0
        %4780 = vmatprep.mubr.f32.mxu0 %v4702
        %4781 = vmatmul.mubr.f32.gmra.mrb[0].mxu0 %v4653
        %v4782 = vpop.f32.mrb[0].mxu0
        %v4783 = vadd.f32 0.0, %v4782
        %v4784 = vpop.f32.mrb[0].mxu0
        %4785 = vmatprep.mubr.f32.mxu0 %v4705
        %4786 = vmatmul.mubr.f32.gmra.mrb[0].mxu0 %v4659
        %v4787 = vpop.f32.mrb[0].mxu0
        %v4788 = vadd.f32 0.0, %v4787
        %v4789 = vpop.f32.mrb[0].mxu0
        %4790 = vmatprep.mubr.f32.mxu0 %v4708
        %4791 = vmatmul.mubr.f32.gmra.mrb[0].mxu0 %v4665
        %v4792 = vpop.f32.mrb[0].mxu0
        %v4793 = vadd.f32 0.0, %v4792
        %v4794 = vpop.f32.mrb[0].mxu0
        %4795 = vmatprep.mubr.f32.mxu0 %v4711
        %4796 = vmatmul.mubr.f32.gmra.mrb[0].mxu0 %v4671
        %v4797 = vpop.f32.mrb[0].mxu0
        %v4798 = vadd.f32 0.0, %v4797
        %v4799 = vpop.f32.mrb[0].mxu0
        %4800 = vmatprep.mubr.f32.mxu0 %v4714
        %4801 = vmatmul.mubr.f32.gmra.mrb[0].mxu0 %v4677
        %v4802 = vpop.f32.mrb[0].mxu0
        %v4803 = vadd.f32 0.0, %v4802
        %v4804 = vpop.f32.mrb[0].mxu0
        %4805 = vdwg.mxu0
        %v4806 = vld [vmem:[%s9] sm:$0xff]
        %v4807 = vld [vmem:[%s9 + $0x8] sm:$0xff]
        %v4808 = vld [vmem:[%s9 + $0x10] sm:$0xff]
        %v4809 = vld [vmem:[%s9 + $0x18] sm:$0xff]
        %v4810 = vld [vmem:[%s9 + $0x20] sm:$0xff]
        %v4811 = vld [vmem:[%s9 + $0x28] sm:$0xff]
        %v4812 = vld [vmem:[%s9 + $0x30] sm:$0xff]
        %v4813 = vld [vmem:[%s9 + $0x38] sm:$0xff]
        %v4814 = vld [vmem:[%s9 + $0x40] sm:$0xff]
        %v4815 = vld [vmem:[%s9 + $0x48] sm:$0xff]
        %s4816 = scalar_lea.vmem %s9, 80
        %v4817 = vld [vmem:[%s4816] sm:$0xff]
        %v4818 = vld [vmem:[%s4816 + $0x8] sm:$0xff]
        %v4819 = vld [vmem:[%s4816 + $0x10] sm:$0xff]
        %v4820 = vld [vmem:[%s4816 + $0x18] sm:$0xff]
        %v4821 = vld [vmem:[%s4816 + $0x20] sm:$0xff]
        %v4822 = vld [vmem:[%s4816 + $0x28] sm:$0xff]
        %v4823 = vld [vmem:[%s4816 + $0x30] sm:$0xff]
        %v4824 = vld [vmem:[%s4816 + $0x38] sm:$0xff]
        %v4825 = vld [vmem:[%s4816 + $0x40] sm:$0xff]
        %v4826 = vld [vmem:[%s4816 + $0x48] sm:$0xff]
        %vm4827 = vcmask 654336
        %v4829 = vsel %vm4827, %v4788, 0
        %4831 = vmatprep.subr.mxu0 0.0
        %4832 = vmatpush1.msra.mxu0 %v4817
        %4833 = vmatprep.subr.mxu0 0.0
        %4834 = vmatpush1.msra.mxu0 %v4818
        %4835 = vmatprep.subr.mxu0 0.0
        %4836 = vmatpush1.msra.mxu0 %v4819
        %4837 = vmatprep.subr.mxu0 0.0
        %4838 = vmatpush1.msra.mxu0 %v4820
        %4839 = vmatprep.subr.mxu0 0.0
        %4840 = vmatpush1.msra.mxu0 %v4821
        %4841 = vmatprep.subr.mxu0 0.0
        %4842 = vmatpush1.msra.mxu0 %v4822
        %4843 = vmatprep.subr.mxu0 0.0
        %4844 = vmatpush1.msra.mxu0 %v4823
        %4845 = vmatprep.subr.mxu0 0.0
        %4846 = vmatpush1.msra.mxu0 %v4824
        %4847 = vmatprep.subr.mxu0 0.0
        %4848 = vmatpush1.msra.mxu0 %v4825
        %4849 = vmatprep.subr.mxu0 0.0
        %4850 = vmatpush1.msra.mxu0 %v4826
        %4851 = vmatprep.subr.mxu0 0.0
        %4852 = vmatpush1.msra.mxu0 0.0
        %4853 = vmatprep.subr.mxu0 0.0
        %4854 = vmatpush1.msra.mxu0 0.0
        %4855 = vmatprep.subr.mxu0 0.0
        %4856 = vmatpush1.msra.mxu0 0.0
        %4857 = vmatprep.subr.mxu0 0.0
        %4858 = vmatpush1.msra.mxu0 0.0
        %4859 = vmatprep.subr.mxu0 0.0
        %4860 = vmatpush1.msra.mxu0 0.0
        %4861 = vmatprep.subr.mxu0 0.0
        %4862 = vmatpush1.msra.mxu0 0.0
        %4863 = vmatprep.subr.mxu0 0.0
        %4864 = vmatpush1.msra.mxu0 0.0
        %4865 = vmatprep.subr.mxu0 0.0
        %4866 = vmatpush1.msra.mxu0 0.0
        %4867 = vmatprep.subr.mxu0 0.0
        %4868 = vmatpush1.msra.mxu0 0.0
        %4869 = vmatprep.subr.mxu0 0.0
        %4870 = vmatpush1.msra.mxu0 0.0
        %4871 = vmatprep.subr.mxu0 0.0
        %4872 = vmatpush1.msra.mxu0 0.0
        %4873 = vmatprep.subr.mxu0 0.0
        %4874 = vmatpush1.msra.mxu0 0.0
        %4875 = vmatprep.subr.mxu0 0.0
        %4876 = vmatpush1.msra.mxu0 0.0
        %4877 = vmatprep.subr.mxu0 0.0
        %4878 = vmatpush1.msra.mxu0 0.0
        %4879 = vmatprep.subr.mxu0 0.0
        %4880 = vmatpush1.msra.mxu0 0.0
        %4881 = vmatprep.subr.mxu0 0.0
        %4882 = vmatpush1.msra.mxu0 0.0
        %4883 = vmatprep.subr.mxu0 0.0
        %4884 = vmatpush1.msra.mxu0 0.0
        %4885 = vmatprep.subr.mxu0 0.0
        %4886 = vmatpush1.msra.mxu0 0.0
        %4887 = vmatprep.subr.mxu0 0.0
        %4888 = vmatpush1.msra.mxu0 0.0
        %4889 = vmatprep.subr.mxu0 0.0
        %4890 = vmatpush1.msra.mxu0 0.0
        %4891 = vmatprep.subr.mxu0 0.0
        %4892 = vmatpush1.msra.mxu0 0.0
        %4893 = vmatprep.subr.mxu0 0.0
        %4894 = vmatpush1.msra.mxu0 0.0
        %4895 = vmatprep.mubr.f32.mxu0 0.0
        %4896 = vmatmul.mubr.f32.gmra.mrb[0].mxu0 %v4829
        %v4897 = vpop.f32.mrb[0].mxu0
        %v4898 = vadd.f32 0.0, %v4897
        %v4899 = vpop.f32.mrb[0].mxu0
        %4900 = vdwg.mxu0
        %v4902 = vsel %vm4827, %v4783, 0
        %4904 = vmatprep.subr.mxu0 0.0
        %4905 = vmatpush1.msra.mxu0 %v4806
        %4906 = vmatprep.subr.mxu0 0.0
        %4907 = vmatpush1.msra.mxu0 %v4807
        %4908 = vmatprep.subr.mxu0 0.0
        %4909 = vmatpush1.msra.mxu0 %v4808
        %4910 = vmatprep.subr.mxu0 0.0
        %4911 = vmatpush1.msra.mxu0 %v4809
        %4912 = vmatprep.subr.mxu0 0.0
        %4913 = vmatpush1.msra.mxu0 %v4810
        %4914 = vmatprep.subr.mxu0 0.0
        %4915 = vmatpush1.msra.mxu0 %v4811
        %4916 = vmatprep.subr.mxu0 0.0
        %4917 = vmatpush1.msra.mxu0 %v4812
        %4918 = vmatprep.subr.mxu0 0.0
        %4919 = vmatpush1.msra.mxu0 %v4813
        %4920 = vmatprep.subr.mxu0 0.0
        %4921 = vmatpush1.msra.mxu0 %v4814
        %4922 = vmatprep.subr.mxu0 0.0
        %4923 = vmatpush1.msra.mxu0 %v4815
        %4924 = vmatprep.subr.mxu0 0.0
        %4925 = vmatpush1.msra.mxu0 0.0
        %4926 = vmatprep.subr.mxu0 0.0
        %4927 = vmatpush1.msra.mxu0 0.0
        %4928 = vmatprep.subr.mxu0 0.0
        %4929 = vmatpush1.msra.mxu0 0.0
        %4930 = vmatprep.subr.mxu0 0.0
        %4931 = vmatpush1.msra.mxu0 0.0
        %4932 = vmatprep.subr.mxu0 0.0
        %4933 = vmatpush1.msra.mxu0 0.0
        %4934 = vmatprep.subr.mxu0 0.0
        %4935 = vmatpush1.msra.mxu0 0.0
        %4936 = vmatprep.subr.mxu0 0.0
        %4937 = vmatpush1.msra.mxu0 0.0
        %4938 = vmatprep.subr.mxu0 0.0
        %4939 = vmatpush1.msra.mxu0 0.0
        %4940 = vmatprep.subr.mxu0 0.0
        %4941 = vmatpush1.msra.mxu0 0.0
        %4942 = vmatprep.subr.mxu0 0.0
        %4943 = vmatpush1.msra.mxu0 0.0
        %4944 = vmatprep.subr.mxu0 0.0
        %4945 = vmatpush1.msra.mxu0 0.0
        %4946 = vmatprep.subr.mxu0 0.0
        %4947 = vmatpush1.msra.mxu0 0.0
        %4948 = vmatprep.subr.mxu0 0.0
        %4949 = vmatpush1.msra.mxu0 0.0
        %4950 = vmatprep.subr.mxu0 0.0
        %4951 = vmatpush1.msra.mxu0 0.0
        %4952 = vmatprep.subr.mxu0 0.0
        %4953 = vmatpush1.msra.mxu0 0.0
        %4954 = vmatprep.subr.mxu0 0.0
        %4955 = vmatpush1.msra.mxu0 0.0
        %4956 = vmatprep.subr.mxu0 0.0
        %4957 = vmatpush1.msra.mxu0 0.0
        %4958 = vmatprep.subr.mxu0 0.0
        %4959 = vmatpush1.msra.mxu0 0.0
        %4960 = vmatprep.subr.mxu0 0.0
        %4961 = vmatpush1.msra.mxu0 0.0
        %4962 = vmatprep.subr.mxu0 0.0
        %4963 = vmatpush1.msra.mxu0 0.0
        %4964 = vmatprep.subr.mxu0 0.0
        %4965 = vmatpush1.msra.mxu0 0.0
        %4966 = vmatprep.subr.mxu0 0.0
        %4967 = vmatpush1.msra.mxu0 0.0
        %4968 = vmatprep.mubr.f32.mxu0 0.0
        %4969 = vmatmul.mubr.f32.gmra.mrb[0].mxu0 %v4902
        %v4970 = vpop.f32.mrb[0].mxu0
        %v4971 = vadd.f32 %v4898, %v4970
        %v4972 = vpop.f32.mrb[0].mxu0
        %4973 = vdwg.mxu0
        %s4974 = scalar_lea.vmem %s9, 160
        %v4975 = vld [vmem:[%s4974] sm:$0xff]
        %v4976 = vld [vmem:[%s4974 + $0x8] sm:$0xff]
        %v4977 = vld [vmem:[%s4974 + $0x10] sm:$0xff]
        %v4978 = vld [vmem:[%s4974 + $0x18] sm:$0xff]
        %v4979 = vld [vmem:[%s4974 + $0x20] sm:$0xff]
        %v4980 = vld [vmem:[%s4974 + $0x28] sm:$0xff]
        %v4981 = vld [vmem:[%s4974 + $0x30] sm:$0xff]
        %v4982 = vld [vmem:[%s4974 + $0x38] sm:$0xff]
        %v4983 = vld [vmem:[%s4974 + $0x40] sm:$0xff]
        %v4984 = vld [vmem:[%s4974 + $0x48] sm:$0xff]
        %v4986 = vsel %vm4827, %v4793, 0
        %4988 = vmatprep.subr.mxu0 0.0
        %4989 = vmatpush1.msra.mxu0 %v4975
        %4990 = vmatprep.subr.mxu0 0.0
        %4991 = vmatpush1.msra.mxu0 %v4976
        %4992 = vmatprep.subr.mxu0 0.0
        %4993 = vmatpush1.msra.mxu0 %v4977
        %4994 = vmatprep.subr.mxu0 0.0
        %4995 = vmatpush1.msra.mxu0 %v4978
        %4996 = vmatprep.subr.mxu0 0.0
        %4997 = vmatpush1.msra.mxu0 %v4979
        %4998 = vmatprep.subr.mxu0 0.0
        %4999 = vmatpush1.msra.mxu0 %v4980
        %5000 = vmatprep.subr.mxu0 0.0
        %5001 = vmatpush1.msra.mxu0 %v4981
        %5002 = vmatprep.subr.mxu0 0.0
        %5003 = vmatpush1.msra.mxu0 %v4982
        %5004 = vmatprep.subr.mxu0 0.0
        %5005 = vmatpush1.msra.mxu0 %v4983
        %5006 = vmatprep.subr.mxu0 0.0
        %5007 = vmatpush1.msra.mxu0 %v4984
        %5008 = vmatprep.subr.mxu0 0.0
        %5009 = vmatpush1.msra.mxu0 0.0
        %5010 = vmatprep.subr.mxu0 0.0
        %5011 = vmatpush1.msra.mxu0 0.0
        %5012 = vmatprep.subr.mxu0 0.0
        %5013 = vmatpush1.msra.mxu0 0.0
        %5014 = vmatprep.subr.mxu0 0.0
        %5015 = vmatpush1.msra.mxu0 0.0
        %5016 = vmatprep.subr.mxu0 0.0
        %5017 = vmatpush1.msra.mxu0 0.0
        %5018 = vmatprep.subr.mxu0 0.0
        %5019 = vmatpush1.msra.mxu0 0.0
        %5020 = vmatprep.subr.mxu0 0.0
        %5021 = vmatpush1.msra.mxu0 0.0
        %5022 = vmatprep.subr.mxu0 0.0
        %5023 = vmatpush1.msra.mxu0 0.0
        %5024 = vmatprep.subr.mxu0 0.0
        %5025 = vmatpush1.msra.mxu0 0.0
        %5026 = vmatprep.subr.mxu0 0.0
        %5027 = vmatpush1.msra.mxu0 0.0
        %5028 = vmatprep.subr.mxu0 0.0
        %5029 = vmatpush1.msra.mxu0 0.0
        %5030 = vmatprep.subr.mxu0 0.0
        %5031 = vmatpush1.msra.mxu0 0.0
        %5032 = vmatprep.subr.mxu0 0.0
        %5033 = vmatpush1.msra.mxu0 0.0
        %5034 = vmatprep.subr.mxu0 0.0
        %5035 = vmatpush1.msra.mxu0 0.0
        %5036 = vmatprep.subr.mxu0 0.0
        %5037 = vmatpush1.msra.mxu0 0.0
        %5038 = vmatprep.subr.mxu0 0.0
        %5039 = vmatpush1.msra.mxu0 0.0
        %5040 = vmatprep.subr.mxu0 0.0
        %5041 = vmatpush1.msra.mxu0 0.0
        %5042 = vmatprep.subr.mxu0 0.0
        %5043 = vmatpush1.msra.mxu0 0.0
        %5044 = vmatprep.subr.mxu0 0.0
        %5045 = vmatpush1.msra.mxu0 0.0
        %5046 = vmatprep.subr.mxu0 0.0
        %5047 = vmatpush1.msra.mxu0 0.0
        %5048 = vmatprep.subr.mxu0 0.0
        %5049 = vmatpush1.msra.mxu0 0.0
        %5050 = vmatprep.subr.mxu0 0.0
        %5051 = vmatpush1.msra.mxu0 0.0
        %5052 = vmatprep.mubr.f32.mxu0 0.0
        %5053 = vmatmul.mubr.f32.gmra.mrb[0].mxu0 %v4986
        %v5054 = vpop.f32.mrb[0].mxu0
        %v5055 = vadd.f32 0.0, %v5054
        %v5056 = vpop.f32.mrb[0].mxu0
        %5057 = vdwg.mxu0
        %v5058 = vadd.f32 %v4971, %v5055
        %s5059 = scalar_lea.vmem %s9, 240
        %v5060 = vld [vmem:[%s5059] sm:$0xff]
        %v5061 = vld [vmem:[%s5059 + $0x8] sm:$0xff]
        %v5062 = vld [vmem:[%s5059 + $0x10] sm:$0xff]
        %v5063 = vld [vmem:[%s5059 + $0x18] sm:$0xff]
        %v5064 = vld [vmem:[%s5059 + $0x20] sm:$0xff]
        %v5065 = vld [vmem:[%s5059 + $0x28] sm:$0xff]
        %v5066 = vld [vmem:[%s5059 + $0x30] sm:$0xff]
        %v5067 = vld [vmem:[%s5059 + $0x38] sm:$0xff]
        %v5068 = vld [vmem:[%s5059 + $0x40] sm:$0xff]
        %v5069 = vld [vmem:[%s5059 + $0x48] sm:$0xff]
        %v5071 = vsel %vm4827, %v4798, 0
        %5073 = vmatprep.subr.mxu0 0.0
        %5074 = vmatpush1.msra.mxu0 %v5060
        %5075 = vmatprep.subr.mxu0 0.0
        %5076 = vmatpush1.msra.mxu0 %v5061
        %5077 = vmatprep.subr.mxu0 0.0
        %5078 = vmatpush1.msra.mxu0 %v5062
        %5079 = vmatprep.subr.mxu0 0.0
        %5080 = vmatpush1.msra.mxu0 %v5063
        %5081 = vmatprep.subr.mxu0 0.0
        %5082 = vmatpush1.msra.mxu0 %v5064
        %5083 = vmatprep.subr.mxu0 0.0
        %5084 = vmatpush1.msra.mxu0 %v5065
        %5085 = vmatprep.subr.mxu0 0.0
        %5086 = vmatpush1.msra.mxu0 %v5066
        %5087 = vmatprep.subr.mxu0 0.0
        %5088 = vmatpush1.msra.mxu0 %v5067
        %5089 = vmatprep.subr.mxu0 0.0
        %5090 = vmatpush1.msra.mxu0 %v5068
        %5091 = vmatprep.subr.mxu0 0.0
        %5092 = vmatpush1.msra.mxu0 %v5069
        %5093 = vmatprep.subr.mxu0 0.0
        %5094 = vmatpush1.msra.mxu0 0.0
        %5095 = vmatprep.subr.mxu0 0.0
        %5096 = vmatpush1.msra.mxu0 0.0
        %5097 = vmatprep.subr.mxu0 0.0
        %5098 = vmatpush1.msra.mxu0 0.0
        %5099 = vmatprep.subr.mxu0 0.0
        %5100 = vmatpush1.msra.mxu0 0.0
        %5101 = vmatprep.subr.mxu0 0.0
        %5102 = vmatpush1.msra.mxu0 0.0
        %5103 = vmatprep.subr.mxu0 0.0
        %5104 = vmatpush1.msra.mxu0 0.0
        %5105 = vmatprep.subr.mxu0 0.0
        %5106 = vmatpush1.msra.mxu0 0.0
        %5107 = vmatprep.subr.mxu0 0.0
        %5108 = vmatpush1.msra.mxu0 0.0
        %5109 = vmatprep.subr.mxu0 0.0
        %5110 = vmatpush1.msra.mxu0 0.0
        %5111 = vmatprep.subr.mxu0 0.0
        %5112 = vmatpush1.msra.mxu0 0.0
        %5113 = vmatprep.subr.mxu0 0.0
        %5114 = vmatpush1.msra.mxu0 0.0
        %5115 = vmatprep.subr.mxu0 0.0
        %5116 = vmatpush1.msra.mxu0 0.0
        %5117 = vmatprep.subr.mxu0 0.0
        %5118 = vmatpush1.msra.mxu0 0.0
        %5119 = vmatprep.subr.mxu0 0.0
        %5120 = vmatpush1.msra.mxu0 0.0
        %5121 = vmatprep.subr.mxu0 0.0
        %5122 = vmatpush1.msra.mxu0 0.0
        %5123 = vmatprep.subr.mxu0 0.0
        %5124 = vmatpush1.msra.mxu0 0.0
        %5125 = vmatprep.subr.mxu0 0.0
        %5126 = vmatpush1.msra.mxu0 0.0
        %5127 = vmatprep.subr.mxu0 0.0
        %5128 = vmatpush1.msra.mxu0 0.0
        %5129 = vmatprep.subr.mxu0 0.0
        %5130 = vmatpush1.msra.mxu0 0.0
        %5131 = vmatprep.subr.mxu0 0.0
        %5132 = vmatpush1.msra.mxu0 0.0
        %5133 = vmatprep.subr.mxu0 0.0
        %5134 = vmatpush1.msra.mxu0 0.0
        %5135 = vmatprep.subr.mxu0 0.0
        %5136 = vmatpush1.msra.mxu0 0.0
        %5137 = vmatprep.mubr.f32.mxu0 0.0
        %5138 = vmatmul.mubr.f32.gmra.mrb[0].mxu0 %v5071
        %v5139 = vpop.f32.mrb[0].mxu0
        %v5140 = vadd.f32 0.0, %v5139
        %v5141 = vpop.f32.mrb[0].mxu0
        %5142 = vdwg.mxu0
        %v5143 = vadd.f32 %v5058, %v5140
        %s5144 = scalar_lea.vmem %s9, 320
        %v5145 = vld [vmem:[%s5144] sm:$0xff]
        %v5146 = vld [vmem:[%s5144 + $0x8] sm:$0xff]
        %v5147 = vld [vmem:[%s5144 + $0x10] sm:$0xff]
        %v5148 = vld [vmem:[%s5144 + $0x18] sm:$0xff]
        %v5149 = vld [vmem:[%s5144 + $0x20] sm:$0xff]
        %v5150 = vld [vmem:[%s5144 + $0x28] sm:$0xff]
        %v5151 = vld [vmem:[%s5144 + $0x30] sm:$0xff]
        %v5152 = vld [vmem:[%s5144 + $0x38] sm:$0xff]
        %v5153 = vld [vmem:[%s5144 + $0x40] sm:$0xff]
        %v5154 = vld [vmem:[%s5144 + $0x48] sm:$0xff]
        %v5156 = vsel %vm4827, %v4803, 0
        %5158 = vmatprep.subr.mxu0 0.0
        %5159 = vmatpush1.msra.mxu0 %v5145
        %5160 = vmatprep.subr.mxu0 0.0
        %5161 = vmatpush1.msra.mxu0 %v5146
        %5162 = vmatprep.subr.mxu0 0.0
        %5163 = vmatpush1.msra.mxu0 %v5147
        %5164 = vmatprep.subr.mxu0 0.0
        %5165 = vmatpush1.msra.mxu0 %v5148
        %5166 = vmatprep.subr.mxu0 0.0
        %5167 = vmatpush1.msra.mxu0 %v5149
        %5168 = vmatprep.subr.mxu0 0.0
        %5169 = vmatpush1.msra.mxu0 %v5150
        %5170 = vmatprep.subr.mxu0 0.0
        %5171 = vmatpush1.msra.mxu0 %v5151
        %5172 = vmatprep.subr.mxu0 0.0
        %5173 = vmatpush1.msra.mxu0 %v5152
        %5174 = vmatprep.subr.mxu0 0.0
        %5175 = vmatpush1.msra.mxu0 %v5153
        %5176 = vmatprep.subr.mxu0 0.0
        %5177 = vmatpush1.msra.mxu0 %v5154
        %5178 = vmatprep.subr.mxu0 0.0
        %5179 = vmatpush1.msra.mxu0 0.0
        %5180 = vmatprep.subr.mxu0 0.0
        %5181 = vmatpush1.msra.mxu0 0.0
        %5182 = vmatprep.subr.mxu0 0.0
        %5183 = vmatpush1.msra.mxu0 0.0
        %5184 = vmatprep.subr.mxu0 0.0
        %5185 = vmatpush1.msra.mxu0 0.0
        %5186 = vmatprep.subr.mxu0 0.0
        %5187 = vmatpush1.msra.mxu0 0.0
        %5188 = vmatprep.subr.mxu0 0.0
        %5189 = vmatpush1.msra.mxu0 0.0
        %5190 = vmatprep.subr.mxu0 0.0
        %5191 = vmatpush1.msra.mxu0 0.0
        %5192 = vmatprep.subr.mxu0 0.0
        %5193 = vmatpush1.msra.mxu0 0.0
        %5194 = vmatprep.subr.mxu0 0.0
        %5195 = vmatpush1.msra.mxu0 0.0
        %5196 = vmatprep.subr.mxu0 0.0
        %5197 = vmatpush1.msra.mxu0 0.0
        %5198 = vmatprep.subr.mxu0 0.0
        %5199 = vmatpush1.msra.mxu0 0.0
        %5200 = vmatprep.subr.mxu0 0.0
        %5201 = vmatpush1.msra.mxu0 0.0
        %5202 = vmatprep.subr.mxu0 0.0
        %5203 = vmatpush1.msra.mxu0 0.0
        %5204 = vmatprep.subr.mxu0 0.0
        %5205 = vmatpush1.msra.mxu0 0.0
        %5206 = vmatprep.subr.mxu0 0.0
        %5207 = vmatpush1.msra.mxu0 0.0
        %5208 = vmatprep.subr.mxu0 0.0
        %5209 = vmatpush1.msra.mxu0 0.0
        %5210 = vmatprep.subr.mxu0 0.0
        %5211 = vmatpush1.msra.mxu0 0.0
        %5212 = vmatprep.subr.mxu0 0.0
        %5213 = vmatpush1.msra.mxu0 0.0
        %5214 = vmatprep.subr.mxu0 0.0
        %5215 = vmatpush1.msra.mxu0 0.0
        %5216 = vmatprep.subr.mxu0 0.0
        %5217 = vmatpush1.msra.mxu0 0.0
        %5218 = vmatprep.subr.mxu0 0.0
        %5219 = vmatpush1.msra.mxu0 0.0
        %5220 = vmatprep.subr.mxu0 0.0
        %5221 = vmatpush1.msra.mxu0 0.0
        %5222 = vmatprep.mubr.f32.mxu0 0.0
        %5223 = vmatmul.mubr.f32.gmra.mrb[0].mxu0 %v5156
        %v5224 = vpop.f32.mrb[0].mxu0
        %v5225 = vadd.f32 0.0, %v5224
        %v5226 = vpop.f32.mrb[0].mxu0
        %5227 = vdwg.mxu0
        %v5228 = vadd.f32 %v5143, %v5225
        %v5229 = vld [vmem:[%s10] sm:$0x1]
        %v5231 = vlaneseq
        %v5232 = vshrl.u32 %v5231, 7
        %v5233 = vsub.s32 0, %v5232
        %v5234 = vrot.slane %v5229, %v5233
        %v5236 = vadd.f32 %v5228, %v5234
        %v5237 = vtanh.pop %v5236
        %v5238 = vld [vmem:[%s11] sm:$0xff]
        %v5239 = vld [vmem:[%s11 + $0x8] sm:$0xff]
        %v5240 = vld [vmem:[%s11 + $0x10] sm:$0xff]
        %v5241 = vld [vmem:[%s11 + $0x18] sm:$0xff]
        %v5242 = vld [vmem:[%s11 + $0x20] sm:$0xff]
        %v5243 = vld [vmem:[%s11 + $0x28] sm:$0xff]
        %v5244 = vld [vmem:[%s11 + $0x30] sm:$0xff]
        %v5245 = vld [vmem:[%s11 + $0x38] sm:$0xff]
        %v5246 = vld [vmem:[%s11 + $0x40] sm:$0xff]
        %v5247 = vld [vmem:[%s11 + $0x48] sm:$0xff]
        %v5248 = vld [vmem:[%s11 + $0x50] sm:$0xff]
        %v5249 = vld [vmem:[%s11 + $0x58] sm:$0xff]
        %v5250 = vld [vmem:[%s11 + $0x60] sm:$0xff]
        %v5251 = vld [vmem:[%s11 + $0x68] sm:$0xff]
        %v5252 = vld [vmem:[%s11 + $0x70] sm:$0xff]
        %v5253 = vld [vmem:[%s12] sm:$0x1]
        %v5255 = vlaneseq
        %v5256 = vshrl.u32 %v5255, 7
        %v5257 = vsub.s32 0, %v5256
        %v5258 = vrot.slane %v5253, %v5257
        %vm5260 = vcmask 982016
        %v5262 = vsel %vm5260, %v5237, 0
        %5264 = vmatprep.subr.mxu0 0.0
        %5265 = vmatpush1.msra.mxu0 %v5238
        %5266 = vmatprep.subr.mxu0 0.0
        %5267 = vmatpush1.msra.mxu0 %v5239
        %5268 = vmatprep.subr.mxu0 0.0
        %5269 = vmatpush1.msra.mxu0 %v5240
        %5270 = vmatprep.subr.mxu0 0.0
        %5271 = vmatpush1.msra.mxu0 %v5241
        %5272 = vmatprep.subr.mxu0 0.0
        %5273 = vmatpush1.msra.mxu0 %v5242
        %5274 = vmatprep.subr.mxu0 0.0
        %5275 = vmatpush1.msra.mxu0 %v5243
        %5276 = vmatprep.subr.mxu0 0.0
        %5277 = vmatpush1.msra.mxu0 %v5244
        %5278 = vmatprep.subr.mxu0 0.0
        %5279 = vmatpush1.msra.mxu0 %v5245
        %5280 = vmatprep.subr.mxu0 0.0
        %5281 = vmatpush1.msra.mxu0 %v5246
        %5282 = vmatprep.subr.mxu0 0.0
        %5283 = vmatpush1.msra.mxu0 %v5247
        %5284 = vmatprep.subr.mxu0 0.0
        %5285 = vmatpush1.msra.mxu0 %v5248
        %5286 = vmatprep.subr.mxu0 0.0
        %5287 = vmatpush1.msra.mxu0 %v5249
        %5288 = vmatprep.subr.mxu0 0.0
        %5289 = vmatpush1.msra.mxu0 %v5250
        %5290 = vmatprep.subr.mxu0 0.0
        %5291 = vmatpush1.msra.mxu0 %v5251
        %5292 = vmatprep.subr.mxu0 0.0
        %5293 = vmatpush1.msra.mxu0 %v5252
        %5294 = vmatprep.subr.mxu0 0.0
        %5295 = vmatpush1.msra.mxu0 0.0
        %5296 = vmatprep.subr.mxu0 0.0
        %5297 = vmatpush1.msra.mxu0 0.0
        %5298 = vmatprep.subr.mxu0 0.0
        %5299 = vmatpush1.msra.mxu0 0.0
        %5300 = vmatprep.subr.mxu0 0.0
        %5301 = vmatpush1.msra.mxu0 0.0
        %5302 = vmatprep.subr.mxu0 0.0
        %5303 = vmatpush1.msra.mxu0 0.0
        %5304 = vmatprep.subr.mxu0 0.0
        %5305 = vmatpush1.msra.mxu0 0.0
        %5306 = vmatprep.subr.mxu0 0.0
        %5307 = vmatpush1.msra.mxu0 0.0
        %5308 = vmatprep.subr.mxu0 0.0
        %5309 = vmatpush1.msra.mxu0 0.0
        %5310 = vmatprep.subr.mxu0 0.0
        %5311 = vmatpush1.msra.mxu0 0.0
        %5312 = vmatprep.subr.mxu0 0.0
        %5313 = vmatpush1.msra.mxu0 0.0
        %5314 = vmatprep.subr.mxu0 0.0
        %5315 = vmatpush1.msra.mxu0 0.0
        %5316 = vmatprep.subr.mxu0 0.0
        %5317 = vmatpush1.msra.mxu0 0.0
        %5318 = vmatprep.subr.mxu0 0.0
        %5319 = vmatpush1.msra.mxu0 0.0
        %5320 = vmatprep.subr.mxu0 0.0
        %5321 = vmatpush1.msra.mxu0 0.0
        %5322 = vmatprep.subr.mxu0 0.0
        %5323 = vmatpush1.msra.mxu0 0.0
        %5324 = vmatprep.subr.mxu0 0.0
        %5325 = vmatpush1.msra.mxu0 0.0
        %5326 = vmatprep.subr.mxu0 0.0
        %5327 = vmatpush1.msra.mxu0 0.0
        %5328 = vmatprep.mubr.f32.mxu0 0.0
        %5329 = vmatmul.mubr.f32.gmra.mrb[0].mxu0 %v5262
        %v5330 = vpop.f32.mrb[0].mxu0
        %v5331 = vadd.f32 %v5258, %v5330
        %v5332 = vpop.f32.mrb[0].mxu0
        %5333 = vdwg.mxu0
        %v5334 = vtanh.pop %v5331
        %v5335 = vld [vmem:[%s13] sm:$0xff]
        %v5336 = vld [vmem:[%s13 + $0x8] sm:$0xff]
        %v5337 = vld [vmem:[%s13 + $0x10] sm:$0xff]
        %v5338 = vld [vmem:[%s13 + $0x18] sm:$0xff]
        %v5339 = vld [vmem:[%s13 + $0x20] sm:$0xff]
        %v5340 = vld [vmem:[%s13 + $0x28] sm:$0xff]
        %v5341 = vld [vmem:[%s13 + $0x30] sm:$0xff]
        %v5342 = vld [vmem:[%s13 + $0x38] sm:$0xff]
        %v5343 = vld [vmem:[%s13 + $0x40] sm:$0xff]
        %v5344 = vld [vmem:[%s13 + $0x48] sm:$0xff]
        %v5345 = vld [vmem:[%s13 + $0x50] sm:$0xf]
        %v5346 = vld [vmem:[%s14] sm:$0x1]
        %v5348 = vlaneseq
        %v5349 = vshrl.u32 %v5348, 7
        %v5350 = vsub.s32 0, %v5349
        %v5351 = vrot.slane %v5346, %v5350
        %v5354 = vsel %vm3223, %v5334, 0
        %v5357 = vsel %vm2868, %v5345, 0
        %5359 = vmatprep.subr.mxu0 0.0
        %5360 = vmatpush1.msra.mxu0 %v5335
        %5361 = vmatprep.subr.mxu0 0.0
        %5362 = vmatpush1.msra.mxu0 %v5336
        %5363 = vmatprep.subr.mxu0 0.0
        %5364 = vmatpush1.msra.mxu0 %v5337
        %5365 = vmatprep.subr.mxu0 0.0
        %5366 = vmatpush1.msra.mxu0 %v5338
        %5367 = vmatprep.subr.mxu0 0.0
        %5368 = vmatpush1.msra.mxu0 %v5339
        %5369 = vmatprep.subr.mxu0 0.0
        %5370 = vmatpush1.msra.mxu0 %v5340
        %5371 = vmatprep.subr.mxu0 0.0
        %5372 = vmatpush1.msra.mxu0 %v5341
        %5373 = vmatprep.subr.mxu0 0.0
        %5374 = vmatpush1.msra.mxu0 %v5342
        %5375 = vmatprep.subr.mxu0 0.0
        %5376 = vmatpush1.msra.mxu0 %v5343
        %5377 = vmatprep.subr.mxu0 0.0
        %5378 = vmatpush1.msra.mxu0 %v5344
        %5379 = vmatprep.subr.mxu0 0.0
        %5380 = vmatpush1.msra.mxu0 %v5357
        %5381 = vmatprep.subr.mxu0 0.0
        %5382 = vmatpush1.msra.mxu0 0.0
        %5383 = vmatprep.subr.mxu0 0.0
        %5384 = vmatpush1.msra.mxu0 0.0
        %5385 = vmatprep.subr.mxu0 0.0
        %5386 = vmatpush1.msra.mxu0 0.0
        %5387 = vmatprep.subr.mxu0 0.0
        %5388 = vmatpush1.msra.mxu0 0.0
        %5389 = vmatprep.subr.mxu0 0.0
        %5390 = vmatpush1.msra.mxu0 0.0
        %5391 = vmatprep.subr.mxu0 0.0
        %5392 = vmatpush1.msra.mxu0 0.0
        %5393 = vmatprep.subr.mxu0 0.0
        %5394 = vmatpush1.msra.mxu0 0.0
        %5395 = vmatprep.subr.mxu0 0.0
        %5396 = vmatpush1.msra.mxu0 0.0
        %5397 = vmatprep.subr.mxu0 0.0
        %5398 = vmatpush1.msra.mxu0 0.0
        %5399 = vmatprep.subr.mxu0 0.0
        %5400 = vmatpush1.msra.mxu0 0.0
        %5401 = vmatprep.subr.mxu0 0.0
        %5402 = vmatpush1.msra.mxu0 0.0
        %5403 = vmatprep.subr.mxu0 0.0
        %5404 = vmatpush1.msra.mxu0 0.0
        %5405 = vmatprep.subr.mxu0 0.0
        %5406 = vmatpush1.msra.mxu0 0.0
        %5407 = vmatprep.subr.mxu0 0.0
        %5408 = vmatpush1.msra.mxu0 0.0
        %5409 = vmatprep.subr.mxu0 0.0
        %5410 = vmatpush1.msra.mxu0 0.0
        %5411 = vmatprep.subr.mxu0 0.0
        %5412 = vmatpush1.msra.mxu0 0.0
        %5413 = vmatprep.subr.mxu0 0.0
        %5414 = vmatpush1.msra.mxu0 0.0
        %5415 = vmatprep.subr.mxu0 0.0
        %5416 = vmatpush1.msra.mxu0 0.0
        %5417 = vmatprep.subr.mxu0 0.0
        %5418 = vmatpush1.msra.mxu0 0.0
        %5419 = vmatprep.subr.mxu0 0.0
        %5420 = vmatpush1.msra.mxu0 0.0
        %5421 = vmatprep.subr.mxu0 0.0
        %5422 = vmatpush1.msra.mxu0 0.0
        %5423 = vmatprep.mubr.f32.mxu0 0.0
        %5424 = vmatmul.mubr.f32.gmra.mrb[0].mxu0 %v5354
        %v5425 = vpop.f32.mrb[0].mxu0
        %v5426 = vadd.f32 %v5351, %v5425
        %v5427 = vpop.f32.mrb[0].mxu0
        %5428 = vdwg.mxu0
        %5429 = vst [vmem:[%s488] sm:$0xff] %v5426
        %s5430 = sand.u32 %s357, 1
        %s5431 = scalar_lea.sflag [#allocation4], %s5430
        %s5432 = sand.u32 %s357, 1
        %s5433 = smul.addr %s5432, 8
        %s5434 = scalar_lea.vmem [#allocation3], %s5433
        // Predicated region
        $region81: #{tpu_custom_call.1} parent=79 // pred_check
          %p5435 = pneg %p367
        $region82: #{tpu_custom_call.1} parent=79 // pred_check_branch
          %5437 = sbr.rel (%p5435) target = $region84
        $region83: #{tpu_custom_call.1} parent=79 // pred_region
          %s5439 = ssub.s32 128, 128
          %5440 = vsyncadd %s5431, %s5439
          %s5441 = smul.addr %s29, 128
          %s5442 = scalar_lea.hbm %s15, %s5441
          %s5444 = sshll.u32 %s5434, 4
          %s5445 = int_to_ptr.vmem [resolvable:$true] %s5444
          %5447 = dma.vmem_to_hbm [thread:$0]  %s5445, 128, %s5442, %s5431
        $region84: #{tpu_custom_call.1} parent=79 // pred_fallthru
          _
      $region80: #{tpu_custom_call.1} parent=5 // pred_fallthru
        _
      %p5448 = scmp.le.s32.totalorder 2, %s24
      // Predicated region
      $region85: #{tpu_custom_call.1} parent=5 // pred_check
        %p5449 = pneg %p5448
      $region86: #{tpu_custom_call.1} parent=5 // pred_check_branch
        %5451 = sbr.rel (%p5449) target = $region88
      $region87: #{tpu_custom_call.1} parent=5 // pred_region
        %s5452 = ssub.s32 %s24, 2
        // Predicated region
        $region89: #{tpu_custom_call.1} parent=87 // pred_check
          %p5453 = pneg %p373
        $region90: #{tpu_custom_call.1} parent=87 // pred_check_branch
          %5455 = sbr.rel (%p5453) target = $region92
        $region91: #{tpu_custom_call.1} parent=87 // pred_region
          %s5456 = sand.u32 %s358, 1
          %s5457 = scalar_lea.sflag [#allocation4], %s5456
          %s5458 = sand.u32 %s358, 1
          %s5459 = smul.addr %s5458, 8
          %s5460 = scalar_lea.vmem [#allocation3], %s5459
          %5461 = dma.done %s5457, 128
        $region92: #{tpu_custom_call.1} parent=87 // pred_fallthru
          _
      $region88: #{tpu_custom_call.1} parent=5 // pred_fallthru
        _
    $region6: #{tpu_custom_call.1} parent=1 // loop_footer
      %s28 = sadd.s32 1, %s24
    $region7: #{tpu_custom_call.1} parent=1 // loop_footer_branch
      %23 = sbr.rel target = $region3
    $region8: #{tpu_custom_call.1} parent=1 // loop_exit
      _
    %5462 = vsyncpa [#allocation4], 1
    %s5463 = scalar_lea.sflag [#allocation4], 1
    %5464 = vsyncpa %s5463, 1

</llo_original>
